<compile_context>
chip_gen: v6e
topology: v6e:2x2x1
jax: 0.10.0
libtpu: 0.0.40
codegen_flags: <defaults>
</compile_context>

<pallas_src>
import functools

import jax
import jax.numpy as jnp
from jax.experimental import pallas as pl
from jax.experimental.pallas import tpu as pltpu

EPS = 1e-5
MM_DTYPE = jnp.bfloat16      # MXU operand dtype (accumulation / norms stay f32)
R = 3                        # unified tap-grid half width (largest kernel = 7)


# ----------------------------------------------------------------------------
# Fused kernel: whole MSA block for one batch element (channel-major).
# ----------------------------------------------------------------------------
def _msa_kernel(x_ref, me_ref, mr_ref,
                w1_ref, g1_ref, b1_ref,
                wall_ref, gbr_ref, bbr_ref,
                wsq_ref, gsq_ref, bsq_ref,
                o_ref, tap_ref,
                *, H, W, We, M, c1p, dia):
    """Refs (all channel-major, spatial on lanes):
      x_ref   : (Cin, Ne)        bf16  padded, flattened input
      me_ref  : (1, Ne)          f32   1.0 on the true HxW interior, 0 on pad
      mr_ref  : (1, L)           f32   interior mask over the L = H*We rows
      w1_ref  : (c1p, Cin)       bf16  fused 1x1 reduce convs (rows >= 3*bo zero)
      wall_ref: (3*cout, 49*c1p) bf16  all three dilated convs, tap-major cols
      wsq_ref : (cout, 3*cout)   bf16  squeeze 1x1
      g*/b*   : (C, 1)           f32   InstanceNorm affine parameters
      o_ref   : (cout, L)        f32   fused output over the contiguous rows
      tap_ref : (49*c1p, L)      bf16  VMEM scratch: packed tap block
    """
    L = H * We
    base = M * We
    inv_hw = 1.0 / float(H * W)

    def in_relu(y, g, b, mask):
        # single-pass biased per-channel stats over the true HxW interior
        ym = y * mask
        s = jnp.sum(ym, axis=1, keepdims=True)
        ss = jnp.sum(ym * ym, axis=1, keepdims=True)
        mean = s * inv_hw
        var = jnp.maximum(ss * inv_hw - mean * mean, 0.0)
        out = (y - mean) * jax.lax.rsqrt(var + EPS) * g + b
        return jnp.maximum(out, 0.0) * mask          # re-zero the padding ring

    m_ext = me_ref[...]                               # (1, Ne)
    m_rng = mr_ref[...]                               # (1, L)

    # ---- fused 1x1 reduce convs of all three branches: Cin -> c1p ----------
    y1 = jnp.dot(w1_ref[...], x_ref[...], preferred_element_type=jnp.float32)
    y1 = in_relu(y1, g1_ref[...], b1_ref[...], m_ext).astype(MM_DTYPE)  # (c1p, Ne)

    # ---- pack all 49 dilated-grid taps along the contraction dimension -----
    # tap (uy, ux) of the padded, zero-masked activation is a contiguous
    # lane-slice of y1 (no im2col, no gathers).
    n = 2 * R + 1
    for uy in range(n):
        for ux in range(n):
            t = uy * n + ux
            start = base + (uy - R) * dia * We + (ux - R) * dia
            tap_ref[t * c1p:(t + 1) * c1p, :] = y1[:, start:start + L]

    # ---- all three dilated convs in ONE matmul, then per-channel IN+ReLU ---
    ycat = jnp.dot(wall_ref[...], tap_ref[...],
                   preferred_element_type=jnp.float32)          # (3*cout, L)
    ycat = in_relu(ycat, gbr_ref[...], bbr_ref[...], m_rng).astype(MM_DTYPE)

    # ---- 1x1 squeeze of the (virtual) concat, IN + ReLU --------------------
    fuse = jnp.dot(wsq_ref[...], ycat, preferred_element_type=jnp.float32)
    o_ref[...] = in_relu(fuse, gsq_ref[...], bsq_ref[...], m_rng).astype(o_ref.dtype)


# ----------------------------------------------------------------------------
# Parameter construction (deterministic, synthetic).
# ----------------------------------------------------------------------------
def _make_conv_params(key, cin, cout, k):
    fan_in = cin * k * k
    w = jax.random.normal(key, (cout, cin, k, k), jnp.float32) / jnp.sqrt(float(fan_in))
    return {"w": w, "gamma": jnp.ones((cout,), jnp.float32),
            "beta": jnp.zeros((cout,), jnp.float32), "k": k}


def init_msa_params(key, in_channels, out_channels, level=1):
    branch_out = in_channels // 2
    dia = level
    keys = jax.random.split(key, 7)
    return {
        "dia": dia,
        "pad3": (2 * (dia - 1) + 2) // 2,    # == dia   (same-padding, k=3)
        "pad5": (4 * (dia - 1) + 4) // 2,    # == 2*dia (same-padding, k=5)
        "pad7": (6 * (dia - 1) + 6) // 2,    # == 3*dia (same-padding, k=7)
        "b3_1": _make_conv_params(keys[0], in_channels, branch_out, 1),
        "b3_2": _make_conv_params(keys[1], branch_out, out_channels, 3),
        "b5_1": _make_conv_params(keys[2], in_channels, branch_out, 1),
        "b5_2": _make_conv_params(keys[3], branch_out, out_channels, 5),
        "b7_1": _make_conv_params(keys[4], in_channels, branch_out, 1),
        "b7_2": _make_conv_params(keys[5], branch_out, out_channels, 7),
        "sq":   _make_conv_params(keys[6], 3 * out_channels, out_channels, 1),
    }


# ----------------------------------------------------------------------------
# MSA_block forward (inference semantics).
# ----------------------------------------------------------------------------
def msa_block_forward(x_nchw, params):
    B, Cin, H, W = x_nchw.shape
    dia = int(params["dia"])
    bo = params["b3_1"]["w"].shape[0]
    cout = params["b3_2"]["w"].shape[0]
    c1p = ((3 * bo + 15) // 16) * 16      # 1x1 channels padded to bf16 sublane group
    n_tap = (2 * R + 1) ** 2              # 49 offsets of the unified dilated grid

    M = 3 * dia + 1                       # margin = max dilated reach (pad7) + 1
    He, We = H + 2 * M, W + 2 * M
    Ne, L = He * We, H * We

    # channel-major input: stay NCHW, zero-pad spatially by M, flatten HxW
    x_ext = jnp.pad(x_nchw, ((0, 0), (0, 0), (M, M), (M, M))
                    ).reshape(B, Cin, Ne).astype(MM_DTYPE)

    # lane-dense interior masks (1.0 on the true HxW image, 0.0 on the pad)
    col_ok = ((jnp.arange(We) >= M) & (jnp.arange(We) < M + W)).astype(jnp.float32)
    row_ok = ((jnp.arange(He) >= M) & (jnp.arange(He) < M + H)).astype(jnp.float32)
    m_ext = (row_ok[:, None] * col_ok[None, :]).reshape(1, Ne)
    m_rng = jnp.tile(col_ok, (H,)).reshape(1, L)

    # ---- pack weights (channel-major) --------------------------------------
    first = ("b3_1", "b5_1", "b7_1")
    w1 = jnp.zeros((c1p, Cin), jnp.float32)
    g1 = jnp.zeros((c1p, 1), jnp.float32)
    b1 = jnp.zeros((c1p, 1), jnp.float32)
    for bi, name in enumerate(first):
        w1 = w1.at[bi * bo:(bi + 1) * bo, :].set(params[name]["w"].reshape(bo, Cin))
        g1 = g1.at[bi * bo:(bi + 1) * bo, 0].set(params[name]["gamma"])
        b1 = b1.at[bi * bo:(bi + 1) * bo, 0].set(params[name]["beta"])
    w1 = w1.astype(MM_DTYPE)

    # all three dilated convs packed into one (3*cout, 49*c1p) weight;
    # columns outside a branch's k x k grid / channel group stay zero.
    wall4 = jnp.zeros((3 * cout, 2 * R + 1, 2 * R + 1, c1p), jnp.float32)
    gbr_l, bbr_l = [], []
    for bi, (name, k) in enumerate((("b3_2", 3), ("b5_2", 5), ("b7_2", 7))):
        w = jnp.transpose(params[name]["w"], (0, 2, 3, 1))     # (cout, k, k, bo)
        off = R - k // 2
        wall4 = wall4.at[bi * cout:(bi + 1) * cout,
                         off:off + k, off:off + k,
                         bi * bo:(bi + 1) * bo].set(w)
        gbr_l.append(params[name]["gamma"])
        bbr_l.append(params[name]["beta"])
    wall = wall4.reshape(3 * cout, n_tap * c1p).astype(MM_DTYPE)
    gbr = jnp.concatenate(gbr_l).reshape(3 * cout, 1).astype(jnp.float32)
    bbr = jnp.concatenate(bbr_l).reshape(3 * cout, 1).astype(jnp.float32)

    wsq = params["sq"]["w"].reshape(cout, 3 * cout).astype(MM_DTYPE)
    gsq = params["sq"]["gamma"].reshape(cout, 1).astype(jnp.float32)
    bsq = params["sq"]["beta"].reshape(cout, 1).astype(jnp.float32)

    kernel = functools.partial(_msa_kernel, H=H, W=W, We=We, M=M, c1p=c1p, dia=dia)

    full2 = lambda b: (0, 0)
    out = pl.pallas_call(
        kernel,
        out_shape=jax.ShapeDtypeStruct((B, cout, L), jnp.float32),
        grid_spec=pltpu.PrefetchScalarGridSpec(
            num_scalar_prefetch=0,
            grid=(B,),
            in_specs=[
                pl.BlockSpec((None, Cin, Ne), lambda b: (b, 0, 0)),     # x_ext
                pl.BlockSpec((1, Ne), full2),                           # m_ext
                pl.BlockSpec((1, L), full2),                            # m_rng
                pl.BlockSpec((c1p, Cin), full2),                        # w1 (fused 1x1s)
                pl.BlockSpec((c1p, 1), full2),                          # g1
                pl.BlockSpec((c1p, 1), full2),                          # b1
                pl.BlockSpec((3 * cout, n_tap * c1p), full2),           # wall (3 branches)
                pl.BlockSpec((3 * cout, 1), full2),                     # gbr
                pl.BlockSpec((3 * cout, 1), full2),                     # bbr
                pl.BlockSpec((cout, 3 * cout), full2),                  # wsq
                pl.BlockSpec((cout, 1), full2),                         # gsq
                pl.BlockSpec((cout, 1), full2),                         # bsq
            ],
            out_specs=pl.BlockSpec((None, cout, L), lambda b: (b, 0, 0)),
            scratch_shapes=[pltpu.VMEM((n_tap * c1p, L), MM_DTYPE)],    # tap block
        ),
        compiler_params=pltpu.CompilerParams(
            dimension_semantics=("parallel",)),      # batch splits across TCs
    )(x_ext, m_ext, m_rng, w1, g1, b1, wall, gbr, bbr, wsq, gsq, bsq)

    # interior extraction stays channel-major; final result = cat([fuse, x], C)
    fuse = out.reshape(B, cout, H, We)[:, :, :, M:M + W]
    return jnp.concatenate([fuse, x_nchw.astype(jnp.float32)], axis=1)


if __name__ == "__main__":
    B, C_IN, H, W = 2, 4, 16, 16
    C_OUT = 8

    key = jax.random.PRNGKey(0)
    k_x, k_p = jax.random.split(key)
    x = jax.random.normal(k_x, (B, C_IN, H, W), jnp.float32)
    params = init_msa_params(k_p, C_IN, C_OUT, level=1)

    fwd = jax.jit(functools.partial(msa_block_forward, params=params))
    y = fwd(x)
    jax.block_until_ready(y)

    expected = (B, C_OUT + C_IN, H, W)
    assert y.shape == expected, (y.shape, expected)
    assert bool(jnp.all(jnp.isfinite(y)))
    print("KERNEL_OK")
</pallas_src>

<mosaic_0001>
module attributes {stable_mosaic.version = 11 : i64} {
  func.func @_msa_kernel(%arg0: i32, %arg1: memref<1x4x576xbf16, #tpu.memory_space<vmem>>, %arg2: memref<1x576xf32, #tpu.memory_space<vmem>>, %arg3: memref<1x384xf32, #tpu.memory_space<vmem>>, %arg4: memref<16x4xbf16, #tpu.memory_space<vmem>>, %arg5: memref<16x1xf32, #tpu.memory_space<vmem>>, %arg6: memref<16x1xf32, #tpu.memory_space<vmem>>, %arg7: memref<24x784xbf16, #tpu.memory_space<vmem>>, %arg8: memref<24x1xf32, #tpu.memory_space<vmem>>, %arg9: memref<24x1xf32, #tpu.memory_space<vmem>>, %arg10: memref<8x24xbf16, #tpu.memory_space<vmem>>, %arg11: memref<8x1xf32, #tpu.memory_space<vmem>>, %arg12: memref<8x1xf32, #tpu.memory_space<vmem>>, %arg13: memref<1x8x384xf32, #tpu.memory_space<vmem>>, %arg14: memref<784x384xbf16, #tpu.memory_space<vmem>>) attributes {dimension_semantics = [#tpu.dimension_semantics<parallel>], iteration_bounds = array<i64: 2>, scalar_prefetch = 0 : i64, scratch_operands = 1 : i64, tpu.core_type = #tpu.core_type<tc>, window_params = [{transform_indices = @transform_0, window_bounds = array<i64: 1, 4, 576>}, {pipeline_mode = #tpu.pipeline_mode<synchronous>, transform_indices = @transform_1, window_bounds = array<i64: 1, 576>}, {pipeline_mode = #tpu.pipeline_mode<synchronous>, transform_indices = @transform_2, window_bounds = array<i64: 1, 384>}, {pipeline_mode = #tpu.pipeline_mode<synchronous>, transform_indices = @transform_3, window_bounds = array<i64: 16, 4>}, {pipeline_mode = #tpu.pipeline_mode<synchronous>, transform_indices = @transform_4, window_bounds = array<i64: 16, 1>}, {pipeline_mode = #tpu.pipeline_mode<synchronous>, transform_indices = @transform_5, window_bounds = array<i64: 16, 1>}, {pipeline_mode = #tpu.pipeline_mode<synchronous>, transform_indices = @transform_6, window_bounds = array<i64: 24, 784>}, {pipeline_mode = #tpu.pipeline_mode<synchronous>, transform_indices = @transform_7, window_bounds = array<i64: 24, 1>}, {pipeline_mode = #tpu.pipeline_mode<synchronous>, transform_indices = @transform_8, window_bounds = array<i64: 24, 1>}, {pipeline_mode = #tpu.pipeline_mode<synchronous>, transform_indices = @transform_9, window_bounds = array<i64: 8, 24>}, {pipeline_mode = #tpu.pipeline_mode<synchronous>, transform_indices = @transform_10, window_bounds = array<i64: 8, 1>}, {pipeline_mode = #tpu.pipeline_mode<synchronous>, transform_indices = @transform_11, window_bounds = array<i64: 8, 1>}, {transform_indices = @transform_12, window_bounds = array<i64: 1, 8, 384>}]} {
    %c0 = arith.constant 0 : index
    %c0_0 = arith.constant 0 : index
    %0 = vector.load %arg2[%c0, %c0_0] : memref<1x576xf32, #tpu.memory_space<vmem>>, vector<1x576xf32>
    %c0_1 = arith.constant 0 : index
    %c0_2 = arith.constant 0 : index
    %1 = vector.load %arg3[%c0_1, %c0_2] : memref<1x384xf32, #tpu.memory_space<vmem>>, vector<1x384xf32>
    %c0_3 = arith.constant 0 : index
    %c0_4 = arith.constant 0 : index
    %2 = vector.load %arg4[%c0_3, %c0_4] : memref<16x4xbf16, #tpu.memory_space<vmem>>, vector<16x4xbf16>
    %c0_5 = arith.constant 0 : index
    %c0_6 = arith.constant 0 : index
    %c0_7 = arith.constant 0 : index
    %3 = vector.load %arg1[%c0_5, %c0_6, %c0_7] : memref<1x4x576xbf16, #tpu.memory_space<vmem>>, vector<1x4x576xbf16>
    %4 = vector.shape_cast %3 : vector<1x4x576xbf16> to vector<4x576xbf16>
    %cst = arith.constant dense<0.000000e+00> : vector<16x576xf32>
    %5 = tpu.matmul %2, %4, %cst {dimension_numbers = #tpu.dot_dimension_numbers<[1], [0], [0], [1], [0, 0, 1, 1], [], []>} : vector<16x4xbf16>, vector<4x576xbf16>, vector<16x576xf32> -> vector<16x576xf32>
    %c0_8 = arith.constant 0 : index
    %c0_9 = arith.constant 0 : index
    %6 = vector.load %arg5[%c0_8, %c0_9] : memref<16x1xf32, #tpu.memory_space<vmem>>, vector<16x1xf32>
    %c0_10 = arith.constant 0 : index
    %c0_11 = arith.constant 0 : index
    %7 = vector.load %arg6[%c0_10, %c0_11] : memref<16x1xf32, #tpu.memory_space<vmem>>, vector<16x1xf32>
    %8 = vector.broadcast %0 : vector<1x576xf32> to vector<16x576xf32>
    %9 = arith.mulf %5, %8 : vector<16x576xf32>
    %cst_12 = arith.constant dense<0.000000e+00> : vector<16xf32>
    %10 = vector.multi_reduction <add>, %9, %cst_12 [1] : vector<16x576xf32> to vector<16xf32>
    %11 = vector.shape_cast %10 : vector<16xf32> to vector<16x1xf32>
    %12 = arith.mulf %9, %9 : vector<16x576xf32>
    %cst_13 = arith.constant dense<0.000000e+00> : vector<16xf32>
    %13 = vector.multi_reduction <add>, %12, %cst_13 [1] : vector<16x576xf32> to vector<16xf32>
    %14 = vector.shape_cast %13 : vector<16xf32> to vector<16x1xf32>
    %cst_14 = arith.constant 3.906250e-03 : f32
    %15 = vector.broadcast %cst_14 : f32 to vector<16x1xf32>
    %16 = arith.mulf %11, %15 : vector<16x1xf32>
    %cst_15 = arith.constant 3.906250e-03 : f32
    %17 = vector.broadcast %cst_15 : f32 to vector<16x1xf32>
    %18 = arith.mulf %14, %17 : vector<16x1xf32>
    %19 = arith.mulf %16, %16 : vector<16x1xf32>
    %20 = arith.subf %18, %19 : vector<16x1xf32>
    %cst_16 = arith.constant 0.000000e+00 : f32
    %21 = vector.broadcast %cst_16 : f32 to vector<16x1xf32>
    %22 = arith.maximumf %20, %21 : vector<16x1xf32>
    %23 = vector.broadcast %16 : vector<16x1xf32> to vector<16x576xf32>
    %24 = arith.subf %5, %23 : vector<16x576xf32>
    %cst_17 = arith.constant 9.99999974E-6 : f32
    %25 = vector.broadcast %cst_17 : f32 to vector<16x1xf32>
    %26 = arith.addf %22, %25 : vector<16x1xf32>
    %27 = math.rsqrt %26 : vector<16x1xf32>
    %28 = vector.broadcast %27 : vector<16x1xf32> to vector<16x576xf32>
    %29 = arith.mulf %24, %28 : vector<16x576xf32>
    %30 = vector.broadcast %6 : vector<16x1xf32> to vector<16x576xf32>
    %31 = arith.mulf %29, %30 : vector<16x576xf32>
    %32 = vector.broadcast %7 : vector<16x1xf32> to vector<16x576xf32>
    %33 = arith.addf %31, %32 : vector<16x576xf32>
    %cst_18 = arith.constant 0.000000e+00 : f32
    %34 = vector.broadcast %cst_18 : f32 to vector<16x576xf32>
    %35 = arith.maximumf %33, %34 : vector<16x576xf32>
    %36 = vector.broadcast %0 : vector<1x576xf32> to vector<16x576xf32>
    %37 = arith.mulf %35, %36 : vector<16x576xf32>
    %38 = arith.truncf %37 : vector<16x576xf32> to vector<16x576xbf16>
    %39 = vector.extract_strided_slice %38 {offsets = [0, 21], sizes = [16, 384], strides = [1, 1]} : vector<16x576xbf16> to vector<16x384xbf16>
    %c0_19 = arith.constant 0 : index
    %c0_20 = arith.constant 0 : index
    %40 = vector.load %arg14[%c0_19, %c0_20] : memref<784x384xbf16, #tpu.memory_space<vmem>>, vector<16x384xbf16>
    tpu.vector_store %arg14[%c0_19, %c0_20], %39 {strides = array<i32>} : memref<784x384xbf16, #tpu.memory_space<vmem>>, vector<16x384xbf16>,
    %41 = vector.extract_strided_slice %38 {offsets = [0, 22], sizes = [16, 384], strides = [1, 1]} : vector<16x576xbf16> to vector<16x384xbf16>
    %c16 = arith.constant 16 : index
    %c0_21 = arith.constant 0 : index
    %42 = vector.load %arg14[%c16, %c0_21] : memref<784x384xbf16, #tpu.memory_space<vmem>>, vector<16x384xbf16>
    tpu.vector_store %arg14[%c16, %c0_21], %41 {strides = array<i32>} : memref<784x384xbf16, #tpu.memory_space<vmem>>, vector<16x384xbf16>,
    %43 = vector.extract_strided_slice %38 {offsets = [0, 23], sizes = [16, 384], strides = [1, 1]} : vector<16x576xbf16> to vector<16x384xbf16>
    %c32 = arith.constant 32 : index
    %c0_22 = arith.constant 0 : index
    %44 = vector.load %arg14[%c32, %c0_22] : memref<784x384xbf16, #tpu.memory_space<vmem>>, vector<16x384xbf16>
    tpu.vector_store %arg14[%c32, %c0_22], %43 {strides = array<i32>} : memref<784x384xbf16, #tpu.memory_space<vmem>>, vector<16x384xbf16>,
    %45 = vector.extract_strided_slice %38 {offsets = [0, 24], sizes = [16, 384], strides = [1, 1]} : vector<16x576xbf16> to vector<16x384xbf16>
    %c48 = arith.constant 48 : index
    %c0_23 = arith.constant 0 : index
    %46 = vector.load %arg14[%c48, %c0_23] : memref<784x384xbf16, #tpu.memory_space<vmem>>, vector<16x384xbf16>
    tpu.vector_store %arg14[%c48, %c0_23], %45 {strides = array<i32>} : memref<784x384xbf16, #tpu.memory_space<vmem>>, vector<16x384xbf16>,
    %47 = vector.extract_strided_slice %38 {offsets = [0, 25], sizes = [16, 384], strides = [1, 1]} : vector<16x576xbf16> to vector<16x384xbf16>
    %c64 = arith.constant 64 : index
    %c0_24 = arith.constant 0 : index
    %48 = vector.load %arg14[%c64, %c0_24] : memref<784x384xbf16, #tpu.memory_space<vmem>>, vector<16x384xbf16>
    tpu.vector_store %arg14[%c64, %c0_24], %47 {strides = array<i32>} : memref<784x384xbf16, #tpu.memory_space<vmem>>, vector<16x384xbf16>,
    %49 = vector.extract_strided_slice %38 {offsets = [0, 26], sizes = [16, 384], strides = [1, 1]} : vector<16x576xbf16> to vector<16x384xbf16>
    %c80 = arith.constant 80 : index
    %c0_25 = arith.constant 0 : index
    %50 = vector.load %arg14[%c80, %c0_25] : memref<784x384xbf16, #tpu.memory_space<vmem>>, vector<16x384xbf16>
    tpu.vector_store %arg14[%c80, %c0_25], %49 {strides = array<i32>} : memref<784x384xbf16, #tpu.memory_space<vmem>>, vector<16x384xbf16>,
    %51 = vector.extract_strided_slice %38 {offsets = [0, 27], sizes = [16, 384], strides = [1, 1]} : vector<16x576xbf16> to vector<16x384xbf16>
    %c96 = arith.constant 96 : index
    %c0_26 = arith.constant 0 : index
    %52 = vector.load %arg14[%c96, %c0_26] : memref<784x384xbf16, #tpu.memory_space<vmem>>, vector<16x384xbf16>
    tpu.vector_store %arg14[%c96, %c0_26], %51 {strides = array<i32>} : memref<784x384xbf16, #tpu.memory_space<vmem>>, vector<16x384xbf16>,
    %53 = vector.extract_strided_slice %38 {offsets = [0, 45], sizes = [16, 384], strides = [1, 1]} : vector<16x576xbf16> to vector<16x384xbf16>
    %c112 = arith.constant 112 : index
    %c0_27 = arith.constant 0 : index
    %54 = vector.load %arg14[%c112, %c0_27] : memref<784x384xbf16, #tpu.memory_space<vmem>>, vector<16x384xbf16>
    tpu.vector_store %arg14[%c112, %c0_27], %53 {strides = array<i32>} : memref<784x384xbf16, #tpu.memory_space<vmem>>, vector<16x384xbf16>,
    %55 = vector.extract_strided_slice %38 {offsets = [0, 46], sizes = [16, 384], strides = [1, 1]} : vector<16x576xbf16> to vector<16x384xbf16>
    %c128 = arith.constant 128 : index
    %c0_28 = arith.constant 0 : index
    %56 = vector.load %arg14[%c128, %c0_28] : memref<784x384xbf16, #tpu.memory_space<vmem>>, vector<16x384xbf16>
    tpu.vector_store %arg14[%c128, %c0_28], %55 {strides = array<i32>} : memref<784x384xbf16, #tpu.memory_space<vmem>>, vector<16x384xbf16>,
    %57 = vector.extract_strided_slice %38 {offsets = [0, 47], sizes = [16, 384], strides = [1, 1]} : vector<16x576xbf16> to vector<16x384xbf16>
    %c144 = arith.constant 144 : index
    %c0_29 = arith.constant 0 : index
    %58 = vector.load %arg14[%c144, %c0_29] : memref<784x384xbf16, #tpu.memory_space<vmem>>, vector<16x384xbf16>
    tpu.vector_store %arg14[%c144, %c0_29], %57 {strides = array<i32>} : memref<784x384xbf16, #tpu.memory_space<vmem>>, vector<16x384xbf16>,
    %59 = vector.extract_strided_slice %38 {offsets = [0, 48], sizes = [16, 384], strides = [1, 1]} : vector<16x576xbf16> to vector<16x384xbf16>
    %c160 = arith.constant 160 : index
    %c0_30 = arith.constant 0 : index
    %60 = vector.load %arg14[%c160, %c0_30] : memref<784x384xbf16, #tpu.memory_space<vmem>>, vector<16x384xbf16>
    tpu.vector_store %arg14[%c160, %c0_30], %59 {strides = array<i32>} : memref<784x384xbf16, #tpu.memory_space<vmem>>, vector<16x384xbf16>,
    %61 = vector.extract_strided_slice %38 {offsets = [0, 49], sizes = [16, 384], strides = [1, 1]} : vector<16x576xbf16> to vector<16x384xbf16>
    %c176 = arith.constant 176 : index
    %c0_31 = arith.constant 0 : index
    %62 = vector.load %arg14[%c176, %c0_31] : memref<784x384xbf16, #tpu.memory_space<vmem>>, vector<16x384xbf16>
    tpu.vector_store %arg14[%c176, %c0_31], %61 {strides = array<i32>} : memref<784x384xbf16, #tpu.memory_space<vmem>>, vector<16x384xbf16>,
    %63 = vector.extract_strided_slice %38 {offsets = [0, 50], sizes = [16, 384], strides = [1, 1]} : vector<16x576xbf16> to vector<16x384xbf16>
    %c192 = arith.constant 192 : index
    %c0_32 = arith.constant 0 : index
    %64 = vector.load %arg14[%c192, %c0_32] : memref<784x384xbf16, #tpu.memory_space<vmem>>, vector<16x384xbf16>
    tpu.vector_store %arg14[%c192, %c0_32], %63 {strides = array<i32>} : memref<784x384xbf16, #tpu.memory_space<vmem>>, vector<16x384xbf16>,
    %65 = vector.extract_strided_slice %38 {offsets = [0, 51], sizes = [16, 384], strides = [1, 1]} : vector<16x576xbf16> to vector<16x384xbf16>
    %c208 = arith.constant 208 : index
    %c0_33 = arith.constant 0 : index
    %66 = vector.load %arg14[%c208, %c0_33] : memref<784x384xbf16, #tpu.memory_space<vmem>>, vector<16x384xbf16>
    tpu.vector_store %arg14[%c208, %c0_33], %65 {strides = array<i32>} : memref<784x384xbf16, #tpu.memory_space<vmem>>, vector<16x384xbf16>,
    %67 = vector.extract_strided_slice %38 {offsets = [0, 69], sizes = [16, 384], strides = [1, 1]} : vector<16x576xbf16> to vector<16x384xbf16>
    %c224 = arith.constant 224 : index
    %c0_34 = arith.constant 0 : index
    %68 = vector.load %arg14[%c224, %c0_34] : memref<784x384xbf16, #tpu.memory_space<vmem>>, vector<16x384xbf16>
    tpu.vector_store %arg14[%c224, %c0_34], %67 {strides = array<i32>} : memref<784x384xbf16, #tpu.memory_space<vmem>>, vector<16x384xbf16>,
    %69 = vector.extract_strided_slice %38 {offsets = [0, 70], sizes = [16, 384], strides = [1, 1]} : vector<16x576xbf16> to vector<16x384xbf16>
    %c240 = arith.constant 240 : index
    %c0_35 = arith.constant 0 : index
    %70 = vector.load %arg14[%c240, %c0_35] : memref<784x384xbf16, #tpu.memory_space<vmem>>, vector<16x384xbf16>
    tpu.vector_store %arg14[%c240, %c0_35], %69 {strides = array<i32>} : memref<784x384xbf16, #tpu.memory_space<vmem>>, vector<16x384xbf16>,
    %71 = vector.extract_strided_slice %38 {offsets = [0, 71], sizes = [16, 384], strides = [1, 1]} : vector<16x576xbf16> to vector<16x384xbf16>
    %c256 = arith.constant 256 : index
    %c0_36 = arith.constant 0 : index
    %72 = vector.load %arg14[%c256, %c0_36] : memref<784x384xbf16, #tpu.memory_space<vmem>>, vector<16x384xbf16>
    tpu.vector_store %arg14[%c256, %c0_36], %71 {strides = array<i32>} : memref<784x384xbf16, #tpu.memory_space<vmem>>, vector<16x384xbf16>,
    %73 = vector.extract_strided_slice %38 {offsets = [0, 72], sizes = [16, 384], strides = [1, 1]} : vector<16x576xbf16> to vector<16x384xbf16>
    %c272 = arith.constant 272 : index
    %c0_37 = arith.constant 0 : index
    %74 = vector.load %arg14[%c272, %c0_37] : memref<784x384xbf16, #tpu.memory_space<vmem>>, vector<16x384xbf16>
    tpu.vector_store %arg14[%c272, %c0_37], %73 {strides = array<i32>} : memref<784x384xbf16, #tpu.memory_space<vmem>>, vector<16x384xbf16>,
    %75 = vector.extract_strided_slice %38 {offsets = [0, 73], sizes = [16, 384], strides = [1, 1]} : vector<16x576xbf16> to vector<16x384xbf16>
    %c288 = arith.constant 288 : index
    %c0_38 = arith.constant 0 : index
    %76 = vector.load %arg14[%c288, %c0_38] : memref<784x384xbf16, #tpu.memory_space<vmem>>, vector<16x384xbf16>
    tpu.vector_store %arg14[%c288, %c0_38], %75 {strides = array<i32>} : memref<784x384xbf16, #tpu.memory_space<vmem>>, vector<16x384xbf16>,
    %77 = vector.extract_strided_slice %38 {offsets = [0, 74], sizes = [16, 384], strides = [1, 1]} : vector<16x576xbf16> to vector<16x384xbf16>
    %c304 = arith.constant 304 : index
    %c0_39 = arith.constant 0 : index
    %78 = vector.load %arg14[%c304, %c0_39] : memref<784x384xbf16, #tpu.memory_space<vmem>>, vector<16x384xbf16>
    tpu.vector_store %arg14[%c304, %c0_39], %77 {strides = array<i32>} : memref<784x384xbf16, #tpu.memory_space<vmem>>, vector<16x384xbf16>,
    %79 = vector.extract_strided_slice %38 {offsets = [0, 75], sizes = [16, 384], strides = [1, 1]} : vector<16x576xbf16> to vector<16x384xbf16>
    %c320 = arith.constant 320 : index
    %c0_40 = arith.constant 0 : index
    %80 = vector.load %arg14[%c320, %c0_40] : memref<784x384xbf16, #tpu.memory_space<vmem>>, vector<16x384xbf16>
    tpu.vector_store %arg14[%c320, %c0_40], %79 {strides = array<i32>} : memref<784x384xbf16, #tpu.memory_space<vmem>>, vector<16x384xbf16>,
    %81 = vector.extract_strided_slice %38 {offsets = [0, 93], sizes = [16, 384], strides = [1, 1]} : vector<16x576xbf16> to vector<16x384xbf16>
    %c336 = arith.constant 336 : index
    %c0_41 = arith.constant 0 : index
    %82 = vector.load %arg14[%c336, %c0_41] : memref<784x384xbf16, #tpu.memory_space<vmem>>, vector<16x384xbf16>
    tpu.vector_store %arg14[%c336, %c0_41], %81 {strides = array<i32>} : memref<784x384xbf16, #tpu.memory_space<vmem>>, vector<16x384xbf16>,
    %83 = vector.extract_strided_slice %38 {offsets = [0, 94], sizes = [16, 384], strides = [1, 1]} : vector<16x576xbf16> to vector<16x384xbf16>
    %c352 = arith.constant 352 : index
    %c0_42 = arith.constant 0 : index
    %84 = vector.load %arg14[%c352, %c0_42] : memref<784x384xbf16, #tpu.memory_space<vmem>>, vector<16x384xbf16>
    tpu.vector_store %arg14[%c352, %c0_42], %83 {strides = array<i32>} : memref<784x384xbf16, #tpu.memory_space<vmem>>, vector<16x384xbf16>,
    %85 = vector.extract_strided_slice %38 {offsets = [0, 95], sizes = [16, 384], strides = [1, 1]} : vector<16x576xbf16> to vector<16x384xbf16>
    %c368 = arith.constant 368 : index
    %c0_43 = arith.constant 0 : index
    %86 = vector.load %arg14[%c368, %c0_43] : memref<784x384xbf16, #tpu.memory_space<vmem>>, vector<16x384xbf16>
    tpu.vector_store %arg14[%c368, %c0_43], %85 {strides = array<i32>} : memref<784x384xbf16, #tpu.memory_space<vmem>>, vector<16x384xbf16>,
    %87 = vector.extract_strided_slice %38 {offsets = [0, 96], sizes = [16, 384], strides = [1, 1]} : vector<16x576xbf16> to vector<16x384xbf16>
    %c384 = arith.constant 384 : index
    %c0_44 = arith.constant 0 : index
    %88 = vector.load %arg14[%c384, %c0_44] : memref<784x384xbf16, #tpu.memory_space<vmem>>, vector<16x384xbf16>
    tpu.vector_store %arg14[%c384, %c0_44], %87 {strides = array<i32>} : memref<784x384xbf16, #tpu.memory_space<vmem>>, vector<16x384xbf16>,
    %89 = vector.extract_strided_slice %38 {offsets = [0, 97], sizes = [16, 384], strides = [1, 1]} : vector<16x576xbf16> to vector<16x384xbf16>
    %c400 = arith.constant 400 : index
    %c0_45 = arith.constant 0 : index
    %90 = vector.load %arg14[%c400, %c0_45] : memref<784x384xbf16, #tpu.memory_space<vmem>>, vector<16x384xbf16>
    tpu.vector_store %arg14[%c400, %c0_45], %89 {strides = array<i32>} : memref<784x384xbf16, #tpu.memory_space<vmem>>, vector<16x384xbf16>,
    %91 = vector.extract_strided_slice %38 {offsets = [0, 98], sizes = [16, 384], strides = [1, 1]} : vector<16x576xbf16> to vector<16x384xbf16>
    %c416 = arith.constant 416 : index
    %c0_46 = arith.constant 0 : index
    %92 = vector.load %arg14[%c416, %c0_46] : memref<784x384xbf16, #tpu.memory_space<vmem>>, vector<16x384xbf16>
    tpu.vector_store %arg14[%c416, %c0_46], %91 {strides = array<i32>} : memref<784x384xbf16, #tpu.memory_space<vmem>>, vector<16x384xbf16>,
    %93 = vector.extract_strided_slice %38 {offsets = [0, 99], sizes = [16, 384], strides = [1, 1]} : vector<16x576xbf16> to vector<16x384xbf16>
    %c432 = arith.constant 432 : index
    %c0_47 = arith.constant 0 : index
    %94 = vector.load %arg14[%c432, %c0_47] : memref<784x384xbf16, #tpu.memory_space<vmem>>, vector<16x384xbf16>
    tpu.vector_store %arg14[%c432, %c0_47], %93 {strides = array<i32>} : memref<784x384xbf16, #tpu.memory_space<vmem>>, vector<16x384xbf16>,
    %95 = vector.extract_strided_slice %38 {offsets = [0, 117], sizes = [16, 384], strides = [1, 1]} : vector<16x576xbf16> to vector<16x384xbf16>
    %c448 = arith.constant 448 : index
    %c0_48 = arith.constant 0 : index
    %96 = vector.load %arg14[%c448, %c0_48] : memref<784x384xbf16, #tpu.memory_space<vmem>>, vector<16x384xbf16>
    tpu.vector_store %arg14[%c448, %c0_48], %95 {strides = array<i32>} : memref<784x384xbf16, #tpu.memory_space<vmem>>, vector<16x384xbf16>,
    %97 = vector.extract_strided_slice %38 {offsets = [0, 118], sizes = [16, 384], strides = [1, 1]} : vector<16x576xbf16> to vector<16x384xbf16>
    %c464 = arith.constant 464 : index
    %c0_49 = arith.constant 0 : index
    %98 = vector.load %arg14[%c464, %c0_49] : memref<784x384xbf16, #tpu.memory_space<vmem>>, vector<16x384xbf16>
    tpu.vector_store %arg14[%c464, %c0_49], %97 {strides = array<i32>} : memref<784x384xbf16, #tpu.memory_space<vmem>>, vector<16x384xbf16>,
    %99 = vector.extract_strided_slice %38 {offsets = [0, 119], sizes = [16, 384], strides = [1, 1]} : vector<16x576xbf16> to vector<16x384xbf16>
    %c480 = arith.constant 480 : index
    %c0_50 = arith.constant 0 : index
    %100 = vector.load %arg14[%c480, %c0_50] : memref<784x384xbf16, #tpu.memory_space<vmem>>, vector<16x384xbf16>
    tpu.vector_store %arg14[%c480, %c0_50], %99 {strides = array<i32>} : memref<784x384xbf16, #tpu.memory_space<vmem>>, vector<16x384xbf16>,
    %101 = vector.extract_strided_slice %38 {offsets = [0, 120], sizes = [16, 384], strides = [1, 1]} : vector<16x576xbf16> to vector<16x384xbf16>
    %c496 = arith.constant 496 : index
    %c0_51 = arith.constant 0 : index
    %102 = vector.load %arg14[%c496, %c0_51] : memref<784x384xbf16, #tpu.memory_space<vmem>>, vector<16x384xbf16>
    tpu.vector_store %arg14[%c496, %c0_51], %101 {strides = array<i32>} : memref<784x384xbf16, #tpu.memory_space<vmem>>, vector<16x384xbf16>,
    %103 = vector.extract_strided_slice %38 {offsets = [0, 121], sizes = [16, 384], strides = [1, 1]} : vector<16x576xbf16> to vector<16x384xbf16>
    %c512 = arith.constant 512 : index
    %c0_52 = arith.constant 0 : index
    %104 = vector.load %arg14[%c512, %c0_52] : memref<784x384xbf16, #tpu.memory_space<vmem>>, vector<16x384xbf16>
    tpu.vector_store %arg14[%c512, %c0_52], %103 {strides = array<i32>} : memref<784x384xbf16, #tpu.memory_space<vmem>>, vector<16x384xbf16>,
    %105 = vector.extract_strided_slice %38 {offsets = [0, 122], sizes = [16, 384], strides = [1, 1]} : vector<16x576xbf16> to vector<16x384xbf16>
    %c528 = arith.constant 528 : index
    %c0_53 = arith.constant 0 : index
    %106 = vector.load %arg14[%c528, %c0_53] : memref<784x384xbf16, #tpu.memory_space<vmem>>, vector<16x384xbf16>
    tpu.vector_store %arg14[%c528, %c0_53], %105 {strides = array<i32>} : memref<784x384xbf16, #tpu.memory_space<vmem>>, vector<16x384xbf16>,
    %107 = vector.extract_strided_slice %38 {offsets = [0, 123], sizes = [16, 384], strides = [1, 1]} : vector<16x576xbf16> to vector<16x384xbf16>
    %c544 = arith.constant 544 : index
    %c0_54 = arith.constant 0 : index
    %108 = vector.load %arg14[%c544, %c0_54] : memref<784x384xbf16, #tpu.memory_space<vmem>>, vector<16x384xbf16>
    tpu.vector_store %arg14[%c544, %c0_54], %107 {strides = array<i32>} : memref<784x384xbf16, #tpu.memory_space<vmem>>, vector<16x384xbf16>,
    %109 = vector.extract_strided_slice %38 {offsets = [0, 141], sizes = [16, 384], strides = [1, 1]} : vector<16x576xbf16> to vector<16x384xbf16>
    %c560 = arith.constant 560 : index
    %c0_55 = arith.constant 0 : index
    %110 = vector.load %arg14[%c560, %c0_55] : memref<784x384xbf16, #tpu.memory_space<vmem>>, vector<16x384xbf16>
    tpu.vector_store %arg14[%c560, %c0_55], %109 {strides = array<i32>} : memref<784x384xbf16, #tpu.memory_space<vmem>>, vector<16x384xbf16>,
    %111 = vector.extract_strided_slice %38 {offsets = [0, 142], sizes = [16, 384], strides = [1, 1]} : vector<16x576xbf16> to vector<16x384xbf16>
    %c576 = arith.constant 576 : index
    %c0_56 = arith.constant 0 : index
    %112 = vector.load %arg14[%c576, %c0_56] : memref<784x384xbf16, #tpu.memory_space<vmem>>, vector<16x384xbf16>
    tpu.vector_store %arg14[%c576, %c0_56], %111 {strides = array<i32>} : memref<784x384xbf16, #tpu.memory_space<vmem>>, vector<16x384xbf16>,
    %113 = vector.extract_strided_slice %38 {offsets = [0, 143], sizes = [16, 384], strides = [1, 1]} : vector<16x576xbf16> to vector<16x384xbf16>
    %c592 = arith.constant 592 : index
    %c0_57 = arith.constant 0 : index
    %114 = vector.load %arg14[%c592, %c0_57] : memref<784x384xbf16, #tpu.memory_space<vmem>>, vector<16x384xbf16>
    tpu.vector_store %arg14[%c592, %c0_57], %113 {strides = array<i32>} : memref<784x384xbf16, #tpu.memory_space<vmem>>, vector<16x384xbf16>,
    %115 = vector.extract_strided_slice %38 {offsets = [0, 144], sizes = [16, 384], strides = [1, 1]} : vector<16x576xbf16> to vector<16x384xbf16>
    %c608 = arith.constant 608 : index
    %c0_58 = arith.constant 0 : index
    %116 = vector.load %arg14[%c608, %c0_58] : memref<784x384xbf16, #tpu.memory_space<vmem>>, vector<16x384xbf16>
    tpu.vector_store %arg14[%c608, %c0_58], %115 {strides = array<i32>} : memref<784x384xbf16, #tpu.memory_space<vmem>>, vector<16x384xbf16>,
    %117 = vector.extract_strided_slice %38 {offsets = [0, 145], sizes = [16, 384], strides = [1, 1]} : vector<16x576xbf16> to vector<16x384xbf16>
    %c624 = arith.constant 624 : index
    %c0_59 = arith.constant 0 : index
    %118 = vector.load %arg14[%c624, %c0_59] : memref<784x384xbf16, #tpu.memory_space<vmem>>, vector<16x384xbf16>
    tpu.vector_store %arg14[%c624, %c0_59], %117 {strides = array<i32>} : memref<784x384xbf16, #tpu.memory_space<vmem>>, vector<16x384xbf16>,
    %119 = vector.extract_strided_slice %38 {offsets = [0, 146], sizes = [16, 384], strides = [1, 1]} : vector<16x576xbf16> to vector<16x384xbf16>
    %c640 = arith.constant 640 : index
    %c0_60 = arith.constant 0 : index
    %120 = vector.load %arg14[%c640, %c0_60] : memref<784x384xbf16, #tpu.memory_space<vmem>>, vector<16x384xbf16>
    tpu.vector_store %arg14[%c640, %c0_60], %119 {strides = array<i32>} : memref<784x384xbf16, #tpu.memory_space<vmem>>, vector<16x384xbf16>,
    %121 = vector.extract_strided_slice %38 {offsets = [0, 147], sizes = [16, 384], strides = [1, 1]} : vector<16x576xbf16> to vector<16x384xbf16>
    %c656 = arith.constant 656 : index
    %c0_61 = arith.constant 0 : index
    %122 = vector.load %arg14[%c656, %c0_61] : memref<784x384xbf16, #tpu.memory_space<vmem>>, vector<16x384xbf16>
    tpu.vector_store %arg14[%c656, %c0_61], %121 {strides = array<i32>} : memref<784x384xbf16, #tpu.memory_space<vmem>>, vector<16x384xbf16>,
    %123 = vector.extract_strided_slice %38 {offsets = [0, 165], sizes = [16, 384], strides = [1, 1]} : vector<16x576xbf16> to vector<16x384xbf16>
    %c672 = arith.constant 672 : index
    %c0_62 = arith.constant 0 : index
    %124 = vector.load %arg14[%c672, %c0_62] : memref<784x384xbf16, #tpu.memory_space<vmem>>, vector<16x384xbf16>
    tpu.vector_store %arg14[%c672, %c0_62], %123 {strides = array<i32>} : memref<784x384xbf16, #tpu.memory_space<vmem>>, vector<16x384xbf16>,
    %125 = vector.extract_strided_slice %38 {offsets = [0, 166], sizes = [16, 384], strides = [1, 1]} : vector<16x576xbf16> to vector<16x384xbf16>
    %c688 = arith.constant 688 : index
    %c0_63 = arith.constant 0 : index
    %126 = vector.load %arg14[%c688, %c0_63] : memref<784x384xbf16, #tpu.memory_space<vmem>>, vector<16x384xbf16>
    tpu.vector_store %arg14[%c688, %c0_63], %125 {strides = array<i32>} : memref<784x384xbf16, #tpu.memory_space<vmem>>, vector<16x384xbf16>,
    %127 = vector.extract_strided_slice %38 {offsets = [0, 167], sizes = [16, 384], strides = [1, 1]} : vector<16x576xbf16> to vector<16x384xbf16>
    %c704 = arith.constant 704 : index
    %c0_64 = arith.constant 0 : index
    %128 = vector.load %arg14[%c704, %c0_64] : memref<784x384xbf16, #tpu.memory_space<vmem>>, vector<16x384xbf16>
    tpu.vector_store %arg14[%c704, %c0_64], %127 {strides = array<i32>} : memref<784x384xbf16, #tpu.memory_space<vmem>>, vector<16x384xbf16>,
    %129 = vector.extract_strided_slice %38 {offsets = [0, 168], sizes = [16, 384], strides = [1, 1]} : vector<16x576xbf16> to vector<16x384xbf16>
    %c720 = arith.constant 720 : index
    %c0_65 = arith.constant 0 : index
    %130 = vector.load %arg14[%c720, %c0_65] : memref<784x384xbf16, #tpu.memory_space<vmem>>, vector<16x384xbf16>
    tpu.vector_store %arg14[%c720, %c0_65], %129 {strides = array<i32>} : memref<784x384xbf16, #tpu.memory_space<vmem>>, vector<16x384xbf16>,
    %131 = vector.extract_strided_slice %38 {offsets = [0, 169], sizes = [16, 384], strides = [1, 1]} : vector<16x576xbf16> to vector<16x384xbf16>
    %c736 = arith.constant 736 : index
    %c0_66 = arith.constant 0 : index
    %132 = vector.load %arg14[%c736, %c0_66] : memref<784x384xbf16, #tpu.memory_space<vmem>>, vector<16x384xbf16>
    tpu.vector_store %arg14[%c736, %c0_66], %131 {strides = array<i32>} : memref<784x384xbf16, #tpu.memory_space<vmem>>, vector<16x384xbf16>,
    %133 = vector.extract_strided_slice %38 {offsets = [0, 170], sizes = [16, 384], strides = [1, 1]} : vector<16x576xbf16> to vector<16x384xbf16>
    %c752 = arith.constant 752 : index
    %c0_67 = arith.constant 0 : index
    %134 = vector.load %arg14[%c752, %c0_67] : memref<784x384xbf16, #tpu.memory_space<vmem>>, vector<16x384xbf16>
    tpu.vector_store %arg14[%c752, %c0_67], %133 {strides = array<i32>} : memref<784x384xbf16, #tpu.memory_space<vmem>>, vector<16x384xbf16>,
    %135 = vector.extract_strided_slice %38 {offsets = [0, 171], sizes = [16, 384], strides = [1, 1]} : vector<16x576xbf16> to vector<16x384xbf16>
    %c768 = arith.constant 768 : index
    %c0_68 = arith.constant 0 : index
    %136 = vector.load %arg14[%c768, %c0_68] : memref<784x384xbf16, #tpu.memory_space<vmem>>, vector<16x384xbf16>
    tpu.vector_store %arg14[%c768, %c0_68], %135 {strides = array<i32>} : memref<784x384xbf16, #tpu.memory_space<vmem>>, vector<16x384xbf16>,
    %c0_69 = arith.constant 0 : index
    %c0_70 = arith.constant 0 : index
    %137 = vector.load %arg7[%c0_69, %c0_70] : memref<24x784xbf16, #tpu.memory_space<vmem>>, vector<24x784xbf16>
    %c0_71 = arith.constant 0 : index
    %c0_72 = arith.constant 0 : index
    %138 = vector.load %arg14[%c0_71, %c0_72] : memref<784x384xbf16, #tpu.memory_space<vmem>>, vector<784x384xbf16>
    %cst_73 = arith.constant dense<0.000000e+00> : vector<24x384xf32>
    %139 = tpu.matmul %137, %138, %cst_73 {dimension_numbers = #tpu.dot_dimension_numbers<[1], [0], [0], [1], [0, 0, 1, 1], [], []>} : vector<24x784xbf16>, vector<784x384xbf16>, vector<24x384xf32> -> vector<24x384xf32>
    %c0_74 = arith.constant 0 : index
    %c0_75 = arith.constant 0 : index
    %140 = vector.load %arg8[%c0_74, %c0_75] : memref<24x1xf32, #tpu.memory_space<vmem>>, vector<24x1xf32>
    %c0_76 = arith.constant 0 : index
    %c0_77 = arith.constant 0 : index
    %141 = vector.load %arg9[%c0_76, %c0_77] : memref<24x1xf32, #tpu.memory_space<vmem>>, vector<24x1xf32>
    %142 = vector.broadcast %1 : vector<1x384xf32> to vector<24x384xf32>
    %143 = arith.mulf %139, %142 : vector<24x384xf32>
    %cst_78 = arith.constant dense<0.000000e+00> : vector<24xf32>
    %144 = vector.multi_reduction <add>, %143, %cst_78 [1] : vector<24x384xf32> to vector<24xf32>
    %145 = vector.shape_cast %144 : vector<24xf32> to vector<24x1xf32>
    %146 = arith.mulf %143, %143 : vector<24x384xf32>
    %cst_79 = arith.constant dense<0.000000e+00> : vector<24xf32>
    %147 = vector.multi_reduction <add>, %146, %cst_79 [1] : vector<24x384xf32> to vector<24xf32>
    %148 = vector.shape_cast %147 : vector<24xf32> to vector<24x1xf32>
    %cst_80 = arith.constant 3.906250e-03 : f32
    %149 = vector.broadcast %cst_80 : f32 to vector<24x1xf32>
    %150 = arith.mulf %145, %149 : vector<24x1xf32>
    %cst_81 = arith.constant 3.906250e-03 : f32
    %151 = vector.broadcast %cst_81 : f32 to vector<24x1xf32>
    %152 = arith.mulf %148, %151 : vector<24x1xf32>
    %153 = arith.mulf %150, %150 : vector<24x1xf32>
    %154 = arith.subf %152, %153 : vector<24x1xf32>
    %cst_82 = arith.constant 0.000000e+00 : f32
    %155 = vector.broadcast %cst_82 : f32 to vector<24x1xf32>
    %156 = arith.maximumf %154, %155 : vector<24x1xf32>
    %157 = vector.broadcast %150 : vector<24x1xf32> to vector<24x384xf32>
    %158 = arith.subf %139, %157 : vector<24x384xf32>
    %cst_83 = arith.constant 9.99999974E-6 : f32
    %159 = vector.broadcast %cst_83 : f32 to vector<24x1xf32>
    %160 = arith.addf %156, %159 : vector<24x1xf32>
    %161 = math.rsqrt %160 : vector<24x1xf32>
    %162 = vector.broadcast %161 : vector<24x1xf32> to vector<24x384xf32>
    %163 = arith.mulf %158, %162 : vector<24x384xf32>
    %164 = vector.broadcast %140 : vector<24x1xf32> to vector<24x384xf32>
    %165 = arith.mulf %163, %164 : vector<24x384xf32>
    %166 = vector.broadcast %141 : vector<24x1xf32> to vector<24x384xf32>
    %167 = arith.addf %165, %166 : vector<24x384xf32>
    %cst_84 = arith.constant 0.000000e+00 : f32
    %168 = vector.broadcast %cst_84 : f32 to vector<24x384xf32>
    %169 = arith.maximumf %167, %168 : vector<24x384xf32>
    %170 = vector.broadcast %1 : vector<1x384xf32> to vector<24x384xf32>
    %171 = arith.mulf %169, %170 : vector<24x384xf32>
    %172 = arith.truncf %171 : vector<24x384xf32> to vector<24x384xbf16>
    %c0_85 = arith.constant 0 : index
    %c0_86 = arith.constant 0 : index
    %173 = vector.load %arg10[%c0_85, %c0_86] : memref<8x24xbf16, #tpu.memory_space<vmem>>, vector<8x24xbf16>
    %cst_87 = arith.constant dense<0.000000e+00> : vector<8x384xf32>
    %174 = tpu.matmul %173, %172, %cst_87 {dimension_numbers = #tpu.dot_dimension_numbers<[1], [0], [0], [1], [0, 0, 1, 1], [], []>} : vector<8x24xbf16>, vector<24x384xbf16>, vector<8x384xf32> -> vector<8x384xf32>
    %c0_88 = arith.constant 0 : index
    %c0_89 = arith.constant 0 : index
    %175 = vector.load %arg11[%c0_88, %c0_89] : memref<8x1xf32, #tpu.memory_space<vmem>>, vector<8x1xf32>
    %c0_90 = arith.constant 0 : index
    %c0_91 = arith.constant 0 : index
    %176 = vector.load %arg12[%c0_90, %c0_91] : memref<8x1xf32, #tpu.memory_space<vmem>>, vector<8x1xf32>
    %177 = vector.broadcast %1 : vector<1x384xf32> to vector<8x384xf32>
    %178 = arith.mulf %174, %177 : vector<8x384xf32>
    %cst_92 = arith.constant dense<0.000000e+00> : vector<8xf32>
    %179 = vector.multi_reduction <add>, %178, %cst_92 [1] : vector<8x384xf32> to vector<8xf32>
    %180 = vector.shape_cast %179 : vector<8xf32> to vector<8x1xf32>
    %181 = arith.mulf %178, %178 : vector<8x384xf32>
    %cst_93 = arith.constant dense<0.000000e+00> : vector<8xf32>
    %182 = vector.multi_reduction <add>, %181, %cst_93 [1] : vector<8x384xf32> to vector<8xf32>
    %183 = vector.shape_cast %182 : vector<8xf32> to vector<8x1xf32>
    %cst_94 = arith.constant 3.906250e-03 : f32
    %184 = vector.broadcast %cst_94 : f32 to vector<8x1xf32>
    %185 = arith.mulf %180, %184 : vector<8x1xf32>
    %cst_95 = arith.constant 3.906250e-03 : f32
    %186 = vector.broadcast %cst_95 : f32 to vector<8x1xf32>
    %187 = arith.mulf %183, %186 : vector<8x1xf32>
    %188 = arith.mulf %185, %185 : vector<8x1xf32>
    %189 = arith.subf %187, %188 : vector<8x1xf32>
    %cst_96 = arith.constant 0.000000e+00 : f32
    %190 = vector.broadcast %cst_96 : f32 to vector<8x1xf32>
    %191 = arith.maximumf %189, %190 : vector<8x1xf32>
    %192 = vector.broadcast %185 : vector<8x1xf32> to vector<8x384xf32>
    %193 = arith.subf %174, %192 : vector<8x384xf32>
    %cst_97 = arith.constant 9.99999974E-6 : f32
    %194 = vector.broadcast %cst_97 : f32 to vector<8x1xf32>
    %195 = arith.addf %191, %194 : vector<8x1xf32>
    %196 = math.rsqrt %195 : vector<8x1xf32>
    %197 = vector.broadcast %196 : vector<8x1xf32> to vector<8x384xf32>
    %198 = arith.mulf %193, %197 : vector<8x384xf32>
    %199 = vector.broadcast %175 : vector<8x1xf32> to vector<8x384xf32>
    %200 = arith.mulf %198, %199 : vector<8x384xf32>
    %201 = vector.broadcast %176 : vector<8x1xf32> to vector<8x384xf32>
    %202 = arith.addf %200, %201 : vector<8x384xf32>
    %cst_98 = arith.constant 0.000000e+00 : f32
    %203 = vector.broadcast %cst_98 : f32 to vector<8x384xf32>
    %204 = arith.maximumf %202, %203 : vector<8x384xf32>
    %205 = vector.broadcast %1 : vector<1x384xf32> to vector<8x384xf32>
    %206 = arith.mulf %204, %205 : vector<8x384xf32>
    %c0_99 = arith.constant 0 : index
    %c0_100 = arith.constant 0 : index
    %c0_101 = arith.constant 0 : index
    %207 = vector.load %arg13[%c0_99, %c0_100, %c0_101] : memref<1x8x384xf32, #tpu.memory_space<vmem>>, vector<1x8x384xf32>
    %208 = vector.shape_cast %207 : vector<1x8x384xf32> to vector<8x384xf32>
    %209 = vector.shape_cast %206 : vector<8x384xf32> to vector<1x8x384xf32>
    tpu.vector_store %arg13[%c0_99, %c0_100, %c0_101], %209 {strides = array<i32>} : memref<1x8x384xf32, #tpu.memory_space<vmem>>, vector<1x8x384xf32>,
    return
  }
  func.func @transform_0(%arg0: i32) -> (i32, i32, i32) {
    %c0_i32 = arith.constant 0 : i32
    %c0_i32_0 = arith.constant 0 : i32
    %c0_i32_1 = arith.constant 0 : i32
    return %arg0, %c0_i32, %c0_i32_0 : i32, i32, i32
  }
  func.func @transform_1(%arg0: i32) -> (i32, i32) {
    %c0_i32 = arith.constant 0 : i32
    %c0_i32_0 = arith.constant 0 : i32
    %c0_i32_1 = arith.constant 0 : i32
    return %c0_i32, %c0_i32_0 : i32, i32
  }
  func.func @transform_2(%arg0: i32) -> (i32, i32) {
    %c0_i32 = arith.constant 0 : i32
    %c0_i32_0 = arith.constant 0 : i32
    %c0_i32_1 = arith.constant 0 : i32
    return %c0_i32, %c0_i32_0 : i32, i32
  }
  func.func @transform_3(%arg0: i32) -> (i32, i32) {
    %c0_i32 = arith.constant 0 : i32
    %c0_i32_0 = arith.constant 0 : i32
    %c0_i32_1 = arith.constant 0 : i32
    return %c0_i32, %c0_i32_0 : i32, i32
  }
  func.func @transform_4(%arg0: i32) -> (i32, i32) {
    %c0_i32 = arith.constant 0 : i32
    %c0_i32_0 = arith.constant 0 : i32
    %c0_i32_1 = arith.constant 0 : i32
    return %c0_i32, %c0_i32_0 : i32, i32
  }
  func.func @transform_5(%arg0: i32) -> (i32, i32) {
    %c0_i32 = arith.constant 0 : i32
    %c0_i32_0 = arith.constant 0 : i32
    %c0_i32_1 = arith.constant 0 : i32
    return %c0_i32, %c0_i32_0 : i32, i32
  }
  func.func @transform_6(%arg0: i32) -> (i32, i32) {
    %c0_i32 = arith.constant 0 : i32
    %c0_i32_0 = arith.constant 0 : i32
    %c0_i32_1 = arith.constant 0 : i32
    return %c0_i32, %c0_i32_0 : i32, i32
  }
  func.func @transform_7(%arg0: i32) -> (i32, i32) {
    %c0_i32 = arith.constant 0 : i32
    %c0_i32_0 = arith.constant 0 : i32
    %c0_i32_1 = arith.constant 0 : i32
    return %c0_i32, %c0_i32_0 : i32, i32
  }
  func.func @transform_8(%arg0: i32) -> (i32, i32) {
    %c0_i32 = arith.constant 0 : i32
    %c0_i32_0 = arith.constant 0 : i32
    %c0_i32_1 = arith.constant 0 : i32
    return %c0_i32, %c0_i32_0 : i32, i32
  }
  func.func @transform_9(%arg0: i32) -> (i32, i32) {
    %c0_i32 = arith.constant 0 : i32
    %c0_i32_0 = arith.constant 0 : i32
    %c0_i32_1 = arith.constant 0 : i32
    return %c0_i32, %c0_i32_0 : i32, i32
  }
  func.func @transform_10(%arg0: i32) -> (i32, i32) {
    %c0_i32 = arith.constant 0 : i32
    %c0_i32_0 = arith.constant 0 : i32
    %c0_i32_1 = arith.constant 0 : i32
    return %c0_i32, %c0_i32_0 : i32, i32
  }
  func.func @transform_11(%arg0: i32) -> (i32, i32) {
    %c0_i32 = arith.constant 0 : i32
    %c0_i32_0 = arith.constant 0 : i32
    %c0_i32_1 = arith.constant 0 : i32
    return %c0_i32, %c0_i32_0 : i32, i32
  }
  func.func @transform_12(%arg0: i32) -> (i32, i32, i32) {
    %c0_i32 = arith.constant 0 : i32
    %c0_i32_0 = arith.constant 0 : i32
    %c0_i32_1 = arith.constant 0 : i32
    return %arg0, %c0_i32, %c0_i32_0 : i32, i32, i32
  }
}

</mosaic_0001>

<llo_original>
// kernel: tile.8
$region0: #{tile.8}
  #allocation0 [shape = 's32[1]{0}', space=sflag, size = 0x4, scoped, tag = 'scoped memory for tile.8']
  %s0 = inlined_call_operand.vmem [shape: f32[24], index: 0, kind: input, shape index: {}]
  %s1 = inlined_call_operand.vmem [shape: f32[16,24], index: 1, kind: output, shape index: {}]
  // Predicated region
  $region2: #{tile.8} parent=0 // pred_check
    _
  $region3: #{tile.8} parent=0 // pred_check_branch
    %3 = sbr.rel (0) target = $region5
  $region4: #{tile.8} parent=0 // pred_region
    _
  $region5: #{tile.8} parent=0 // pred_fallthru
    _
  %v4 = vld [vmem:[%s0] ss:$0 sm:$0xff]
  %5 = vst [vmem:[%s1] sm:$0xff] %v4
  %s6 = scalar_lea.vmem %s1, 8
  %7 = vst [vmem:[%s6] sm:$0xff] %v4

// kernel: tile.9
$region0: #{tile.9}
  %s0 = inlined_call_operand.vmem [shape: f32[16,24], index: 0, kind: input, shape index: {}]
  %s1 = inlined_call_operand.vmem [shape: f32[1,384], index: 1, kind: output, shape index: {}]
  $region1: #{tile.9} parent=0
    #allocation0 [shape = 'u8[12288]{0}', space=vmem, size = 0x3000, scoped, tag = 'scoped mem for output reshape']
    %v2 = vld [vmem:[%s0] sm:$0x1]
    %vm3 = vcmask 195584
    %4 = vst.msk [vmem:[#allocation0] sm:$0x1] %vm3, %v2
    %s5 = scalar_lea.vmem %s0, 5
    %v6 = vld [vmem:[%s5] sm:$0x1]
    %s7 = scalar_lea.vmem %s0, 5
    %v8 = vld [vmem:[%s7] sm:$0x1]
    %vm9 = vcmask 64512
    %v10 = vsel %vm9, %v8, %v6
    %11 = vrot.lane.b32.xlu0 %v10, 120
    %v12 = vpop.permute.xlu0 %11
    %vm13 = vcmask 130048
    %s14 = scalar_lea.vmem [#allocation0], 8
    %15 = vst.msk [vmem:[%s14] sm:$0x1] %vm13, %v12
    %vm16 = vcmask 1048512
    %17 = vst.msk [vmem:[#allocation0] sm:$0x1] %vm16, %v12
    %s18 = scalar_lea.vmem %s0, 10
    %v19 = vld [vmem:[%s18] sm:$0x1]
    %s20 = scalar_lea.vmem %s0, 10
    %v21 = vld [vmem:[%s20] sm:$0x1]
    %vm22 = vcmask 130048
    %v23 = vsel %vm22, %v21, %v19
    %24 = vrot.lane.b32.xlu0 %v23, 112
    %v25 = vpop.permute.xlu0 %24
    %vm26 = vcmask 64512
    %s27 = scalar_lea.vmem [#allocation0], 16
    %28 = vst.msk [vmem:[%s27] sm:$0x1] %vm26, %v25
    %vm29 = vcmask 1048448
    %s30 = scalar_lea.vmem [#allocation0], 8
    %31 = vst.msk [vmem:[%s30] sm:$0x1] %vm29, %v25
    %s32 = scalar_lea.vmem %s0, 15
    %v33 = vld [vmem:[%s32] sm:$0x1]
    %34 = vrot.lane.b32.xlu0 %v33, 104
    %v35 = vpop.permute.xlu0 %34
    %vm36 = vcmask 1048384
    %s37 = scalar_lea.vmem [#allocation0], 16
    %38 = vst.msk [vmem:[%s37] sm:$0x1] %vm36, %v35
    %s39 = scalar_lea.vmem %s0, 4
    %v40 = vld [vmem:[%s39] sm:$0x1]
    %41 = vrot.lane.b32.xlu0 %v40, 96
    %v42 = vpop.permute.xlu0 %41
    %vm43 = vcmask 982784
    %44 = vst.msk [vmem:[#allocation0] sm:$0x1] %vm43, %v42
    %s45 = scalar_lea.vmem %s0, 9
    %v46 = vld [vmem:[%s45] sm:$0x1]
    %47 = vrot.lane.b32.xlu0 %v46, 88
    %v48 = vpop.permute.xlu0 %47
    %vm49 = vcmask 917184
    %s50 = scalar_lea.vmem [#allocation0], 8
    %51 = vst.msk [vmem:[%s50] sm:$0x1] %vm49, %v48
    %s52 = scalar_lea.vmem %s0, 14
    %v53 = vld [vmem:[%s52] sm:$0x1]
    %54 = vrot.lane.b32.xlu0 %v53, 80
    %v55 = vpop.permute.xlu0 %54
    %vm56 = vcmask 851584
    %s57 = scalar_lea.vmem [#allocation0], 16
    %58 = vst.msk [vmem:[%s57] sm:$0x1] %vm56, %v55
    %s59 = scalar_lea.vmem %s0, 3
    %v60 = vld [vmem:[%s59] sm:$0x1]
    %61 = vrot.lane.b32.xlu0 %v60, 72
    %v62 = vpop.permute.xlu0 %61
    %vm63 = vcmask 785984
    %64 = vst.msk [vmem:[#allocation0] sm:$0x1] %vm63, %v62
    %s65 = scalar_lea.vmem %s0, 8
    %v66 = vld [vmem:[%s65] sm:$0x1]
    %67 = vrot.lane.b32.xlu0 %v66, 64
    %v68 = vpop.permute.xlu0 %67
    %vm69 = vcmask 720384
    %s70 = scalar_lea.vmem [#allocation0], 8
    %71 = vst.msk [vmem:[%s70] sm:$0x1] %vm69, %v68
    %s72 = scalar_lea.vmem %s0, 13
    %v73 = vld [vmem:[%s72] sm:$0x1]
    %74 = vrot.lane.b32.xlu0 %v73, 56
    %v75 = vpop.permute.xlu0 %74
    %vm76 = vcmask 654784
    %s77 = scalar_lea.vmem [#allocation0], 16
    %78 = vst.msk [vmem:[%s77] sm:$0x1] %vm76, %v75
    %s79 = scalar_lea.vmem %s0, 2
    %v80 = vld [vmem:[%s79] sm:$0x1]
    %81 = vrot.lane.b32.xlu0 %v80, 48
    %v82 = vpop.permute.xlu0 %81
    %vm83 = vcmask 589184
    %84 = vst.msk [vmem:[#allocation0] sm:$0x1] %vm83, %v82
    %s85 = scalar_lea.vmem %s0, 7
    %v86 = vld [vmem:[%s85] sm:$0x1]
    %87 = vrot.lane.b32.xlu0 %v86, 40
    %v88 = vpop.permute.xlu0 %87
    %vm89 = vcmask 523584
    %s90 = scalar_lea.vmem [#allocation0], 8
    %91 = vst.msk [vmem:[%s90] sm:$0x1] %vm89, %v88
    %s92 = scalar_lea.vmem %s0, 12
    %v93 = vld [vmem:[%s92] sm:$0x1]
    %94 = vrot.lane.b32.xlu0 %v93, 32
    %v95 = vpop.permute.xlu0 %94
    %vm96 = vcmask 457984
    %s97 = scalar_lea.vmem [#allocation0], 16
    %98 = vst.msk [vmem:[%s97] sm:$0x1] %vm96, %v95
    %s99 = scalar_lea.vmem %s0, 1
    %v100 = vld [vmem:[%s99] sm:$0x1]
    %101 = vrot.lane.b32.xlu0 %v100, 24
    %v102 = vpop.permute.xlu0 %101
    %vm103 = vcmask 392384
    %104 = vst.msk [vmem:[#allocation0] sm:$0x1] %vm103, %v102
    %s105 = scalar_lea.vmem %s0, 6
    %v106 = vld [vmem:[%s105] sm:$0x1]
    %107 = vrot.lane.b32.xlu0 %v106, 16
    %v108 = vpop.permute.xlu0 %107
    %vm109 = vcmask 326784
    %s110 = scalar_lea.vmem [#allocation0], 8
    %111 = vst.msk [vmem:[%s110] sm:$0x1] %vm109, %v108
    %s112 = scalar_lea.vmem %s0, 11
    %v113 = vld [vmem:[%s112] sm:$0x1]
    %114 = vrot.lane.b32.xlu0 %v113, 8
    %v115 = vpop.permute.xlu0 %114
    %vm116 = vcmask 261184
    %s117 = scalar_lea.vmem [#allocation0], 16
    %118 = vst.msk [vmem:[%s117] sm:$0x1] %vm116, %v115
    %s120 = sshll.u32 1, 1
    %s121 = ssub.s32 %s120, 1
    %v123 = vld [vmem:[#allocation0] sm:%s121]
    %s124 = sshll.u32 1, 1
    %s125 = ssub.s32 %s124, 1
    %126 = vst [vmem:[%s1] sm:%s125] %v123
    %s127 = scalar_lea.vmem [#allocation0], 8
    %v128 = vld [vmem:[%s127] sm:%s121]
    %s129 = sshll.u32 1, 1
    %s130 = ssub.s32 %s129, 1
    %s131 = scalar_lea.vmem %s1, 1
    %132 = vst [vmem:[%s131] sm:%s130] %v128
    %s133 = scalar_lea.vmem [#allocation0], 16
    %v134 = vld [vmem:[%s133] sm:%s121]
    %s135 = sshll.u32 1, 1
    %s136 = ssub.s32 %s135, 1
    %s137 = smul.addr 1, 2
    %s138 = scalar_lea.vmem %s1, %s137
    %139 = vst [vmem:[%s138] sm:%s136] %v134

// kernel: msa_block_forward.1
$region0: #{msa_block_forward.1}
  #allocation0 [shape = 'u32[]', space=smem, size = 0x4, offset = 0x4, fixed_abs, tag = 'smem constant byte address 0x4 - core index']
  #allocation1 [shape = 'u32[144,128]{1,0:T(1,128)}', space=vmem, size = 0x12000, scoped, tag = 'internal scratch']
  #allocation2 [shape = 'bf16[784,384]{1,0:T(8,128)(2,1)}', space=vmem, size = 0x93000, scoped, tag = 'scratch operand']
  %s0 = inlined_call_operand.vmem [shape: bf16[2,4,576], index: 0, kind: input, shape index: {}]
  %s1 = inlined_call_operand.vmem [shape: f32[1,576], index: 1, kind: input, shape index: {}]
  %s2 = inlined_call_operand.vmem [shape: f32[1,384], index: 2, kind: input, shape index: {}]
  %s3 = inlined_call_operand.vmem [shape: bf16[16,4], index: 3, kind: input, shape index: {}]
  %s4 = inlined_call_operand.vmem [shape: f32[16,1], index: 4, kind: input, shape index: {}]
  %s5 = inlined_call_operand.vmem [shape: f32[16,1], index: 5, kind: input, shape index: {}]
  %s6 = inlined_call_operand.vmem [shape: bf16[24,784], index: 6, kind: input, shape index: {}]
  %s7 = inlined_call_operand.vmem [shape: f32[24,1], index: 7, kind: input, shape index: {}]
  %s8 = inlined_call_operand.vmem [shape: f32[24,1], index: 8, kind: input, shape index: {}]
  %s9 = inlined_call_operand.vmem [shape: bf16[8,24], index: 9, kind: input, shape index: {}]
  %s10 = inlined_call_operand.vmem [shape: f32[8,1], index: 10, kind: input, shape index: {}]
  %s11 = inlined_call_operand.vmem [shape: f32[8,1], index: 11, kind: input, shape index: {}]
  %s12 = inlined_call_operand.vmem [shape: f32[2,8,384], index: 12, kind: output, shape index: {}]
  %s13 = sld [smem:[#allocation0]]
  $region81: #{msa_block_forward.1} parent=0
    _
  %s15 = ssub.s32 1, %s13
  %s16 = scalar_select 0, %s15, %s13
  loop: start=0, step=1, limit=4
  $region2: #{msa_block_forward.1} parent=0 // loop_pre_header
    _
  $region3: #{msa_block_forward.1} parent=0 // loop_header
    %s18 = sphi 0, %s22
    %p19 = scmp.ge.s32.totalorder %s18, 4
    %s28 = sphi 0, %s30
    %s31 = sphi 0, %s28
    %s32 = sphi 0, %s31
    %s48 = sphi 0, %s32
    %s52 = sphi 0, %s52
    %s54 = sphi 0, %s52
    %s55 = sphi 0, %s54
    %s69 = sphi 0, %s55
    %s73 = sphi 0, %s73
    %s75 = sphi 0, %s73
    %s76 = sphi 0, %s75
    %s90 = sphi 0, %s76
    %s94 = sphi 0, %s94
    %s96 = sphi 0, %s94
    %s97 = sphi 0, %s96
    %s111 = sphi 0, %s97
    %s115 = sphi 0, %s115
    %s117 = sphi 0, %s115
    %s118 = sphi 0, %s117
    %s132 = sphi 0, %s118
    %s136 = sphi 0, %s136
    %s138 = sphi 0, %s136
    %s139 = sphi 0, %s138
    %s153 = sphi 0, %s139
    %s157 = sphi 0, %s157
    %s159 = sphi 0, %s157
    %s160 = sphi 0, %s159
    %s174 = sphi 0, %s160
    %s178 = sphi 0, %s178
    %s180 = sphi 0, %s178
    %s181 = sphi 0, %s180
    %s195 = sphi 0, %s181
    %s199 = sphi 0, %s199
    %s201 = sphi 0, %s199
    %s202 = sphi 0, %s201
    %s216 = sphi 0, %s202
    %s220 = sphi 0, %s220
    %s222 = sphi 0, %s220
    %s223 = sphi 0, %s222
    %s237 = sphi 0, %s223
    %s241 = sphi 0, %s241
    %s243 = sphi 0, %s241
    %s244 = sphi 0, %s243
    %s258 = sphi 0, %s244
    %s262 = sphi 0, %s262
    %s264 = sphi 0, %s262
    %s265 = sphi 0, %s264
    %s279 = sphi 0, %s265
    %s285 = sphi 0, %s287
    %s288 = sphi 0, %s285
    %s289 = sphi 0, %s288
    %s305 = sphi 0, %s289
  $region4: #{msa_block_forward.1} parent=0 // loop_header_branch
    %21 = sbr.rel (%p19) target = $region8
  $region5: #{msa_block_forward.1} parent=0 // loop_body
    %s23 = ssub.s32 %s18, 1
    %s24 = ssub.s32 %s18, 2
    %s25 = sadd.s32 %s18, 1
    %s26 = ssub.s32 %s18, %s25
    %p27 = scmp.eq.s32.totalorder %s26, 0
    %s29 = sadd.s32 %s28, 1
    %s30 = scalar_select %p27, %s28, %s29
    %p33 = pneg %p27
    %p34 = scmp.eq.s32.totalorder %s18, 1
    %p35 = por %p33, %p34
    %p36 = scmp.ne.s32.totalorder %s28, %s31
    %p37 = scmp.eq.s32.totalorder %s18, 0
    %p38 = por %p36, %p37
    %p39 = scmp.ne.s32.totalorder %s28, %s31
    %p40 = scmp.eq.s32.totalorder %s23, 1
    %p41 = por %p39, %p40
    %p42 = scmp.ne.s32.totalorder %s31, %s32
    %p43 = scmp.eq.s32.totalorder %s23, 0
    %p44 = por %p42, %p43
    %p45 = scmp.ne.s32.totalorder %s31, %s32
    %p46 = scmp.eq.s32.totalorder %s24, 1
    %p47 = por %p45, %p46
    %p49 = scmp.ne.s32.totalorder %s32, %s48
    %p50 = scmp.eq.s32.totalorder %s24, 0
    %p51 = por %p49, %p50
    %s53 = sadd.s32 %s52, 1
    %p56 = scmp.eq.s32.totalorder %s18, 1
    %p57 = scmp.ne.s32.totalorder %s52, %s54
    %p58 = scmp.eq.s32.totalorder %s18, 0
    %p59 = por %p57, %p58
    %p60 = scmp.ne.s32.totalorder %s52, %s54
    %p61 = scmp.eq.s32.totalorder %s23, 1
    %p62 = por %p60, %p61
    %p63 = scmp.ne.s32.totalorder %s54, %s55
    %p64 = scmp.eq.s32.totalorder %s23, 0
    %p65 = por %p63, %p64
    %p66 = scmp.ne.s32.totalorder %s54, %s55
    %p67 = scmp.eq.s32.totalorder %s24, 1
    %p68 = por %p66, %p67
    %p70 = scmp.ne.s32.totalorder %s55, %s69
    %p71 = scmp.eq.s32.totalorder %s24, 0
    %p72 = por %p70, %p71
    %s74 = sadd.s32 %s73, 1
    %p77 = scmp.eq.s32.totalorder %s18, 1
    %p78 = scmp.ne.s32.totalorder %s73, %s75
    %p79 = scmp.eq.s32.totalorder %s18, 0
    %p80 = por %p78, %p79
    %p81 = scmp.ne.s32.totalorder %s73, %s75
    %p82 = scmp.eq.s32.totalorder %s23, 1
    %p83 = por %p81, %p82
    %p84 = scmp.ne.s32.totalorder %s75, %s76
    %p85 = scmp.eq.s32.totalorder %s23, 0
    %p86 = por %p84, %p85
    %p87 = scmp.ne.s32.totalorder %s75, %s76
    %p88 = scmp.eq.s32.totalorder %s24, 1
    %p89 = por %p87, %p88
    %p91 = scmp.ne.s32.totalorder %s76, %s90
    %p92 = scmp.eq.s32.totalorder %s24, 0
    %p93 = por %p91, %p92
    %s95 = sadd.s32 %s94, 1
    %p98 = scmp.eq.s32.totalorder %s18, 1
    %p99 = scmp.ne.s32.totalorder %s94, %s96
    %p100 = scmp.eq.s32.totalorder %s18, 0
    %p101 = por %p99, %p100
    %p102 = scmp.ne.s32.totalorder %s94, %s96
    %p103 = scmp.eq.s32.totalorder %s23, 1
    %p104 = por %p102, %p103
    %p105 = scmp.ne.s32.totalorder %s96, %s97
    %p106 = scmp.eq.s32.totalorder %s23, 0
    %p107 = por %p105, %p106
    %p108 = scmp.ne.s32.totalorder %s96, %s97
    %p109 = scmp.eq.s32.totalorder %s24, 1
    %p110 = por %p108, %p109
    %p112 = scmp.ne.s32.totalorder %s97, %s111
    %p113 = scmp.eq.s32.totalorder %s24, 0
    %p114 = por %p112, %p113
    %s116 = sadd.s32 %s115, 1
    %p119 = scmp.eq.s32.totalorder %s18, 1
    %p120 = scmp.ne.s32.totalorder %s115, %s117
    %p121 = scmp.eq.s32.totalorder %s18, 0
    %p122 = por %p120, %p121
    %p123 = scmp.ne.s32.totalorder %s115, %s117
    %p124 = scmp.eq.s32.totalorder %s23, 1
    %p125 = por %p123, %p124
    %p126 = scmp.ne.s32.totalorder %s117, %s118
    %p127 = scmp.eq.s32.totalorder %s23, 0
    %p128 = por %p126, %p127
    %p129 = scmp.ne.s32.totalorder %s117, %s118
    %p130 = scmp.eq.s32.totalorder %s24, 1
    %p131 = por %p129, %p130
    %p133 = scmp.ne.s32.totalorder %s118, %s132
    %p134 = scmp.eq.s32.totalorder %s24, 0
    %p135 = por %p133, %p134
    %s137 = sadd.s32 %s136, 1
    %p140 = scmp.eq.s32.totalorder %s18, 1
    %p141 = scmp.ne.s32.totalorder %s136, %s138
    %p142 = scmp.eq.s32.totalorder %s18, 0
    %p143 = por %p141, %p142
    %p144 = scmp.ne.s32.totalorder %s136, %s138
    %p145 = scmp.eq.s32.totalorder %s23, 1
    %p146 = por %p144, %p145
    %p147 = scmp.ne.s32.totalorder %s138, %s139
    %p148 = scmp.eq.s32.totalorder %s23, 0
    %p149 = por %p147, %p148
    %p150 = scmp.ne.s32.totalorder %s138, %s139
    %p151 = scmp.eq.s32.totalorder %s24, 1
    %p152 = por %p150, %p151
    %p154 = scmp.ne.s32.totalorder %s139, %s153
    %p155 = scmp.eq.s32.totalorder %s24, 0
    %p156 = por %p154, %p155
    %s158 = sadd.s32 %s157, 1
    %p161 = scmp.eq.s32.totalorder %s18, 1
    %p162 = scmp.ne.s32.totalorder %s157, %s159
    %p163 = scmp.eq.s32.totalorder %s18, 0
    %p164 = por %p162, %p163
    %p165 = scmp.ne.s32.totalorder %s157, %s159
    %p166 = scmp.eq.s32.totalorder %s23, 1
    %p167 = por %p165, %p166
    %p168 = scmp.ne.s32.totalorder %s159, %s160
    %p169 = scmp.eq.s32.totalorder %s23, 0
    %p170 = por %p168, %p169
    %p171 = scmp.ne.s32.totalorder %s159, %s160
    %p172 = scmp.eq.s32.totalorder %s24, 1
    %p173 = por %p171, %p172
    %p175 = scmp.ne.s32.totalorder %s160, %s174
    %p176 = scmp.eq.s32.totalorder %s24, 0
    %p177 = por %p175, %p176
    %s179 = sadd.s32 %s178, 1
    %p182 = scmp.eq.s32.totalorder %s18, 1
    %p183 = scmp.ne.s32.totalorder %s178, %s180
    %p184 = scmp.eq.s32.totalorder %s18, 0
    %p185 = por %p183, %p184
    %p186 = scmp.ne.s32.totalorder %s178, %s180
    %p187 = scmp.eq.s32.totalorder %s23, 1
    %p188 = por %p186, %p187
    %p189 = scmp.ne.s32.totalorder %s180, %s181
    %p190 = scmp.eq.s32.totalorder %s23, 0
    %p191 = por %p189, %p190
    %p192 = scmp.ne.s32.totalorder %s180, %s181
    %p193 = scmp.eq.s32.totalorder %s24, 1
    %p194 = por %p192, %p193
    %p196 = scmp.ne.s32.totalorder %s181, %s195
    %p197 = scmp.eq.s32.totalorder %s24, 0
    %p198 = por %p196, %p197
    %s200 = sadd.s32 %s199, 1
    %p203 = scmp.eq.s32.totalorder %s18, 1
    %p204 = scmp.ne.s32.totalorder %s199, %s201
    %p205 = scmp.eq.s32.totalorder %s18, 0
    %p206 = por %p204, %p205
    %p207 = scmp.ne.s32.totalorder %s199, %s201
    %p208 = scmp.eq.s32.totalorder %s23, 1
    %p209 = por %p207, %p208
    %p210 = scmp.ne.s32.totalorder %s201, %s202
    %p211 = scmp.eq.s32.totalorder %s23, 0
    %p212 = por %p210, %p211
    %p213 = scmp.ne.s32.totalorder %s201, %s202
    %p214 = scmp.eq.s32.totalorder %s24, 1
    %p215 = por %p213, %p214
    %p217 = scmp.ne.s32.totalorder %s202, %s216
    %p218 = scmp.eq.s32.totalorder %s24, 0
    %p219 = por %p217, %p218
    %s221 = sadd.s32 %s220, 1
    %p224 = scmp.eq.s32.totalorder %s18, 1
    %p225 = scmp.ne.s32.totalorder %s220, %s222
    %p226 = scmp.eq.s32.totalorder %s18, 0
    %p227 = por %p225, %p226
    %p228 = scmp.ne.s32.totalorder %s220, %s222
    %p229 = scmp.eq.s32.totalorder %s23, 1
    %p230 = por %p228, %p229
    %p231 = scmp.ne.s32.totalorder %s222, %s223
    %p232 = scmp.eq.s32.totalorder %s23, 0
    %p233 = por %p231, %p232
    %p234 = scmp.ne.s32.totalorder %s222, %s223
    %p235 = scmp.eq.s32.totalorder %s24, 1
    %p236 = por %p234, %p235
    %p238 = scmp.ne.s32.totalorder %s223, %s237
    %p239 = scmp.eq.s32.totalorder %s24, 0
    %p240 = por %p238, %p239
    %s242 = sadd.s32 %s241, 1
    %p245 = scmp.eq.s32.totalorder %s18, 1
    %p246 = scmp.ne.s32.totalorder %s241, %s243
    %p247 = scmp.eq.s32.totalorder %s18, 0
    %p248 = por %p246, %p247
    %p249 = scmp.ne.s32.totalorder %s241, %s243
    %p250 = scmp.eq.s32.totalorder %s23, 1
    %p251 = por %p249, %p250
    %p252 = scmp.ne.s32.totalorder %s243, %s244
    %p253 = scmp.eq.s32.totalorder %s23, 0
    %p254 = por %p252, %p253
    %p255 = scmp.ne.s32.totalorder %s243, %s244
    %p256 = scmp.eq.s32.totalorder %s24, 1
    %p257 = por %p255, %p256
    %p259 = scmp.ne.s32.totalorder %s244, %s258
    %p260 = scmp.eq.s32.totalorder %s24, 0
    %p261 = por %p259, %p260
    %s263 = sadd.s32 %s262, 1
    %p266 = scmp.eq.s32.totalorder %s18, 1
    %p267 = scmp.ne.s32.totalorder %s262, %s264
    %p268 = scmp.eq.s32.totalorder %s18, 0
    %p269 = por %p267, %p268
    %p270 = scmp.ne.s32.totalorder %s262, %s264
    %p271 = scmp.eq.s32.totalorder %s23, 1
    %p272 = por %p270, %p271
    %p273 = scmp.ne.s32.totalorder %s264, %s265
    %p274 = scmp.eq.s32.totalorder %s23, 0
    %p275 = por %p273, %p274
    %p276 = scmp.ne.s32.totalorder %s264, %s265
    %p277 = scmp.eq.s32.totalorder %s24, 1
    %p278 = por %p276, %p277
    %p280 = scmp.ne.s32.totalorder %s265, %s279
    %p281 = scmp.eq.s32.totalorder %s24, 0
    %p282 = por %p280, %p281
    %s283 = ssub.s32 %s18, %s25
    %p284 = scmp.eq.s32.totalorder %s283, 0
    %s286 = sadd.s32 %s285, 1
    %s287 = scalar_select %p284, %s285, %s286
    %p290 = pneg %p284
    %p291 = scmp.eq.s32.totalorder %s18, 1
    %p292 = por %p290, %p291
    %p293 = scmp.ne.s32.totalorder %s285, %s288
    %p294 = scmp.eq.s32.totalorder %s18, 0
    %p295 = por %p293, %p294
    %p296 = scmp.ne.s32.totalorder %s285, %s288
    %p297 = scmp.eq.s32.totalorder %s23, 1
    %p298 = por %p296, %p297
    %p299 = scmp.ne.s32.totalorder %s288, %s289
    %p300 = scmp.eq.s32.totalorder %s23, 0
    %p301 = por %p299, %p300
    %p302 = scmp.ne.s32.totalorder %s288, %s289
    %p303 = scmp.eq.s32.totalorder %s24, 1
    %p304 = por %p302, %p303
    %p306 = scmp.ne.s32.totalorder %s289, %s305
    %p307 = scmp.eq.s32.totalorder %s24, 0
    %p308 = por %p306, %p307
    %p309 = scmp.le.s32.totalorder 1, %s18
    %p310 = scmp.lt.s32.totalorder %s18, 3
    %p311 = pnand %p309, %p310
    %p312 = pneg %p311
    // Predicated region
    $region9: #{msa_block_forward.1} parent=5 // pred_check
      _
    $region10: #{msa_block_forward.1} parent=5 // pred_check_branch
      %314 = sbr.rel (%p311) target = $region12
    $region11: #{msa_block_forward.1} parent=5 // pred_region
      %s315 = ssub.s32 %s18, 1
      // Predicated region
      $region13: #{msa_block_forward.1} parent=11 // pred_check
        %p316 = pneg %p65
      $region14: #{msa_block_forward.1} parent=11 // pred_check_branch
        %318 = sbr.rel (%p316) target = $region16
      $region15: #{msa_block_forward.1} parent=11 // pred_region
        _
      $region16: #{msa_block_forward.1} parent=11 // pred_fallthru
        _
      // Predicated region
      $region17: #{msa_block_forward.1} parent=11 // pred_check
        %p319 = pneg %p86
      $region18: #{msa_block_forward.1} parent=11 // pred_check_branch
        %321 = sbr.rel (%p319) target = $region20
      $region19: #{msa_block_forward.1} parent=11 // pred_region
        _
      $region20: #{msa_block_forward.1} parent=11 // pred_fallthru
        _
      // Predicated region
      $region21: #{msa_block_forward.1} parent=11 // pred_check
        %p322 = pneg %p107
      $region22: #{msa_block_forward.1} parent=11 // pred_check_branch
        %324 = sbr.rel (%p322) target = $region24
      $region23: #{msa_block_forward.1} parent=11 // pred_region
        _
      $region24: #{msa_block_forward.1} parent=11 // pred_fallthru
        _
      // Predicated region
      $region25: #{msa_block_forward.1} parent=11 // pred_check
        %p325 = pneg %p128
      $region26: #{msa_block_forward.1} parent=11 // pred_check_branch
        %327 = sbr.rel (%p325) target = $region28
      $region27: #{msa_block_forward.1} parent=11 // pred_region
        _
      $region28: #{msa_block_forward.1} parent=11 // pred_fallthru
        _
      // Predicated region
      $region29: #{msa_block_forward.1} parent=11 // pred_check
        %p328 = pneg %p149
      $region30: #{msa_block_forward.1} parent=11 // pred_check_branch
        %330 = sbr.rel (%p328) target = $region32
      $region31: #{msa_block_forward.1} parent=11 // pred_region
        _
      $region32: #{msa_block_forward.1} parent=11 // pred_fallthru
        _
      // Predicated region
      $region33: #{msa_block_forward.1} parent=11 // pred_check
        %p331 = pneg %p170
      $region34: #{msa_block_forward.1} parent=11 // pred_check_branch
        %333 = sbr.rel (%p331) target = $region36
      $region35: #{msa_block_forward.1} parent=11 // pred_region
        _
      $region36: #{msa_block_forward.1} parent=11 // pred_fallthru
        _
      // Predicated region
      $region37: #{msa_block_forward.1} parent=11 // pred_check
        %p334 = pneg %p191
      $region38: #{msa_block_forward.1} parent=11 // pred_check_branch
        %336 = sbr.rel (%p334) target = $region40
      $region39: #{msa_block_forward.1} parent=11 // pred_region
        _
      $region40: #{msa_block_forward.1} parent=11 // pred_fallthru
        _
      // Predicated region
      $region41: #{msa_block_forward.1} parent=11 // pred_check
        %p337 = pneg %p212
      $region42: #{msa_block_forward.1} parent=11 // pred_check_branch
        %339 = sbr.rel (%p337) target = $region44
      $region43: #{msa_block_forward.1} parent=11 // pred_region
        _
      $region44: #{msa_block_forward.1} parent=11 // pred_fallthru
        _
      // Predicated region
      $region45: #{msa_block_forward.1} parent=11 // pred_check
        %p340 = pneg %p233
      $region46: #{msa_block_forward.1} parent=11 // pred_check_branch
        %342 = sbr.rel (%p340) target = $region48
      $region47: #{msa_block_forward.1} parent=11 // pred_region
        _
      $region48: #{msa_block_forward.1} parent=11 // pred_fallthru
        _
      // Predicated region
      $region49: #{msa_block_forward.1} parent=11 // pred_check
        %p343 = pneg %p254
      $region50: #{msa_block_forward.1} parent=11 // pred_check_branch
        %345 = sbr.rel (%p343) target = $region52
      $region51: #{msa_block_forward.1} parent=11 // pred_region
        _
      $region52: #{msa_block_forward.1} parent=11 // pred_fallthru
        _
      // Predicated region
      $region53: #{msa_block_forward.1} parent=11 // pred_check
        %p346 = pneg %p275
      $region54: #{msa_block_forward.1} parent=11 // pred_check_branch
        %348 = sbr.rel (%p346) target = $region56
      $region55: #{msa_block_forward.1} parent=11 // pred_region
        _
      $region56: #{msa_block_forward.1} parent=11 // pred_fallthru
        _
    $region12: #{msa_block_forward.1} parent=5 // pred_fallthru
      _
    %p349 = scmp.lt.s32.totalorder %s18, 2
    // Predicated region
    $region57: #{msa_block_forward.1} parent=5 // pred_check
      %p350 = pneg %p349
    $region58: #{msa_block_forward.1} parent=5 // pred_check_branch
      %352 = sbr.rel (%p350) target = $region60
    $region59: #{msa_block_forward.1} parent=5 // pred_region
      // Predicated region
      $region61: #{msa_block_forward.1} parent=59 // pred_check
        %p353 = pneg %p38
      $region62: #{msa_block_forward.1} parent=59 // pred_check_branch
        %355 = sbr.rel (%p353) target = $region64
      $region63: #{msa_block_forward.1} parent=59 // pred_region
        %p356 = scmp.lt.s32.totalorder %s18, 1
        %s357 = scalar_select %p356, %s18, 1
        %s358 = smul.addr %s357, 5
        %s359 = smul.addr %s358, 2
        %s360 = scalar_lea.vmem %s0, %s359
      $region64: #{msa_block_forward.1} parent=59 // pred_fallthru
        _
    $region60: #{msa_block_forward.1} parent=5 // pred_fallthru
      _
    %p361 = scmp.le.s32.totalorder 1, %s18
    %p362 = scmp.lt.s32.totalorder %s18, 3
    %p363 = pnand %p361, %p362
    %p364 = pneg %p363
    // Predicated region
    $region65: #{msa_block_forward.1} parent=5 // pred_check
      _
    $region66: #{msa_block_forward.1} parent=5 // pred_check_branch
      %366 = sbr.rel (%p363) target = $region68
    $region67: #{msa_block_forward.1} parent=5 // pred_region
      %s367 = ssub.s32 %s18, 1
      %p368 = scmp.lt.s32.totalorder %s23, 1
      %s369 = scalar_select %p368, %s23, 1
      %s370 = smul.addr %s369, 5
      %s371 = smul.addr %s370, 2
      %s372 = scalar_lea.vmem %s0, %s371
      %p373 = pneg %p44
      %p374 = pneg %p41
      %p375 = pneg %p65
      %p376 = pneg %p62
      %p377 = pneg %p86
      %p378 = pneg %p83
      %p379 = pneg %p107
      %p380 = pneg %p104
      %p381 = pneg %p128
      %p382 = pneg %p125
      %p383 = pneg %p149
      %p384 = pneg %p146
      %p385 = pneg %p170
      %p386 = pneg %p167
      %p387 = pneg %p191
      %p388 = pneg %p188
      %p389 = pneg %p212
      %p390 = pneg %p209
      %p391 = pneg %p233
      %p392 = pneg %p230
      %p393 = pneg %p254
      %p394 = pneg %p251
      %p395 = pneg %p275
      %p396 = pneg %p272
      %p397 = pneg %p301
      %p398 = pneg %p298
      %p399 = scmp.lt.s32.totalorder %s23, 1
      %s400 = scalar_select %p399, %s23, 1
      %s401 = smul.addr %s400, 3
      %s402 = smul.addr %s401, 8
      %s403 = scalar_lea.vmem %s12, %s402
      %p404 = scmp.lt.s32.totalorder %s23, 1
      %s405 = scalar_select %p404, %s23, 1
      %s406 = smul.addr %s405, 5
      %s407 = smul.addr %s406, 2
      %s408 = scalar_lea.vmem %s0, %s407
      %p409 = scmp.lt.s32.totalorder %s23, 1
      %s410 = scalar_select %p409, %s23, 1
      %s411 = smul.addr %s410, 3
      %s412 = smul.addr %s411, 8
      %s413 = scalar_lea.vmem %s12, %s412
      %v415 = vld [vmem:[%s1] sm:$0x1f]
      %v416 = vld [vmem:[%s2] sm:$0x7]
      %v417 = vld [vmem:[%s3] sm:$0xf]
      %v418 = vld [vmem:[%s3 + $0x4] sm:$0xf]
      %v419 = vld [vmem:[%s408] sm:$0xff]
      %v420 = vld [vmem:[%s408 + $0x8] sm:$0x3]
      %v423 = vunpack.c.l.b16 %v417
      %v424 = vunpack.c.l.b16 %v418
      %v425 = vpack.c.b16 %v424, %v423
      %v428 = vcombine.high %v419, %v419
      %v430 = vunpack.c.l.s4 1983009808
      %v431 = vunpack.c.0.s8 %v430
      %v432 = vlaneseq
      %v433 = vshrl.u32 %v432, 7
      %v434 = vsub.s32 %v431, %v433
      %v435 = vrot.slane %v419, %v434
      %v437 = vunpack.c.l.s4 1983009808
      %v438 = vunpack.c.0.s8 %v437
      %v439 = vlaneseq
      %v440 = vshrl.u32 %v439, 7
      %v441 = vsub.s32 %v438, %v440
      %v442 = vrot.slane %v428, %v441
      %v443 = vcombine.high %v435, %v435
      %v444 = vcombine.high %v442, %v442
      %v446 = vunpack.c.l.s4 1983009808
      %v447 = vunpack.c.0.s8 %v446
      %v448 = vlaneseq
      %v449 = vshrl.u32 %v448, 7
      %v450 = vsub.s32 %v447, %v449
      %v451 = vrot.slane %v420, %v450
      %vm452 = vcmask 31744
      %v454 = vsel %vm452, %v425, 0
      %vm456 = vcmask 1041408
      %v458 = vsel %vm456, %v435, 0
      %v461 = vsel %vm456, %v443, 0
      %v464 = vsel %vm456, %v442, 0
      %v467 = vsel %vm456, %v444, 0
      %v470 = vsel %vm456, %v451, 0
      %472 = vmatprep.subr.bf16.mxu0 0
      %473 = vmatpush1.bf16.msra.mxu0 0
      %474 = vmatprep.subr.bf16.mxu0 0
      %475 = vmatpush1.bf16.msra.mxu0 0
      %476 = vmatprep.subr.bf16.mxu0 0
      %477 = vmatpush1.bf16.msra.mxu0 0
      %478 = vmatprep.subr.bf16.mxu0 0
      %479 = vmatpush1.bf16.msra.mxu0 0
      %480 = vmatprep.subr.bf16.mxu0 0
      %481 = vmatpush1.bf16.msra.mxu0 0
      %482 = vmatprep.subr.bf16.mxu0 0
      %483 = vmatpush1.bf16.msra.mxu0 0
      %484 = vmatprep.subr.bf16.mxu0 0
      %485 = vmatpush1.bf16.msra.mxu0 0
      %486 = vmatprep.subr.bf16.mxu0 %v461
      %487 = vmatpush1.bf16.msra.mxu0 %v458
      %488 = vmatprep.subr.bf16.mxu0 0
      %489 = vmatpush2.bf16.msra.mxu0 0
      %490 = vmatprep.subr.bf16.mxu0 0
      %491 = vmatpush2.bf16.msra.mxu0 0
      %492 = vmatprep.subr.bf16.mxu0 0
      %493 = vmatpush2.bf16.msra.mxu0 0
      %494 = vmatprep.subr.bf16.mxu0 0
      %495 = vmatpush2.bf16.msra.mxu0 0
      %496 = vmatprep.subr.bf16.mxu0 0
      %497 = vmatpush2.bf16.msra.mxu0 0
      %498 = vmatprep.subr.bf16.mxu0 0
      %499 = vmatpush2.bf16.msra.mxu0 0
      %500 = vmatprep.subr.bf16.mxu0 0
      %501 = vmatpush2.bf16.msra.mxu0 0
      %502 = vmatprep.subr.bf16.mxu0 0
      %503 = vmatpush2.bf16.msra.mxu0 0
      %504 = vmatprep.mubr.bf16.mxu0 0
      %505 = vmatmul.mubr.bf16.gmra.mxu0 %v454
      %v506 = vpop.f32.mrf.mxu0
      %v507 = vadd.f32 0.0, %v506
      %v508 = vpop.f32.mrf.mxu0
      %v509 = vadd.f32 0.0, %v508
      %v510 = vpop.f32.mrf.mxu0
      %v511 = vadd.f32 0.0, %v510
      %v512 = vpop.f32.mrf.mxu0
      %v513 = vadd.f32 0.0, %v512
      %514 = vdwg.mxu0
      %515 = vmatprep.subr.bf16.mxu0 0
      %516 = vmatpush1.bf16.msra.mxu0 0
      %517 = vmatprep.subr.bf16.mxu0 0
      %518 = vmatpush1.bf16.msra.mxu0 0
      %519 = vmatprep.subr.bf16.mxu0 0
      %520 = vmatpush1.bf16.msra.mxu0 0
      %521 = vmatprep.subr.bf16.mxu0 0
      %522 = vmatpush1.bf16.msra.mxu0 0
      %523 = vmatprep.subr.bf16.mxu0 0
      %524 = vmatpush1.bf16.msra.mxu0 0
      %525 = vmatprep.subr.bf16.mxu0 0
      %526 = vmatpush1.bf16.msra.mxu0 0
      %527 = vmatprep.subr.bf16.mxu0 0
      %528 = vmatpush1.bf16.msra.mxu0 0
      %529 = vmatprep.subr.bf16.mxu0 %v467
      %530 = vmatpush1.bf16.msra.mxu0 %v464
      %531 = vmatprep.subr.bf16.mxu0 0
      %532 = vmatpush2.bf16.msra.mxu0 0
      %533 = vmatprep.subr.bf16.mxu0 0
      %534 = vmatpush2.bf16.msra.mxu0 0
      %535 = vmatprep.subr.bf16.mxu0 0
      %536 = vmatpush2.bf16.msra.mxu0 0
      %537 = vmatprep.subr.bf16.mxu0 0
      %538 = vmatpush2.bf16.msra.mxu0 0
      %539 = vmatprep.subr.bf16.mxu0 0
      %540 = vmatpush2.bf16.msra.mxu0 0
      %541 = vmatprep.subr.bf16.mxu0 0
      %542 = vmatpush2.bf16.msra.mxu0 0
      %543 = vmatprep.subr.bf16.mxu0 0
      %544 = vmatpush2.bf16.msra.mxu0 0
      %545 = vmatprep.subr.bf16.mxu0 0
      %546 = vmatpush2.bf16.msra.mxu0 0
      %547 = vmatprep.mubr.bf16.mxu0 0
      %548 = vmatmul.mubr.bf16.gmra.mxu0 %v454
      %v549 = vpop.f32.mrf.mxu0
      %v550 = vadd.f32 0.0, %v549
      %v551 = vpop.f32.mrf.mxu0
      %v552 = vadd.f32 0.0, %v551
      %v553 = vpop.f32.mrf.mxu0
      %v554 = vadd.f32 0.0, %v553
      %v555 = vpop.f32.mrf.mxu0
      %v556 = vadd.f32 0.0, %v555
      %557 = vdwg.mxu0
      %558 = vmatprep.subr.bf16.mxu0 0
      %559 = vmatpush1.bf16.msra.mxu0 0
      %560 = vmatprep.subr.bf16.mxu0 0
      %561 = vmatpush1.bf16.msra.mxu0 0
      %562 = vmatprep.subr.bf16.mxu0 0
      %563 = vmatpush1.bf16.msra.mxu0 0
      %564 = vmatprep.subr.bf16.mxu0 0
      %565 = vmatpush1.bf16.msra.mxu0 0
      %566 = vmatprep.subr.bf16.mxu0 0
      %567 = vmatpush1.bf16.msra.mxu0 0
      %568 = vmatprep.subr.bf16.mxu0 0
      %569 = vmatpush1.bf16.msra.mxu0 0
      %570 = vmatprep.subr.bf16.mxu0 0
      %571 = vmatpush1.bf16.msra.mxu0 0
      %572 = vmatprep.subr.bf16.mxu0 0
      %573 = vmatpush1.bf16.msra.mxu0 %v470
      %574 = vmatprep.subr.bf16.mxu0 0
      %575 = vmatpush2.bf16.msra.mxu0 0
      %576 = vmatprep.subr.bf16.mxu0 0
      %577 = vmatpush2.bf16.msra.mxu0 0
      %578 = vmatprep.subr.bf16.mxu0 0
      %579 = vmatpush2.bf16.msra.mxu0 0
      %580 = vmatprep.subr.bf16.mxu0 0
      %581 = vmatpush2.bf16.msra.mxu0 0
      %582 = vmatprep.subr.bf16.mxu0 0
      %583 = vmatpush2.bf16.msra.mxu0 0
      %584 = vmatprep.subr.bf16.mxu0 0
      %585 = vmatpush2.bf16.msra.mxu0 0
      %586 = vmatprep.subr.bf16.mxu0 0
      %587 = vmatpush2.bf16.msra.mxu0 0
      %588 = vmatprep.subr.bf16.mxu0 0
      %589 = vmatpush2.bf16.msra.mxu0 0
      %590 = vmatprep.mubr.bf16.mxu0 0
      %591 = vmatmul.mubr.bf16.gmra.mxu0 %v454
      %v592 = vpop.f32.mrf.mxu0
      %v593 = vadd.f32 0.0, %v592
      %v594 = vpop.f32.mrf.mxu0
      %v595 = vpop.f32.mrf.mxu0
      %v596 = vadd.f32 0.0, %v595
      %v597 = vpop.f32.mrf.mxu0
      %598 = vdwg.mxu0
      %v599 = vld [vmem:[%s4] sm:$0xff]
      %v600 = vld [vmem:[%s4 + $0x8] sm:$0xff]
      %v601 = vld [vmem:[%s5] sm:$0xff]
      %v602 = vld [vmem:[%s5 + $0x8] sm:$0xff]
      %v604 = vlaneseq
      %v605 = vshrl.u32 %v604, 7
      %v606 = vsub.s32 0, %v605
      %v607 = vrot.slane %v415, %v606
      %v608 = vlaneseq
      %v609 = vshrl.u32 %v608, 7
      %v610 = vsub.s32 1, %v609
      %v611 = vrot.slane %v415, %v610
      %v612 = vlaneseq
      %v613 = vshrl.u32 %v612, 7
      %v614 = vsub.s32 2, %v613
      %v615 = vrot.slane %v415, %v614
      %v616 = vlaneseq
      %v617 = vshrl.u32 %v616, 7
      %v618 = vsub.s32 3, %v617
      %v619 = vrot.slane %v415, %v618
      %v620 = vlaneseq
      %v621 = vshrl.u32 %v620, 7
      %v622 = vsub.s32 4, %v621
      %v623 = vrot.slane %v415, %v622
      %v629 = vmul.f32 %v507, %v607
      %v630 = vmul.f32 %v509, %v611
      %v631 = vmul.f32 %v550, %v615
      %v632 = vmul.f32 %v552, %v619
      %v633 = vmul.f32 %v593, %v623
      %v634 = vmul.f32 %v511, %v607
      %v635 = vmul.f32 %v513, %v611
      %v636 = vmul.f32 %v554, %v615
      %v637 = vmul.f32 %v556, %v619
      %v638 = vmul.f32 %v596, %v623
      %v639 = vadd.f32 %v629, %v630
      %v640 = vadd.f32 %v639, %v631
      %v641 = vadd.f32 %v640, %v632
      %vm642 = vcmask 523264
      %v643 = vsel %vm642, %v633, 0.0
      %v644 = vadd.f32 %v641, %v643
      %645 = vadd.xlane.f32.xlu0 %v644
      %v646 = vpop.xlane.xlu0 %645
      %v647 = vadd.f32 %v634, %v635
      %v648 = vadd.f32 %v647, %v636
      %v649 = vadd.f32 %v648, %v637
      %v650 = vsel %vm642, %v638, 0.0
      %v651 = vadd.f32 %v649, %v650
      %652 = vadd.xlane.f32.xlu0 %v651
      %v653 = vpop.xlane.xlu0 %652
      %v654 = vmul.f32 %v629, %v629
      %v655 = vmul.f32 %v630, %v630
      %v656 = vmul.f32 %v631, %v631
      %v657 = vmul.f32 %v632, %v632
      %v658 = vmul.f32 %v633, %v633
      %v659 = vmul.f32 %v634, %v634
      %v660 = vmul.f32 %v635, %v635
      %v661 = vmul.f32 %v636, %v636
      %v662 = vmul.f32 %v637, %v637
      %v663 = vmul.f32 %v638, %v638
      %v664 = vadd.f32 %v654, %v655
      %v665 = vadd.f32 %v664, %v656
      %v666 = vadd.f32 %v665, %v657
      %v667 = vsel %vm642, %v658, 0.0
      %v668 = vadd.f32 %v666, %v667
      %669 = vadd.xlane.f32.xlu0 %v668
      %v670 = vpop.xlane.xlu0 %669
      %v671 = vadd.f32 %v659, %v660
      %v672 = vadd.f32 %v671, %v661
      %v673 = vadd.f32 %v672, %v662
      %v674 = vsel %vm642, %v663, 0.0
      %v675 = vadd.f32 %v673, %v674
      %676 = vadd.xlane.f32.xlu0 %v675
      %v677 = vpop.xlane.xlu0 %676
      %v678 = vmul.f32 %v646, 0.00390625
      %v679 = vmul.f32 %v653, 0.00390625
      %v680 = vmul.f32 %v670, 0.00390625
      %v681 = vmul.f32 %v677, 0.00390625
      %v682 = vmul.f32 %v678, %v678
      %v683 = vmul.f32 %v679, %v679
      %v684 = vsub.f32 %v680, %v682
      %v685 = vsub.f32 %v681, %v683
      %v686 = vmax.f32 %v684, 0.0
      %v687 = vmax.f32 %v685, 0.0
      %v688 = vsub.f32 %v507, %v678
      %v689 = vsub.f32 %v509, %v678
      %v690 = vsub.f32 %v550, %v678
      %v691 = vsub.f32 %v552, %v678
      %v692 = vsub.f32 %v593, %v678
      %v693 = vsub.f32 %v511, %v679
      %v694 = vsub.f32 %v513, %v679
      %v695 = vsub.f32 %v554, %v679
      %v696 = vsub.f32 %v556, %v679
      %v697 = vsub.f32 %v596, %v679
      %v698 = vadd.f32 %v686, 1e-05
      %v699 = vadd.f32 %v687, 1e-05
      %v700 = vrsqrt.pop %v698
      %v701 = vrsqrt.pop %v699
      %v702 = vmul.f32 %v688, %v700
      %v703 = vmul.f32 %v689, %v700
      %v704 = vmul.f32 %v690, %v700
      %v705 = vmul.f32 %v691, %v700
      %v706 = vmul.f32 %v692, %v700
      %v707 = vmul.f32 %v693, %v701
      %v708 = vmul.f32 %v694, %v701
      %v709 = vmul.f32 %v695, %v701
      %v710 = vmul.f32 %v696, %v701
      %v711 = vmul.f32 %v697, %v701
      %713 = vset.pattern.permute.xlu0 0
      %714 = vperm.xlu0 %713, %v599
      %v715 = vpop.permute.xlu0 %714
      %718 = vset.pattern.permute.xlu0 0
      %719 = vperm.xlu0 %718, %v600
      %v720 = vpop.permute.xlu0 %719
      %v722 = vmul.f32 %v702, %v715
      %v723 = vmul.f32 %v703, %v715
      %v724 = vmul.f32 %v704, %v715
      %v725 = vmul.f32 %v705, %v715
      %v726 = vmul.f32 %v706, %v715
      %v727 = vmul.f32 %v707, %v720
      %v728 = vmul.f32 %v708, %v720
      %v729 = vmul.f32 %v709, %v720
      %v730 = vmul.f32 %v710, %v720
      %v731 = vmul.f32 %v711, %v720
      %733 = vset.pattern.permute.xlu0 0
      %734 = vperm.xlu0 %733, %v601
      %v735 = vpop.permute.xlu0 %734
      %738 = vset.pattern.permute.xlu0 0
      %739 = vperm.xlu0 %738, %v602
      %v740 = vpop.permute.xlu0 %739
      %v742 = vadd.f32 %v722, %v735
      %v743 = vadd.f32 %v723, %v735
      %v744 = vadd.f32 %v724, %v735
      %v745 = vadd.f32 %v725, %v735
      %v746 = vadd.f32 %v726, %v735
      %v747 = vadd.f32 %v727, %v740
      %v748 = vadd.f32 %v728, %v740
      %v749 = vadd.f32 %v729, %v740
      %v750 = vadd.f32 %v730, %v740
      %v751 = vadd.f32 %v731, %v740
      %v752 = vmax.f32 %v742, 0.0
      %v753 = vmax.f32 %v743, 0.0
      %v754 = vmax.f32 %v744, 0.0
      %v755 = vmax.f32 %v745, 0.0
      %v756 = vmax.f32 %v746, 0.0
      %v757 = vmax.f32 %v747, 0.0
      %v758 = vmax.f32 %v748, 0.0
      %v759 = vmax.f32 %v749, 0.0
      %v760 = vmax.f32 %v750, 0.0
      %v761 = vmax.f32 %v751, 0.0
      %v762 = vmul.f32 %v752, %v607
      %v763 = vmul.f32 %v753, %v611
      %v764 = vmul.f32 %v754, %v615
      %v765 = vmul.f32 %v755, %v619
      %v766 = vmul.f32 %v756, %v623
      %v767 = vmul.f32 %v757, %v607
      %v768 = vmul.f32 %v758, %v611
      %v769 = vmul.f32 %v759, %v615
      %v770 = vmul.f32 %v760, %v619
      %v771 = vmul.f32 %v761, %v623
      %v772 = vpack.c.bf16 %v767, %v762
      %v773 = vpack.c.bf16 %v768, %v763
      %v774 = vpack.c.bf16 %v769, %v764
      %v775 = vpack.c.bf16 %v770, %v765
      %v776 = vpack.c.bf16 %v771, %v766
      %v781 = vunpack.c.l.b16 %v772
      %v782 = vunpack.c.l.b16 %v773
      %v783 = vunpack.c.l.b16 %v774
      %v784 = vunpack.c.l.b16 %v775
      %v785 = vunpack.c.h.b16 %v772
      %v786 = vunpack.c.h.b16 %v773
      %v787 = vunpack.c.h.b16 %v774
      %v788 = vunpack.c.h.b16 %v775
      %v789 = vpack.c.b16 %v782, %v781
      %v790 = vpack.c.b16 %v784, %v783
      %v791 = vpack.c.b16 %v786, %v785
      %v792 = vpack.c.b16 %v788, %v787
      %793 = vrot.lane.b32.xlu0 %v789, 107
      %v794 = vpop.permute.xlu0 %793
      %795 = vrot.lane.b32.xlu0 %v790, 107
      %v796 = vpop.permute.xlu0 %795
      %797 = vrot.lane.b32.xlu0 %v791, 107
      %v798 = vpop.permute.xlu0 %797
      %799 = vrot.lane.b32.xlu0 %v792, 107
      %v800 = vpop.permute.xlu0 %799
      %v801 = vrot.slane %v794, 4
      %v802 = vrot.slane %v796, 4
      %v803 = vrot.slane %v798, 4
      %v804 = vrot.slane %v800, 4
      %vm805 = vcmask 1043456
      %v806 = vsel %vm805, %v801, %v802
      %vm807 = vcmask 875520
      %v808 = vsel %vm807, %v794, %v806
      %v809 = vsel %vm807, %v796, %v802
      %v810 = vsel %vm805, %v803, %v804
      %v811 = vsel %vm807, %v798, %v810
      %v812 = vsel %vm807, %v800, %v804
      %817 = vst [vmem:[#allocation2] sm:$0xff] %v808
      %818 = vst [vmem:[#allocation2 + $0x8] sm:$0xf] %v809
      %819 = vst [vmem:[#allocation2 + $0xc] sm:$0xff] %v811
      %820 = vst [vmem:[#allocation2 + $0x14] sm:$0xf] %v812
      %821 = vrot.lane.b32.xlu0 %v789, 106
      %v822 = vpop.permute.xlu0 %821
      %823 = vrot.lane.b32.xlu0 %v790, 106
      %v824 = vpop.permute.xlu0 %823
      %825 = vrot.lane.b32.xlu0 %v791, 106
      %v826 = vpop.permute.xlu0 %825
      %827 = vrot.lane.b32.xlu0 %v792, 106
      %v828 = vpop.permute.xlu0 %827
      %v829 = vrot.slane %v822, 4
      %v830 = vrot.slane %v824, 4
      %v831 = vrot.slane %v826, 4
      %v832 = vrot.slane %v828, 4
      %v833 = vsel %vm805, %v829, %v830
      %vm834 = vcmask 867328
      %v835 = vsel %vm834, %v822, %v833
      %v836 = vsel %vm834, %v824, %v830
      %v837 = vsel %vm805, %v831, %v832
      %v838 = vsel %vm834, %v826, %v837
      %v839 = vsel %vm834, %v828, %v832
      %844 = vst [vmem:[#allocation2 + $0x18] sm:$0xff] %v835
      %845 = vst [vmem:[#allocation2 + $0x20] sm:$0xf] %v836
      %846 = vst [vmem:[#allocation2 + $0x24] sm:$0xff] %v838
      %847 = vst [vmem:[#allocation2 + $0x2c] sm:$0xf] %v839
      %848 = vrot.lane.b32.xlu0 %v789, 105
      %v849 = vpop.permute.xlu0 %848
      %850 = vrot.lane.b32.xlu0 %v790, 105
      %v851 = vpop.permute.xlu0 %850
      %852 = vrot.lane.b32.xlu0 %v791, 105
      %v853 = vpop.permute.xlu0 %852
      %854 = vrot.lane.b32.xlu0 %v792, 105
      %v855 = vpop.permute.xlu0 %854
      %v856 = vrot.slane %v849, 4
      %v857 = vrot.slane %v851, 4
      %v858 = vrot.slane %v853, 4
      %v859 = vrot.slane %v855, 4
      %v860 = vsel %vm805, %v856, %v857
      %vm861 = vcmask 859136
      %v862 = vsel %vm861, %v849, %v860
      %v863 = vsel %vm861, %v851, %v857
      %v864 = vsel %vm805, %v858, %v859
      %v865 = vsel %vm861, %v853, %v864
      %v866 = vsel %vm861, %v855, %v859
      %871 = vst [vmem:[#allocation2 + $0x30] sm:$0xff] %v862
      %872 = vst [vmem:[#allocation2 + $0x38] sm:$0xf] %v863
      %873 = vst [vmem:[#allocation2 + $0x3c] sm:$0xff] %v865
      %874 = vst [vmem:[#allocation2 + $0x44] sm:$0xf] %v866
      %875 = vrot.lane.b32.xlu0 %v789, 104
      %v876 = vpop.permute.xlu0 %875
      %877 = vrot.lane.b32.xlu0 %v790, 104
      %v878 = vpop.permute.xlu0 %877
      %879 = vrot.lane.b32.xlu0 %v791, 104
      %v880 = vpop.permute.xlu0 %879
      %881 = vrot.lane.b32.xlu0 %v792, 104
      %v882 = vpop.permute.xlu0 %881
      %v883 = vrot.slane %v876, 4
      %v884 = vrot.slane %v878, 4
      %v885 = vrot.slane %v880, 4
      %v886 = vrot.slane %v882, 4
      %v887 = vsel %vm805, %v883, %v884
      %vm888 = vcmask 850944
      %v889 = vsel %vm888, %v876, %v887
      %v890 = vsel %vm888, %v878, %v884
      %v891 = vsel %vm805, %v885, %v886
      %v892 = vsel %vm888, %v880, %v891
      %v893 = vsel %vm888, %v882, %v886
      %898 = vst [vmem:[#allocation2 + $0x48] sm:$0xff] %v889
      %899 = vst [vmem:[#allocation2 + $0x50] sm:$0xf] %v890
      %900 = vst [vmem:[#allocation2 + $0x54] sm:$0xff] %v892
      %901 = vst [vmem:[#allocation2 + $0x5c] sm:$0xf] %v893
      %902 = vrot.lane.b32.xlu0 %v789, 103
      %v903 = vpop.permute.xlu0 %902
      %904 = vrot.lane.b32.xlu0 %v790, 103
      %v905 = vpop.permute.xlu0 %904
      %906 = vrot.lane.b32.xlu0 %v791, 103
      %v907 = vpop.permute.xlu0 %906
      %908 = vrot.lane.b32.xlu0 %v792, 103
      %v909 = vpop.permute.xlu0 %908
      %v910 = vrot.slane %v903, 4
      %v911 = vrot.slane %v905, 4
      %v912 = vrot.slane %v907, 4
      %v913 = vrot.slane %v909, 4
      %v914 = vsel %vm805, %v910, %v911
      %vm915 = vcmask 842752
      %v916 = vsel %vm915, %v903, %v914
      %v917 = vsel %vm915, %v905, %v911
      %v918 = vsel %vm805, %v912, %v913
      %v919 = vsel %vm915, %v907, %v918
      %v920 = vsel %vm915, %v909, %v913
      %925 = vst [vmem:[#allocation2 + $0x60] sm:$0xff] %v916
      %926 = vst [vmem:[#allocation2 + $0x68] sm:$0xf] %v917
      %927 = vst [vmem:[#allocation2 + $0x6c] sm:$0xff] %v919
      %928 = vst [vmem:[#allocation2 + $0x74] sm:$0xf] %v920
      %929 = vrot.lane.b32.xlu0 %v789, 102
      %v930 = vpop.permute.xlu0 %929
      %931 = vrot.lane.b32.xlu0 %v790, 102
      %v932 = vpop.permute.xlu0 %931
      %933 = vrot.lane.b32.xlu0 %v791, 102
      %v934 = vpop.permute.xlu0 %933
      %935 = vrot.lane.b32.xlu0 %v792, 102
      %v936 = vpop.permute.xlu0 %935
      %v937 = vrot.slane %v930, 4
      %v938 = vrot.slane %v932, 4
      %v939 = vrot.slane %v934, 4
      %v940 = vrot.slane %v936, 4
      %v941 = vsel %vm805, %v937, %v938
      %vm942 = vcmask 834560
      %v943 = vsel %vm942, %v930, %v941
      %v944 = vsel %vm942, %v932, %v938
      %v945 = vsel %vm805, %v939, %v940
      %v946 = vsel %vm942, %v934, %v945
      %v947 = vsel %vm942, %v936, %v940
      %952 = vst [vmem:[#allocation2 + $0x78] sm:$0xff] %v943
      %953 = vst [vmem:[#allocation2 + $0x80] sm:$0xf] %v944
      %954 = vst [vmem:[#allocation2 + $0x84] sm:$0xff] %v946
      %955 = vst [vmem:[#allocation2 + $0x8c] sm:$0xf] %v947
      %956 = vrot.lane.b32.xlu0 %v789, 101
      %v957 = vpop.permute.xlu0 %956
      %958 = vrot.lane.b32.xlu0 %v790, 101
      %v959 = vpop.permute.xlu0 %958
      %960 = vrot.lane.b32.xlu0 %v791, 101
      %v961 = vpop.permute.xlu0 %960
      %962 = vrot.lane.b32.xlu0 %v792, 101
      %v963 = vpop.permute.xlu0 %962
      %v964 = vrot.slane %v957, 4
      %v965 = vrot.slane %v959, 4
      %v966 = vrot.slane %v961, 4
      %v967 = vrot.slane %v963, 4
      %v968 = vsel %vm805, %v964, %v965
      %vm969 = vcmask 826368
      %v970 = vsel %vm969, %v957, %v968
      %v971 = vsel %vm969, %v959, %v965
      %v972 = vsel %vm805, %v966, %v967
      %v973 = vsel %vm969, %v961, %v972
      %v974 = vsel %vm969, %v963, %v967
      %979 = vst [vmem:[#allocation2 + $0x90] sm:$0xff] %v970
      %980 = vst [vmem:[#allocation2 + $0x98] sm:$0xf] %v971
      %981 = vst [vmem:[#allocation2 + $0x9c] sm:$0xff] %v973
      %982 = vst [vmem:[#allocation2 + $0xa4] sm:$0xf] %v974
      %983 = vrot.lane.b32.xlu0 %v789, 83
      %v984 = vpop.permute.xlu0 %983
      %985 = vrot.lane.b32.xlu0 %v790, 83
      %v986 = vpop.permute.xlu0 %985
      %987 = vrot.lane.b32.xlu0 %v791, 83
      %v988 = vpop.permute.xlu0 %987
      %989 = vrot.lane.b32.xlu0 %v792, 83
      %v990 = vpop.permute.xlu0 %989
      %v991 = vrot.slane %v984, 4
      %v992 = vrot.slane %v986, 4
      %v993 = vrot.slane %v988, 4
      %v994 = vrot.slane %v990, 4
      %v995 = vsel %vm805, %v991, %v992
      %vm996 = vcmask 678912
      %v997 = vsel %vm996, %v984, %v995
      %v998 = vsel %vm996, %v986, %v992
      %v999 = vsel %vm805, %v993, %v994
      %v1000 = vsel %vm996, %v988, %v999
      %v1001 = vsel %vm996, %v990, %v994
      %1006 = vst [vmem:[#allocation2 + $0xa8] sm:$0xff] %v997
      %1007 = vst [vmem:[#allocation2 + $0xb0] sm:$0xf] %v998
      %1008 = vst [vmem:[#allocation2 + $0xb4] sm:$0xff] %v1000
      %1009 = vst [vmem:[#allocation2 + $0xbc] sm:$0xf] %v1001
      %1010 = vrot.lane.b32.xlu0 %v789, 82
      %v1011 = vpop.permute.xlu0 %1010
      %1012 = vrot.lane.b32.xlu0 %v790, 82
      %v1013 = vpop.permute.xlu0 %1012
      %1014 = vrot.lane.b32.xlu0 %v791, 82
      %v1015 = vpop.permute.xlu0 %1014
      %1016 = vrot.lane.b32.xlu0 %v792, 82
      %v1017 = vpop.permute.xlu0 %1016
      %v1018 = vrot.slane %v1011, 4
      %v1019 = vrot.slane %v1013, 4
      %v1020 = vrot.slane %v1015, 4
      %v1021 = vrot.slane %v1017, 4
      %v1022 = vsel %vm805, %v1018, %v1019
      %vm1023 = vcmask 670720
      %v1024 = vsel %vm1023, %v1011, %v1022
      %v1025 = vsel %vm1023, %v1013, %v1019
      %v1026 = vsel %vm805, %v1020, %v1021
      %v1027 = vsel %vm1023, %v1015, %v1026
      %v1028 = vsel %vm1023, %v1017, %v1021
      %1033 = vst [vmem:[#allocation2 + $0xc0] sm:$0xff] %v1024
      %1034 = vst [vmem:[#allocation2 + $0xc8] sm:$0xf] %v1025
      %1035 = vst [vmem:[#allocation2 + $0xcc] sm:$0xff] %v1027
      %1036 = vst [vmem:[#allocation2 + $0xd4] sm:$0xf] %v1028
      %1037 = vrot.lane.b32.xlu0 %v789, 81
      %v1038 = vpop.permute.xlu0 %1037
      %1039 = vrot.lane.b32.xlu0 %v790, 81
      %v1040 = vpop.permute.xlu0 %1039
      %1041 = vrot.lane.b32.xlu0 %v791, 81
      %v1042 = vpop.permute.xlu0 %1041
      %1043 = vrot.lane.b32.xlu0 %v792, 81
      %v1044 = vpop.permute.xlu0 %1043
      %v1045 = vrot.slane %v1038, 4
      %v1046 = vrot.slane %v1040, 4
      %v1047 = vrot.slane %v1042, 4
      %v1048 = vrot.slane %v1044, 4
      %v1049 = vsel %vm805, %v1045, %v1046
      %vm1050 = vcmask 662528
      %v1051 = vsel %vm1050, %v1038, %v1049
      %v1052 = vsel %vm1050, %v1040, %v1046
      %v1053 = vsel %vm805, %v1047, %v1048
      %v1054 = vsel %vm1050, %v1042, %v1053
      %v1055 = vsel %vm1050, %v1044, %v1048
      %1060 = vst [vmem:[#allocation2 + $0xd8] sm:$0xff] %v1051
      %1061 = vst [vmem:[#allocation2 + $0xe0] sm:$0xf] %v1052
      %1062 = vst [vmem:[#allocation2 + $0xe4] sm:$0xff] %v1054
      %1063 = vst [vmem:[#allocation2 + $0xec] sm:$0xf] %v1055
      %1064 = vrot.lane.b32.xlu0 %v789, 80
      %v1065 = vpop.permute.xlu0 %1064
      %1066 = vrot.lane.b32.xlu0 %v790, 80
      %v1067 = vpop.permute.xlu0 %1066
      %1068 = vrot.lane.b32.xlu0 %v791, 80
      %v1069 = vpop.permute.xlu0 %1068
      %1070 = vrot.lane.b32.xlu0 %v792, 80
      %v1071 = vpop.permute.xlu0 %1070
      %v1072 = vrot.slane %v1065, 4
      %v1073 = vrot.slane %v1067, 4
      %v1074 = vrot.slane %v1069, 4
      %v1075 = vrot.slane %v1071, 4
      %v1076 = vsel %vm805, %v1072, %v1073
      %vm1077 = vcmask 654336
      %v1078 = vsel %vm1077, %v1065, %v1076
      %v1079 = vsel %vm1077, %v1067, %v1073
      %v1080 = vsel %vm805, %v1074, %v1075
      %v1081 = vsel %vm1077, %v1069, %v1080
      %v1082 = vsel %vm1077, %v1071, %v1075
      %1087 = vst [vmem:[#allocation2 + $0xf0] sm:$0xff] %v1078
      %1088 = vst [vmem:[#allocation2 + $0xf8] sm:$0xf] %v1079
      %1089 = vst [vmem:[#allocation2 + $0xfc] sm:$0xff] %v1081
      %1090 = vst [vmem:[#allocation2 + $0x104] sm:$0xf] %v1082
      %1091 = vrot.lane.b32.xlu0 %v789, 79
      %v1092 = vpop.permute.xlu0 %1091
      %1093 = vrot.lane.b32.xlu0 %v790, 79
      %v1094 = vpop.permute.xlu0 %1093
      %1095 = vrot.lane.b32.xlu0 %v791, 79
      %v1096 = vpop.permute.xlu0 %1095
      %1097 = vrot.lane.b32.xlu0 %v792, 79
      %v1098 = vpop.permute.xlu0 %1097
      %v1099 = vrot.slane %v1092, 4
      %v1100 = vrot.slane %v1094, 4
      %v1101 = vrot.slane %v1096, 4
      %v1102 = vrot.slane %v1098, 4
      %v1103 = vsel %vm805, %v1099, %v1100
      %vm1104 = vcmask 646144
      %v1105 = vsel %vm1104, %v1092, %v1103
      %v1106 = vsel %vm1104, %v1094, %v1100
      %v1107 = vsel %vm805, %v1101, %v1102
      %v1108 = vsel %vm1104, %v1096, %v1107
      %v1109 = vsel %vm1104, %v1098, %v1102
      %1114 = vst [vmem:[#allocation2 + $0x108] sm:$0xff] %v1105
      %1115 = vst [vmem:[#allocation2 + $0x110] sm:$0xf] %v1106
      %1116 = vst [vmem:[#allocation2 + $0x114] sm:$0xff] %v1108
      %1117 = vst [vmem:[#allocation2 + $0x11c] sm:$0xf] %v1109
      %1118 = vrot.lane.b32.xlu0 %v789, 78
      %v1119 = vpop.permute.xlu0 %1118
      %1120 = vrot.lane.b32.xlu0 %v790, 78
      %v1121 = vpop.permute.xlu0 %1120
      %1122 = vrot.lane.b32.xlu0 %v791, 78
      %v1123 = vpop.permute.xlu0 %1122
      %1124 = vrot.lane.b32.xlu0 %v792, 78
      %v1125 = vpop.permute.xlu0 %1124
      %v1126 = vrot.slane %v1119, 4
      %v1127 = vrot.slane %v1121, 4
      %v1128 = vrot.slane %v1123, 4
      %v1129 = vrot.slane %v1125, 4
      %v1130 = vsel %vm805, %v1126, %v1127
      %vm1131 = vcmask 637952
      %v1132 = vsel %vm1131, %v1119, %v1130
      %v1133 = vsel %vm1131, %v1121, %v1127
      %v1134 = vsel %vm805, %v1128, %v1129
      %v1135 = vsel %vm1131, %v1123, %v1134
      %v1136 = vsel %vm1131, %v1125, %v1129
      %1141 = vst [vmem:[#allocation2 + $0x120] sm:$0xff] %v1132
      %1142 = vst [vmem:[#allocation2 + $0x128] sm:$0xf] %v1133
      %1143 = vst [vmem:[#allocation2 + $0x12c] sm:$0xff] %v1135
      %1144 = vst [vmem:[#allocation2 + $0x134] sm:$0xf] %v1136
      %1145 = vrot.lane.b32.xlu0 %v789, 77
      %v1146 = vpop.permute.xlu0 %1145
      %1147 = vrot.lane.b32.xlu0 %v790, 77
      %v1148 = vpop.permute.xlu0 %1147
      %1149 = vrot.lane.b32.xlu0 %v791, 77
      %v1150 = vpop.permute.xlu0 %1149
      %1151 = vrot.lane.b32.xlu0 %v792, 77
      %v1152 = vpop.permute.xlu0 %1151
      %v1153 = vrot.slane %v1146, 4
      %v1154 = vrot.slane %v1148, 4
      %v1155 = vrot.slane %v1150, 4
      %v1156 = vrot.slane %v1152, 4
      %v1157 = vsel %vm805, %v1153, %v1154
      %vm1158 = vcmask 629760
      %v1159 = vsel %vm1158, %v1146, %v1157
      %v1160 = vsel %vm1158, %v1148, %v1154
      %v1161 = vsel %vm805, %v1155, %v1156
      %v1162 = vsel %vm1158, %v1150, %v1161
      %v1163 = vsel %vm1158, %v1152, %v1156
      %1168 = vst [vmem:[#allocation2 + $0x138] sm:$0xff] %v1159
      %1169 = vst [vmem:[#allocation2 + $0x140] sm:$0xf] %v1160
      %1170 = vst [vmem:[#allocation2 + $0x144] sm:$0xff] %v1162
      %1171 = vst [vmem:[#allocation2 + $0x14c] sm:$0xf] %v1163
      %1172 = vrot.lane.b32.xlu0 %v789, 59
      %v1173 = vpop.permute.xlu0 %1172
      %1174 = vrot.lane.b32.xlu0 %v790, 59
      %v1175 = vpop.permute.xlu0 %1174
      %1176 = vrot.lane.b32.xlu0 %v791, 59
      %v1177 = vpop.permute.xlu0 %1176
      %1178 = vrot.lane.b32.xlu0 %v792, 59
      %v1179 = vpop.permute.xlu0 %1178
      %v1180 = vrot.slane %v1173, 4
      %v1181 = vrot.slane %v1175, 4
      %v1182 = vrot.slane %v1177, 4
      %v1183 = vrot.slane %v1179, 4
      %v1184 = vsel %vm805, %v1180, %v1181
      %vm1185 = vcmask 482304
      %v1186 = vsel %vm1185, %v1173, %v1184
      %v1187 = vsel %vm1185, %v1175, %v1181
      %v1188 = vsel %vm805, %v1182, %v1183
      %v1189 = vsel %vm1185, %v1177, %v1188
      %v1190 = vsel %vm1185, %v1179, %v1183
      %1195 = vst [vmem:[#allocation2 + $0x150] sm:$0xff] %v1186
      %1196 = vst [vmem:[#allocation2 + $0x158] sm:$0xf] %v1187
      %1197 = vst [vmem:[#allocation2 + $0x15c] sm:$0xff] %v1189
      %1198 = vst [vmem:[#allocation2 + $0x164] sm:$0xf] %v1190
      %1199 = vrot.lane.b32.xlu0 %v789, 58
      %v1200 = vpop.permute.xlu0 %1199
      %1201 = vrot.lane.b32.xlu0 %v790, 58
      %v1202 = vpop.permute.xlu0 %1201
      %1203 = vrot.lane.b32.xlu0 %v791, 58
      %v1204 = vpop.permute.xlu0 %1203
      %1205 = vrot.lane.b32.xlu0 %v792, 58
      %v1206 = vpop.permute.xlu0 %1205
      %v1207 = vrot.slane %v1200, 4
      %v1208 = vrot.slane %v1202, 4
      %v1209 = vrot.slane %v1204, 4
      %v1210 = vrot.slane %v1206, 4
      %v1211 = vsel %vm805, %v1207, %v1208
      %vm1212 = vcmask 474112
      %v1213 = vsel %vm1212, %v1200, %v1211
      %v1214 = vsel %vm1212, %v1202, %v1208
      %v1215 = vsel %vm805, %v1209, %v1210
      %v1216 = vsel %vm1212, %v1204, %v1215
      %v1217 = vsel %vm1212, %v1206, %v1210
      %1222 = vst [vmem:[#allocation2 + $0x168] sm:$0xff] %v1213
      %1223 = vst [vmem:[#allocation2 + $0x170] sm:$0xf] %v1214
      %1224 = vst [vmem:[#allocation2 + $0x174] sm:$0xff] %v1216
      %1225 = vst [vmem:[#allocation2 + $0x17c] sm:$0xf] %v1217
      %1226 = vrot.lane.b32.xlu0 %v789, 57
      %v1227 = vpop.permute.xlu0 %1226
      %1228 = vrot.lane.b32.xlu0 %v790, 57
      %v1229 = vpop.permute.xlu0 %1228
      %1230 = vrot.lane.b32.xlu0 %v791, 57
      %v1231 = vpop.permute.xlu0 %1230
      %1232 = vrot.lane.b32.xlu0 %v792, 57
      %v1233 = vpop.permute.xlu0 %1232
      %v1234 = vrot.slane %v1227, 4
      %v1235 = vrot.slane %v1229, 4
      %v1236 = vrot.slane %v1231, 4
      %v1237 = vrot.slane %v1233, 4
      %v1238 = vsel %vm805, %v1234, %v1235
      %vm1239 = vcmask 465920
      %v1240 = vsel %vm1239, %v1227, %v1238
      %v1241 = vsel %vm1239, %v1229, %v1235
      %v1242 = vsel %vm805, %v1236, %v1237
      %v1243 = vsel %vm1239, %v1231, %v1242
      %v1244 = vsel %vm1239, %v1233, %v1237
      %1249 = vst [vmem:[#allocation2 + $0x180] sm:$0xff] %v1240
      %1250 = vst [vmem:[#allocation2 + $0x188] sm:$0xf] %v1241
      %1251 = vst [vmem:[#allocation2 + $0x18c] sm:$0xff] %v1243
      %1252 = vst [vmem:[#allocation2 + $0x194] sm:$0xf] %v1244
      %1253 = vrot.lane.b32.xlu0 %v789, 56
      %v1254 = vpop.permute.xlu0 %1253
      %1255 = vrot.lane.b32.xlu0 %v790, 56
      %v1256 = vpop.permute.xlu0 %1255
      %1257 = vrot.lane.b32.xlu0 %v791, 56
      %v1258 = vpop.permute.xlu0 %1257
      %1259 = vrot.lane.b32.xlu0 %v792, 56
      %v1260 = vpop.permute.xlu0 %1259
      %v1261 = vrot.slane %v1254, 4
      %v1262 = vrot.slane %v1256, 4
      %v1263 = vrot.slane %v1258, 4
      %v1264 = vrot.slane %v1260, 4
      %v1265 = vsel %vm805, %v1261, %v1262
      %vm1266 = vcmask 457728
      %v1267 = vsel %vm1266, %v1254, %v1265
      %v1268 = vsel %vm1266, %v1256, %v1262
      %v1269 = vsel %vm805, %v1263, %v1264
      %v1270 = vsel %vm1266, %v1258, %v1269
      %v1271 = vsel %vm1266, %v1260, %v1264
      %1276 = vst [vmem:[#allocation2 + $0x198] sm:$0xff] %v1267
      %1277 = vst [vmem:[#allocation2 + $0x1a0] sm:$0xf] %v1268
      %1278 = vst [vmem:[#allocation2 + $0x1a4] sm:$0xff] %v1270
      %1279 = vst [vmem:[#allocation2 + $0x1ac] sm:$0xf] %v1271
      %1280 = vrot.lane.b32.xlu0 %v789, 55
      %v1281 = vpop.permute.xlu0 %1280
      %1282 = vrot.lane.b32.xlu0 %v790, 55
      %v1283 = vpop.permute.xlu0 %1282
      %1284 = vrot.lane.b32.xlu0 %v791, 55
      %v1285 = vpop.permute.xlu0 %1284
      %1286 = vrot.lane.b32.xlu0 %v792, 55
      %v1287 = vpop.permute.xlu0 %1286
      %v1288 = vrot.slane %v1281, 4
      %v1289 = vrot.slane %v1283, 4
      %v1290 = vrot.slane %v1285, 4
      %v1291 = vrot.slane %v1287, 4
      %v1292 = vsel %vm805, %v1288, %v1289
      %vm1293 = vcmask 449536
      %v1294 = vsel %vm1293, %v1281, %v1292
      %v1295 = vsel %vm1293, %v1283, %v1289
      %v1296 = vsel %vm805, %v1290, %v1291
      %v1297 = vsel %vm1293, %v1285, %v1296
      %v1298 = vsel %vm1293, %v1287, %v1291
      %1303 = vst [vmem:[#allocation2 + $0x1b0] sm:$0xff] %v1294
      %1304 = vst [vmem:[#allocation2 + $0x1b8] sm:$0xf] %v1295
      %1305 = vst [vmem:[#allocation2 + $0x1bc] sm:$0xff] %v1297
      %1306 = vst [vmem:[#allocation2 + $0x1c4] sm:$0xf] %v1298
      %1307 = vrot.lane.b32.xlu0 %v789, 54
      %v1308 = vpop.permute.xlu0 %1307
      %1309 = vrot.lane.b32.xlu0 %v790, 54
      %v1310 = vpop.permute.xlu0 %1309
      %1311 = vrot.lane.b32.xlu0 %v791, 54
      %v1312 = vpop.permute.xlu0 %1311
      %1313 = vrot.lane.b32.xlu0 %v792, 54
      %v1314 = vpop.permute.xlu0 %1313
      %v1315 = vrot.slane %v1308, 4
      %v1316 = vrot.slane %v1310, 4
      %v1317 = vrot.slane %v1312, 4
      %v1318 = vrot.slane %v1314, 4
      %v1319 = vsel %vm805, %v1315, %v1316
      %vm1320 = vcmask 441344
      %v1321 = vsel %vm1320, %v1308, %v1319
      %v1322 = vsel %vm1320, %v1310, %v1316
      %v1323 = vsel %vm805, %v1317, %v1318
      %v1324 = vsel %vm1320, %v1312, %v1323
      %v1325 = vsel %vm1320, %v1314, %v1318
      %1330 = vst [vmem:[#allocation2 + $0x1c8] sm:$0xff] %v1321
      %1331 = vst [vmem:[#allocation2 + $0x1d0] sm:$0xf] %v1322
      %1332 = vst [vmem:[#allocation2 + $0x1d4] sm:$0xff] %v1324
      %1333 = vst [vmem:[#allocation2 + $0x1dc] sm:$0xf] %v1325
      %1334 = vrot.lane.b32.xlu0 %v789, 53
      %v1335 = vpop.permute.xlu0 %1334
      %1336 = vrot.lane.b32.xlu0 %v790, 53
      %v1337 = vpop.permute.xlu0 %1336
      %1338 = vrot.lane.b32.xlu0 %v791, 53
      %v1339 = vpop.permute.xlu0 %1338
      %1340 = vrot.lane.b32.xlu0 %v792, 53
      %v1341 = vpop.permute.xlu0 %1340
      %v1342 = vrot.slane %v1335, 4
      %v1343 = vrot.slane %v1337, 4
      %v1344 = vrot.slane %v1339, 4
      %v1345 = vrot.slane %v1341, 4
      %v1346 = vsel %vm805, %v1342, %v1343
      %vm1347 = vcmask 433152
      %v1348 = vsel %vm1347, %v1335, %v1346
      %v1349 = vsel %vm1347, %v1337, %v1343
      %v1350 = vsel %vm805, %v1344, %v1345
      %v1351 = vsel %vm1347, %v1339, %v1350
      %v1352 = vsel %vm1347, %v1341, %v1345
      %1357 = vst [vmem:[#allocation2 + $0x1e0] sm:$0xff] %v1348
      %1358 = vst [vmem:[#allocation2 + $0x1e8] sm:$0xf] %v1349
      %1359 = vst [vmem:[#allocation2 + $0x1ec] sm:$0xff] %v1351
      %1360 = vst [vmem:[#allocation2 + $0x1f4] sm:$0xf] %v1352
      %1361 = vrot.lane.b32.xlu0 %v789, 35
      %v1362 = vpop.permute.xlu0 %1361
      %1363 = vrot.lane.b32.xlu0 %v790, 35
      %v1364 = vpop.permute.xlu0 %1363
      %1365 = vrot.lane.b32.xlu0 %v791, 35
      %v1366 = vpop.permute.xlu0 %1365
      %1367 = vrot.lane.b32.xlu0 %v792, 35
      %v1368 = vpop.permute.xlu0 %1367
      %v1369 = vrot.slane %v1362, 4
      %v1370 = vrot.slane %v1364, 4
      %v1371 = vrot.slane %v1366, 4
      %v1372 = vrot.slane %v1368, 4
      %v1373 = vsel %vm805, %v1369, %v1370
      %vm1374 = vcmask 285696
      %v1375 = vsel %vm1374, %v1362, %v1373
      %v1376 = vsel %vm1374, %v1364, %v1370
      %v1377 = vsel %vm805, %v1371, %v1372
      %v1378 = vsel %vm1374, %v1366, %v1377
      %v1379 = vsel %vm1374, %v1368, %v1372
      %1384 = vst [vmem:[#allocation2 + $0x1f8] sm:$0xff] %v1375
      %1385 = vst [vmem:[#allocation2 + $0x200] sm:$0xf] %v1376
      %1386 = vst [vmem:[#allocation2 + $0x204] sm:$0xff] %v1378
      %1387 = vst [vmem:[#allocation2 + $0x20c] sm:$0xf] %v1379
      %1388 = vrot.lane.b32.xlu0 %v789, 34
      %v1389 = vpop.permute.xlu0 %1388
      %1390 = vrot.lane.b32.xlu0 %v790, 34
      %v1391 = vpop.permute.xlu0 %1390
      %1392 = vrot.lane.b32.xlu0 %v791, 34
      %v1393 = vpop.permute.xlu0 %1392
      %1394 = vrot.lane.b32.xlu0 %v792, 34
      %v1395 = vpop.permute.xlu0 %1394
      %v1396 = vrot.slane %v1389, 4
      %v1397 = vrot.slane %v1391, 4
      %v1398 = vrot.slane %v1393, 4
      %v1399 = vrot.slane %v1395, 4
      %v1400 = vsel %vm805, %v1396, %v1397
      %vm1401 = vcmask 277504
      %v1402 = vsel %vm1401, %v1389, %v1400
      %v1403 = vsel %vm1401, %v1391, %v1397
      %v1404 = vsel %vm805, %v1398, %v1399
      %v1405 = vsel %vm1401, %v1393, %v1404
      %v1406 = vsel %vm1401, %v1395, %v1399
      %1411 = vst [vmem:[#allocation2 + $0x210] sm:$0xff] %v1402
      %1412 = vst [vmem:[#allocation2 + $0x218] sm:$0xf] %v1403
      %1413 = vst [vmem:[#allocation2 + $0x21c] sm:$0xff] %v1405
      %1414 = vst [vmem:[#allocation2 + $0x224] sm:$0xf] %v1406
      %1415 = vrot.lane.b32.xlu0 %v789, 33
      %v1416 = vpop.permute.xlu0 %1415
      %1417 = vrot.lane.b32.xlu0 %v790, 33
      %v1418 = vpop.permute.xlu0 %1417
      %1419 = vrot.lane.b32.xlu0 %v791, 33
      %v1420 = vpop.permute.xlu0 %1419
      %1421 = vrot.lane.b32.xlu0 %v792, 33
      %v1422 = vpop.permute.xlu0 %1421
      %v1423 = vrot.slane %v1416, 4
      %v1424 = vrot.slane %v1418, 4
      %v1425 = vrot.slane %v1420, 4
      %v1426 = vrot.slane %v1422, 4
      %v1427 = vsel %vm805, %v1423, %v1424
      %vm1428 = vcmask 269312
      %v1429 = vsel %vm1428, %v1416, %v1427
      %v1430 = vsel %vm1428, %v1418, %v1424
      %v1431 = vsel %vm805, %v1425, %v1426
      %v1432 = vsel %vm1428, %v1420, %v1431
      %v1433 = vsel %vm1428, %v1422, %v1426
      %1438 = vst [vmem:[#allocation2 + $0x228] sm:$0xff] %v1429
      %1439 = vst [vmem:[#allocation2 + $0x230] sm:$0xf] %v1430
      %1440 = vst [vmem:[#allocation2 + $0x234] sm:$0xff] %v1432
      %1441 = vst [vmem:[#allocation2 + $0x23c] sm:$0xf] %v1433
      %1442 = vrot.lane.b32.xlu0 %v789, 32
      %v1443 = vpop.permute.xlu0 %1442
      %1444 = vrot.lane.b32.xlu0 %v790, 32
      %v1445 = vpop.permute.xlu0 %1444
      %1446 = vrot.lane.b32.xlu0 %v791, 32
      %v1447 = vpop.permute.xlu0 %1446
      %1448 = vrot.lane.b32.xlu0 %v792, 32
      %v1449 = vpop.permute.xlu0 %1448
      %v1450 = vrot.slane %v1443, 4
      %v1451 = vrot.slane %v1445, 4
      %v1452 = vrot.slane %v1447, 4
      %v1453 = vrot.slane %v1449, 4
      %v1454 = vsel %vm805, %v1450, %v1451
      %vm1455 = vcmask 261120
      %v1456 = vsel %vm1455, %v1443, %v1454
      %v1457 = vsel %vm1455, %v1445, %v1451
      %v1458 = vsel %vm805, %v1452, %v1453
      %v1459 = vsel %vm1455, %v1447, %v1458
      %v1460 = vsel %vm1455, %v1449, %v1453
      %1465 = vst [vmem:[#allocation2 + $0x240] sm:$0xff] %v1456
      %1466 = vst [vmem:[#allocation2 + $0x248] sm:$0xf] %v1457
      %1467 = vst [vmem:[#allocation2 + $0x24c] sm:$0xff] %v1459
      %1468 = vst [vmem:[#allocation2 + $0x254] sm:$0xf] %v1460
      %1469 = vrot.lane.b32.xlu0 %v789, 31
      %v1470 = vpop.permute.xlu0 %1469
      %1471 = vrot.lane.b32.xlu0 %v790, 31
      %v1472 = vpop.permute.xlu0 %1471
      %1473 = vrot.lane.b32.xlu0 %v791, 31
      %v1474 = vpop.permute.xlu0 %1473
      %1475 = vrot.lane.b32.xlu0 %v792, 31
      %v1476 = vpop.permute.xlu0 %1475
      %v1477 = vrot.slane %v1470, 4
      %v1478 = vrot.slane %v1472, 4
      %v1479 = vrot.slane %v1474, 4
      %v1480 = vrot.slane %v1476, 4
      %v1481 = vsel %vm805, %v1477, %v1478
      %vm1482 = vcmask 252928
      %v1483 = vsel %vm1482, %v1470, %v1481
      %v1484 = vsel %vm1482, %v1472, %v1478
      %v1485 = vsel %vm805, %v1479, %v1480
      %v1486 = vsel %vm1482, %v1474, %v1485
      %v1487 = vsel %vm1482, %v1476, %v1480
      %1492 = vst [vmem:[#allocation2 + $0x258] sm:$0xff] %v1483
      %1493 = vst [vmem:[#allocation2 + $0x260] sm:$0xf] %v1484
      %1494 = vst [vmem:[#allocation2 + $0x264] sm:$0xff] %v1486
      %1495 = vst [vmem:[#allocation2 + $0x26c] sm:$0xf] %v1487
      %1496 = vrot.lane.b32.xlu0 %v789, 30
      %v1497 = vpop.permute.xlu0 %1496
      %1498 = vrot.lane.b32.xlu0 %v790, 30
      %v1499 = vpop.permute.xlu0 %1498
      %1500 = vrot.lane.b32.xlu0 %v791, 30
      %v1501 = vpop.permute.xlu0 %1500
      %1502 = vrot.lane.b32.xlu0 %v792, 30
      %v1503 = vpop.permute.xlu0 %1502
      %v1504 = vrot.slane %v1497, 4
      %v1505 = vrot.slane %v1499, 4
      %v1506 = vrot.slane %v1501, 4
      %v1507 = vrot.slane %v1503, 4
      %v1508 = vsel %vm805, %v1504, %v1505
      %vm1509 = vcmask 244736
      %v1510 = vsel %vm1509, %v1497, %v1508
      %v1511 = vsel %vm1509, %v1499, %v1505
      %v1512 = vsel %vm805, %v1506, %v1507
      %v1513 = vsel %vm1509, %v1501, %v1512
      %v1514 = vsel %vm1509, %v1503, %v1507
      %1519 = vst [vmem:[#allocation2 + $0x270] sm:$0xff] %v1510
      %1520 = vst [vmem:[#allocation2 + $0x278] sm:$0xf] %v1511
      %1521 = vst [vmem:[#allocation2 + $0x27c] sm:$0xff] %v1513
      %1522 = vst [vmem:[#allocation2 + $0x284] sm:$0xf] %v1514
      %1523 = vrot.lane.b32.xlu0 %v789, 29
      %v1524 = vpop.permute.xlu0 %1523
      %1525 = vrot.lane.b32.xlu0 %v790, 29
      %v1526 = vpop.permute.xlu0 %1525
      %1527 = vrot.lane.b32.xlu0 %v791, 29
      %v1528 = vpop.permute.xlu0 %1527
      %1529 = vrot.lane.b32.xlu0 %v792, 29
      %v1530 = vpop.permute.xlu0 %1529
      %v1531 = vrot.slane %v1524, 4
      %v1532 = vrot.slane %v1526, 4
      %v1533 = vrot.slane %v1528, 4
      %v1534 = vrot.slane %v1530, 4
      %v1535 = vsel %vm805, %v1531, %v1532
      %vm1536 = vcmask 236544
      %v1537 = vsel %vm1536, %v1524, %v1535
      %v1538 = vsel %vm1536, %v1526, %v1532
      %v1539 = vsel %vm805, %v1533, %v1534
      %v1540 = vsel %vm1536, %v1528, %v1539
      %v1541 = vsel %vm1536, %v1530, %v1534
      %1546 = vst [vmem:[#allocation2 + $0x288] sm:$0xff] %v1537
      %1547 = vst [vmem:[#allocation2 + $0x290] sm:$0xf] %v1538
      %1548 = vst [vmem:[#allocation2 + $0x294] sm:$0xff] %v1540
      %1549 = vst [vmem:[#allocation2 + $0x29c] sm:$0xf] %v1541
      %1550 = vrot.lane.b32.xlu0 %v789, 11
      %v1551 = vpop.permute.xlu0 %1550
      %1552 = vrot.lane.b32.xlu0 %v790, 11
      %v1553 = vpop.permute.xlu0 %1552
      %1554 = vrot.lane.b32.xlu0 %v791, 11
      %v1555 = vpop.permute.xlu0 %1554
      %1556 = vrot.lane.b32.xlu0 %v792, 11
      %v1557 = vpop.permute.xlu0 %1556
      %v1558 = vrot.slane %v1551, 4
      %v1559 = vrot.slane %v1553, 4
      %v1560 = vrot.slane %v1555, 4
      %v1561 = vrot.slane %v1557, 4
      %v1562 = vsel %vm805, %v1558, %v1559
      %vm1563 = vcmask 89088
      %v1564 = vsel %vm1563, %v1551, %v1562
      %v1565 = vsel %vm1563, %v1553, %v1559
      %v1566 = vsel %vm805, %v1560, %v1561
      %v1567 = vsel %vm1563, %v1555, %v1566
      %v1568 = vsel %vm1563, %v1557, %v1561
      %1573 = vst [vmem:[#allocation2 + $0x2a0] sm:$0xff] %v1564
      %1574 = vst [vmem:[#allocation2 + $0x2a8] sm:$0xf] %v1565
      %1575 = vst [vmem:[#allocation2 + $0x2ac] sm:$0xff] %v1567
      %1576 = vst [vmem:[#allocation2 + $0x2b4] sm:$0xf] %v1568
      %1577 = vrot.lane.b32.xlu0 %v789, 10
      %v1578 = vpop.permute.xlu0 %1577
      %1579 = vrot.lane.b32.xlu0 %v790, 10
      %v1580 = vpop.permute.xlu0 %1579
      %1581 = vrot.lane.b32.xlu0 %v791, 10
      %v1582 = vpop.permute.xlu0 %1581
      %1583 = vrot.lane.b32.xlu0 %v792, 10
      %v1584 = vpop.permute.xlu0 %1583
      %v1585 = vrot.slane %v1578, 4
      %v1586 = vrot.slane %v1580, 4
      %v1587 = vrot.slane %v1582, 4
      %v1588 = vrot.slane %v1584, 4
      %v1589 = vsel %vm805, %v1585, %v1586
      %vm1590 = vcmask 80896
      %v1591 = vsel %vm1590, %v1578, %v1589
      %v1592 = vsel %vm1590, %v1580, %v1586
      %v1593 = vsel %vm805, %v1587, %v1588
      %v1594 = vsel %vm1590, %v1582, %v1593
      %v1595 = vsel %vm1590, %v1584, %v1588
      %1600 = vst [vmem:[#allocation2 + $0x2b8] sm:$0xff] %v1591
      %1601 = vst [vmem:[#allocation2 + $0x2c0] sm:$0xf] %v1592
      %1602 = vst [vmem:[#allocation2 + $0x2c4] sm:$0xff] %v1594
      %1603 = vst [vmem:[#allocation2 + $0x2cc] sm:$0xf] %v1595
      %1604 = vrot.lane.b32.xlu0 %v789, 9
      %v1605 = vpop.permute.xlu0 %1604
      %1606 = vrot.lane.b32.xlu0 %v790, 9
      %v1607 = vpop.permute.xlu0 %1606
      %1608 = vrot.lane.b32.xlu0 %v791, 9
      %v1609 = vpop.permute.xlu0 %1608
      %1610 = vrot.lane.b32.xlu0 %v792, 9
      %v1611 = vpop.permute.xlu0 %1610
      %v1612 = vrot.slane %v1605, 4
      %v1613 = vrot.slane %v1607, 4
      %v1614 = vrot.slane %v1609, 4
      %v1615 = vrot.slane %v1611, 4
      %v1616 = vsel %vm805, %v1612, %v1613
      %vm1617 = vcmask 72704
      %v1618 = vsel %vm1617, %v1605, %v1616
      %v1619 = vsel %vm1617, %v1607, %v1613
      %v1620 = vsel %vm805, %v1614, %v1615
      %v1621 = vsel %vm1617, %v1609, %v1620
      %v1622 = vsel %vm1617, %v1611, %v1615
      %1627 = vst [vmem:[#allocation2 + $0x2d0] sm:$0xff] %v1618
      %1628 = vst [vmem:[#allocation2 + $0x2d8] sm:$0xf] %v1619
      %1629 = vst [vmem:[#allocation2 + $0x2dc] sm:$0xff] %v1621
      %1630 = vst [vmem:[#allocation2 + $0x2e4] sm:$0xf] %v1622
      %1631 = vrot.lane.b32.xlu0 %v789, 8
      %v1632 = vpop.permute.xlu0 %1631
      %1633 = vrot.lane.b32.xlu0 %v790, 8
      %v1634 = vpop.permute.xlu0 %1633
      %1635 = vrot.lane.b32.xlu0 %v791, 8
      %v1636 = vpop.permute.xlu0 %1635
      %1637 = vrot.lane.b32.xlu0 %v792, 8
      %v1638 = vpop.permute.xlu0 %1637
      %v1639 = vrot.slane %v1632, 4
      %v1640 = vrot.slane %v1634, 4
      %v1641 = vrot.slane %v1636, 4
      %v1642 = vrot.slane %v1638, 4
      %v1643 = vsel %vm805, %v1639, %v1640
      %vm1644 = vcmask 64512
      %v1645 = vsel %vm1644, %v1632, %v1643
      %v1646 = vsel %vm1644, %v1634, %v1640
      %v1647 = vsel %vm805, %v1641, %v1642
      %v1648 = vsel %vm1644, %v1636, %v1647
      %v1649 = vsel %vm1644, %v1638, %v1642
      %1654 = vst [vmem:[#allocation2 + $0x2e8] sm:$0xff] %v1645
      %1655 = vst [vmem:[#allocation2 + $0x2f0] sm:$0xf] %v1646
      %1656 = vst [vmem:[#allocation2 + $0x2f4] sm:$0xff] %v1648
      %1657 = vst [vmem:[#allocation2 + $0x2fc] sm:$0xf] %v1649
      %1658 = vrot.lane.b32.xlu0 %v789, 7
      %v1659 = vpop.permute.xlu0 %1658
      %1660 = vrot.lane.b32.xlu0 %v790, 7
      %v1661 = vpop.permute.xlu0 %1660
      %1662 = vrot.lane.b32.xlu0 %v791, 7
      %v1663 = vpop.permute.xlu0 %1662
      %1664 = vrot.lane.b32.xlu0 %v792, 7
      %v1665 = vpop.permute.xlu0 %1664
      %v1666 = vrot.slane %v1659, 4
      %v1667 = vrot.slane %v1661, 4
      %v1668 = vrot.slane %v1663, 4
      %v1669 = vrot.slane %v1665, 4
      %v1670 = vsel %vm805, %v1666, %v1667
      %vm1671 = vcmask 56320
      %v1672 = vsel %vm1671, %v1659, %v1670
      %v1673 = vsel %vm1671, %v1661, %v1667
      %v1674 = vsel %vm805, %v1668, %v1669
      %v1675 = vsel %vm1671, %v1663, %v1674
      %v1676 = vsel %vm1671, %v1665, %v1669
      %1681 = vst [vmem:[#allocation2 + $0x300] sm:$0xff] %v1672
      %1682 = vst [vmem:[#allocation2 + $0x308] sm:$0xf] %v1673
      %1683 = vst [vmem:[#allocation2 + $0x30c] sm:$0xff] %v1675
      %1684 = vst [vmem:[#allocation2 + $0x314] sm:$0xf] %v1676
      %1685 = vrot.lane.b32.xlu0 %v789, 6
      %v1686 = vpop.permute.xlu0 %1685
      %1687 = vrot.lane.b32.xlu0 %v790, 6
      %v1688 = vpop.permute.xlu0 %1687
      %1689 = vrot.lane.b32.xlu0 %v791, 6
      %v1690 = vpop.permute.xlu0 %1689
      %1691 = vrot.lane.b32.xlu0 %v792, 6
      %v1692 = vpop.permute.xlu0 %1691
      %v1693 = vrot.slane %v1686, 4
      %v1694 = vrot.slane %v1688, 4
      %v1695 = vrot.slane %v1690, 4
      %v1696 = vrot.slane %v1692, 4
      %v1697 = vsel %vm805, %v1693, %v1694
      %vm1698 = vcmask 48128
      %v1699 = vsel %vm1698, %v1686, %v1697
      %v1700 = vsel %vm1698, %v1688, %v1694
      %v1701 = vsel %vm805, %v1695, %v1696
      %v1702 = vsel %vm1698, %v1690, %v1701
      %v1703 = vsel %vm1698, %v1692, %v1696
      %1708 = vst [vmem:[#allocation2 + $0x318] sm:$0xff] %v1699
      %1709 = vst [vmem:[#allocation2 + $0x320] sm:$0xf] %v1700
      %1710 = vst [vmem:[#allocation2 + $0x324] sm:$0xff] %v1702
      %1711 = vst [vmem:[#allocation2 + $0x32c] sm:$0xf] %v1703
      %1712 = vrot.lane.b32.xlu0 %v789, 5
      %v1713 = vpop.permute.xlu0 %1712
      %1714 = vrot.lane.b32.xlu0 %v790, 5
      %v1715 = vpop.permute.xlu0 %1714
      %1716 = vrot.lane.b32.xlu0 %v791, 5
      %v1717 = vpop.permute.xlu0 %1716
      %1718 = vrot.lane.b32.xlu0 %v792, 5
      %v1719 = vpop.permute.xlu0 %1718
      %v1720 = vrot.slane %v1713, 4
      %v1721 = vrot.slane %v1715, 4
      %v1722 = vrot.slane %v1717, 4
      %v1723 = vrot.slane %v1719, 4
      %v1724 = vsel %vm805, %v1720, %v1721
      %vm1725 = vcmask 39936
      %v1726 = vsel %vm1725, %v1713, %v1724
      %v1727 = vsel %vm1725, %v1715, %v1721
      %v1728 = vsel %vm805, %v1722, %v1723
      %v1729 = vsel %vm1725, %v1717, %v1728
      %v1730 = vsel %vm1725, %v1719, %v1723
      %1735 = vst [vmem:[#allocation2 + $0x330] sm:$0xff] %v1726
      %1736 = vst [vmem:[#allocation2 + $0x338] sm:$0xf] %v1727
      %1737 = vst [vmem:[#allocation2 + $0x33c] sm:$0xff] %v1729
      %1738 = vst [vmem:[#allocation2 + $0x344] sm:$0xf] %v1730
      %v1740 = vunpack.c.l.b16 %v776
      %v1741 = vunpack.c.h.b16 %v776
      %v1742 = vpack.c.b16 %v783, %v782
      %v1743 = vpack.c.b16 %v1740, %v784
      %v1744 = vpack.c.b16 %v787, %v786
      %v1745 = vpack.c.b16 %v1741, %v788
      %1746 = vrot.lane.b32.xlu0 %v1742, 115
      %v1747 = vpop.permute.xlu0 %1746
      %1748 = vrot.lane.b32.xlu0 %v1743, 115
      %v1749 = vpop.permute.xlu0 %1748
      %1750 = vrot.lane.b32.xlu0 %v1744, 115
      %v1751 = vpop.permute.xlu0 %1750
      %1752 = vrot.lane.b32.xlu0 %v1745, 115
      %v1753 = vpop.permute.xlu0 %1752
      %v1754 = vrot.slane %v1747, 4
      %v1755 = vrot.slane %v1749, 4
      %v1756 = vrot.slane %v1751, 4
      %v1757 = vrot.slane %v1753, 4
      %v1758 = vsel %vm805, %v1754, %v1755
      %vm1759 = vcmask 941056
      %v1760 = vsel %vm1759, %v1747, %v1758
      %v1761 = vsel %vm1759, %v1749, %v1755
      %v1762 = vsel %vm805, %v1756, %v1757
      %v1763 = vsel %vm1759, %v1751, %v1762
      %v1764 = vsel %vm1759, %v1753, %v1757
      %1769 = vst [vmem:[#allocation2 + $0x348] sm:$0xff] %v1760
      %1770 = vst [vmem:[#allocation2 + $0x350] sm:$0xf] %v1761
      %1771 = vst [vmem:[#allocation2 + $0x354] sm:$0xff] %v1763
      %1772 = vst [vmem:[#allocation2 + $0x35c] sm:$0xf] %v1764
      %1773 = vrot.lane.b32.xlu0 %v1742, 114
      %v1774 = vpop.permute.xlu0 %1773
      %1775 = vrot.lane.b32.xlu0 %v1743, 114
      %v1776 = vpop.permute.xlu0 %1775
      %1777 = vrot.lane.b32.xlu0 %v1744, 114
      %v1778 = vpop.permute.xlu0 %1777
      %1779 = vrot.lane.b32.xlu0 %v1745, 114
      %v1780 = vpop.permute.xlu0 %1779
      %v1781 = vrot.slane %v1774, 4
      %v1782 = vrot.slane %v1776, 4
      %v1783 = vrot.slane %v1778, 4
      %v1784 = vrot.slane %v1780, 4
      %v1785 = vsel %vm805, %v1781, %v1782
      %vm1786 = vcmask 932864
      %v1787 = vsel %vm1786, %v1774, %v1785
      %v1788 = vsel %vm1786, %v1776, %v1782
      %v1789 = vsel %vm805, %v1783, %v1784
      %v1790 = vsel %vm1786, %v1778, %v1789
      %v1791 = vsel %vm1786, %v1780, %v1784
      %1796 = vst [vmem:[#allocation2 + $0x360] sm:$0xff] %v1787
      %1797 = vst [vmem:[#allocation2 + $0x368] sm:$0xf] %v1788
      %1798 = vst [vmem:[#allocation2 + $0x36c] sm:$0xff] %v1790
      %1799 = vst [vmem:[#allocation2 + $0x374] sm:$0xf] %v1791
      %1800 = vrot.lane.b32.xlu0 %v1742, 113
      %v1801 = vpop.permute.xlu0 %1800
      %1802 = vrot.lane.b32.xlu0 %v1743, 113
      %v1803 = vpop.permute.xlu0 %1802
      %1804 = vrot.lane.b32.xlu0 %v1744, 113
      %v1805 = vpop.permute.xlu0 %1804
      %1806 = vrot.lane.b32.xlu0 %v1745, 113
      %v1807 = vpop.permute.xlu0 %1806
      %v1808 = vrot.slane %v1801, 4
      %v1809 = vrot.slane %v1803, 4
      %v1810 = vrot.slane %v1805, 4
      %v1811 = vrot.slane %v1807, 4
      %v1812 = vsel %vm805, %v1808, %v1809
      %vm1813 = vcmask 924672
      %v1814 = vsel %vm1813, %v1801, %v1812
      %v1815 = vsel %vm1813, %v1803, %v1809
      %v1816 = vsel %vm805, %v1810, %v1811
      %v1817 = vsel %vm1813, %v1805, %v1816
      %v1818 = vsel %vm1813, %v1807, %v1811
      %1823 = vst [vmem:[#allocation2 + $0x378] sm:$0xff] %v1814
      %1824 = vst [vmem:[#allocation2 + $0x380] sm:$0xf] %v1815
      %1825 = vst [vmem:[#allocation2 + $0x384] sm:$0xff] %v1817
      %1826 = vst [vmem:[#allocation2 + $0x38c] sm:$0xf] %v1818
      %1827 = vrot.lane.b32.xlu0 %v1742, 112
      %v1828 = vpop.permute.xlu0 %1827
      %1829 = vrot.lane.b32.xlu0 %v1743, 112
      %v1830 = vpop.permute.xlu0 %1829
      %1831 = vrot.lane.b32.xlu0 %v1744, 112
      %v1832 = vpop.permute.xlu0 %1831
      %1833 = vrot.lane.b32.xlu0 %v1745, 112
      %v1834 = vpop.permute.xlu0 %1833
      %v1835 = vrot.slane %v1828, 4
      %v1836 = vrot.slane %v1830, 4
      %v1837 = vrot.slane %v1832, 4
      %v1838 = vrot.slane %v1834, 4
      %v1839 = vsel %vm805, %v1835, %v1836
      %vm1840 = vcmask 916480
      %v1841 = vsel %vm1840, %v1828, %v1839
      %v1842 = vsel %vm1840, %v1830, %v1836
      %v1843 = vsel %vm805, %v1837, %v1838
      %v1844 = vsel %vm1840, %v1832, %v1843
      %v1845 = vsel %vm1840, %v1834, %v1838
      %1850 = vst [vmem:[#allocation2 + $0x390] sm:$0xff] %v1841
      %1851 = vst [vmem:[#allocation2 + $0x398] sm:$0xf] %v1842
      %1852 = vst [vmem:[#allocation2 + $0x39c] sm:$0xff] %v1844
      %1853 = vst [vmem:[#allocation2 + $0x3a4] sm:$0xf] %v1845
      %1854 = vrot.lane.b32.xlu0 %v1742, 111
      %v1855 = vpop.permute.xlu0 %1854
      %1856 = vrot.lane.b32.xlu0 %v1743, 111
      %v1857 = vpop.permute.xlu0 %1856
      %1858 = vrot.lane.b32.xlu0 %v1744, 111
      %v1859 = vpop.permute.xlu0 %1858
      %1860 = vrot.lane.b32.xlu0 %v1745, 111
      %v1861 = vpop.permute.xlu0 %1860
      %v1862 = vrot.slane %v1855, 4
      %v1863 = vrot.slane %v1857, 4
      %v1864 = vrot.slane %v1859, 4
      %v1865 = vrot.slane %v1861, 4
      %v1866 = vsel %vm805, %v1862, %v1863
      %vm1867 = vcmask 908288
      %v1868 = vsel %vm1867, %v1855, %v1866
      %v1869 = vsel %vm1867, %v1857, %v1863
      %v1870 = vsel %vm805, %v1864, %v1865
      %v1871 = vsel %vm1867, %v1859, %v1870
      %v1872 = vsel %vm1867, %v1861, %v1865
      %1877 = vst [vmem:[#allocation2 + $0x3a8] sm:$0xff] %v1868
      %1878 = vst [vmem:[#allocation2 + $0x3b0] sm:$0xf] %v1869
      %1879 = vst [vmem:[#allocation2 + $0x3b4] sm:$0xff] %v1871
      %1880 = vst [vmem:[#allocation2 + $0x3bc] sm:$0xf] %v1872
      %1881 = vrot.lane.b32.xlu0 %v1742, 110
      %v1882 = vpop.permute.xlu0 %1881
      %1883 = vrot.lane.b32.xlu0 %v1743, 110
      %v1884 = vpop.permute.xlu0 %1883
      %1885 = vrot.lane.b32.xlu0 %v1744, 110
      %v1886 = vpop.permute.xlu0 %1885
      %1887 = vrot.lane.b32.xlu0 %v1745, 110
      %v1888 = vpop.permute.xlu0 %1887
      %v1889 = vrot.slane %v1882, 4
      %v1890 = vrot.slane %v1884, 4
      %v1891 = vrot.slane %v1886, 4
      %v1892 = vrot.slane %v1888, 4
      %v1893 = vsel %vm805, %v1889, %v1890
      %vm1894 = vcmask 900096
      %v1895 = vsel %vm1894, %v1882, %v1893
      %v1896 = vsel %vm1894, %v1884, %v1890
      %v1897 = vsel %vm805, %v1891, %v1892
      %v1898 = vsel %vm1894, %v1886, %v1897
      %v1899 = vsel %vm1894, %v1888, %v1892
      %1904 = vst [vmem:[#allocation2 + $0x3c0] sm:$0xff] %v1895
      %1905 = vst [vmem:[#allocation2 + $0x3c8] sm:$0xf] %v1896
      %1906 = vst [vmem:[#allocation2 + $0x3cc] sm:$0xff] %v1898
      %1907 = vst [vmem:[#allocation2 + $0x3d4] sm:$0xf] %v1899
      %1908 = vrot.lane.b32.xlu0 %v1742, 109
      %v1909 = vpop.permute.xlu0 %1908
      %1910 = vrot.lane.b32.xlu0 %v1743, 109
      %v1911 = vpop.permute.xlu0 %1910
      %1912 = vrot.lane.b32.xlu0 %v1744, 109
      %v1913 = vpop.permute.xlu0 %1912
      %1914 = vrot.lane.b32.xlu0 %v1745, 109
      %v1915 = vpop.permute.xlu0 %1914
      %v1916 = vrot.slane %v1909, 4
      %v1917 = vrot.slane %v1911, 4
      %v1918 = vrot.slane %v1913, 4
      %v1919 = vrot.slane %v1915, 4
      %v1920 = vsel %vm805, %v1916, %v1917
      %vm1921 = vcmask 891904
      %v1922 = vsel %vm1921, %v1909, %v1920
      %v1923 = vsel %vm1921, %v1911, %v1917
      %v1924 = vsel %vm805, %v1918, %v1919
      %v1925 = vsel %vm1921, %v1913, %v1924
      %v1926 = vsel %vm1921, %v1915, %v1919
      %1931 = vst [vmem:[#allocation2 + $0x3d8] sm:$0xff] %v1922
      %1932 = vst [vmem:[#allocation2 + $0x3e0] sm:$0xf] %v1923
      %1933 = vst [vmem:[#allocation2 + $0x3e4] sm:$0xff] %v1925
      %1934 = vst [vmem:[#allocation2 + $0x3ec] sm:$0xf] %v1926
      %1935 = vrot.lane.b32.xlu0 %v1742, 91
      %v1936 = vpop.permute.xlu0 %1935
      %1937 = vrot.lane.b32.xlu0 %v1743, 91
      %v1938 = vpop.permute.xlu0 %1937
      %1939 = vrot.lane.b32.xlu0 %v1744, 91
      %v1940 = vpop.permute.xlu0 %1939
      %1941 = vrot.lane.b32.xlu0 %v1745, 91
      %v1942 = vpop.permute.xlu0 %1941
      %v1943 = vrot.slane %v1936, 4
      %v1944 = vrot.slane %v1938, 4
      %v1945 = vrot.slane %v1940, 4
      %v1946 = vrot.slane %v1942, 4
      %v1947 = vsel %vm805, %v1943, %v1944
      %vm1948 = vcmask 744448
      %v1949 = vsel %vm1948, %v1936, %v1947
      %v1950 = vsel %vm1948, %v1938, %v1944
      %v1951 = vsel %vm805, %v1945, %v1946
      %v1952 = vsel %vm1948, %v1940, %v1951
      %v1953 = vsel %vm1948, %v1942, %v1946
      %1958 = vst [vmem:[#allocation2 + $0x3f0] sm:$0xff] %v1949
      %1959 = vst [vmem:[#allocation2 + $0x3f8] sm:$0xf] %v1950
      %1960 = vst [vmem:[#allocation2 + $0x3fc] sm:$0xff] %v1952
      %1961 = vst [vmem:[#allocation2 + $0x404] sm:$0xf] %v1953
      %1962 = vrot.lane.b32.xlu0 %v1742, 90
      %v1963 = vpop.permute.xlu0 %1962
      %1964 = vrot.lane.b32.xlu0 %v1743, 90
      %v1965 = vpop.permute.xlu0 %1964
      %1966 = vrot.lane.b32.xlu0 %v1744, 90
      %v1967 = vpop.permute.xlu0 %1966
      %1968 = vrot.lane.b32.xlu0 %v1745, 90
      %v1969 = vpop.permute.xlu0 %1968
      %v1970 = vrot.slane %v1963, 4
      %v1971 = vrot.slane %v1965, 4
      %v1972 = vrot.slane %v1967, 4
      %v1973 = vrot.slane %v1969, 4
      %v1974 = vsel %vm805, %v1970, %v1971
      %vm1975 = vcmask 736256
      %v1976 = vsel %vm1975, %v1963, %v1974
      %v1977 = vsel %vm1975, %v1965, %v1971
      %v1978 = vsel %vm805, %v1972, %v1973
      %v1979 = vsel %vm1975, %v1967, %v1978
      %v1980 = vsel %vm1975, %v1969, %v1973
      %1985 = vst [vmem:[#allocation2 + $0x408] sm:$0xff] %v1976
      %1986 = vst [vmem:[#allocation2 + $0x410] sm:$0xf] %v1977
      %1987 = vst [vmem:[#allocation2 + $0x414] sm:$0xff] %v1979
      %1988 = vst [vmem:[#allocation2 + $0x41c] sm:$0xf] %v1980
      %1989 = vrot.lane.b32.xlu0 %v1742, 89
      %v1990 = vpop.permute.xlu0 %1989
      %1991 = vrot.lane.b32.xlu0 %v1743, 89
      %v1992 = vpop.permute.xlu0 %1991
      %1993 = vrot.lane.b32.xlu0 %v1744, 89
      %v1994 = vpop.permute.xlu0 %1993
      %1995 = vrot.lane.b32.xlu0 %v1745, 89
      %v1996 = vpop.permute.xlu0 %1995
      %v1997 = vrot.slane %v1990, 4
      %v1998 = vrot.slane %v1992, 4
      %v1999 = vrot.slane %v1994, 4
      %v2000 = vrot.slane %v1996, 4
      %v2001 = vsel %vm805, %v1997, %v1998
      %vm2002 = vcmask 728064
      %v2003 = vsel %vm2002, %v1990, %v2001
      %v2004 = vsel %vm2002, %v1992, %v1998
      %v2005 = vsel %vm805, %v1999, %v2000
      %v2006 = vsel %vm2002, %v1994, %v2005
      %v2007 = vsel %vm2002, %v1996, %v2000
      %2012 = vst [vmem:[#allocation2 + $0x420] sm:$0xff] %v2003
      %2013 = vst [vmem:[#allocation2 + $0x428] sm:$0xf] %v2004
      %2014 = vst [vmem:[#allocation2 + $0x42c] sm:$0xff] %v2006
      %2015 = vst [vmem:[#allocation2 + $0x434] sm:$0xf] %v2007
      %2016 = vrot.lane.b32.xlu0 %v1742, 88
      %v2017 = vpop.permute.xlu0 %2016
      %2018 = vrot.lane.b32.xlu0 %v1743, 88
      %v2019 = vpop.permute.xlu0 %2018
      %2020 = vrot.lane.b32.xlu0 %v1744, 88
      %v2021 = vpop.permute.xlu0 %2020
      %2022 = vrot.lane.b32.xlu0 %v1745, 88
      %v2023 = vpop.permute.xlu0 %2022
      %v2024 = vrot.slane %v2017, 4
      %v2025 = vrot.slane %v2019, 4
      %v2026 = vrot.slane %v2021, 4
      %v2027 = vrot.slane %v2023, 4
      %v2028 = vsel %vm805, %v2024, %v2025
      %vm2029 = vcmask 719872
      %v2030 = vsel %vm2029, %v2017, %v2028
      %v2031 = vsel %vm2029, %v2019, %v2025
      %v2032 = vsel %vm805, %v2026, %v2027
      %v2033 = vsel %vm2029, %v2021, %v2032
      %v2034 = vsel %vm2029, %v2023, %v2027
      %2039 = vst [vmem:[#allocation2 + $0x438] sm:$0xff] %v2030
      %2040 = vst [vmem:[#allocation2 + $0x440] sm:$0xf] %v2031
      %2041 = vst [vmem:[#allocation2 + $0x444] sm:$0xff] %v2033
      %2042 = vst [vmem:[#allocation2 + $0x44c] sm:$0xf] %v2034
      %2043 = vrot.lane.b32.xlu0 %v1742, 87
      %v2044 = vpop.permute.xlu0 %2043
      %2045 = vrot.lane.b32.xlu0 %v1743, 87
      %v2046 = vpop.permute.xlu0 %2045
      %2047 = vrot.lane.b32.xlu0 %v1744, 87
      %v2048 = vpop.permute.xlu0 %2047
      %2049 = vrot.lane.b32.xlu0 %v1745, 87
      %v2050 = vpop.permute.xlu0 %2049
      %v2051 = vrot.slane %v2044, 4
      %v2052 = vrot.slane %v2046, 4
      %v2053 = vrot.slane %v2048, 4
      %v2054 = vrot.slane %v2050, 4
      %v2055 = vsel %vm805, %v2051, %v2052
      %vm2056 = vcmask 711680
      %v2057 = vsel %vm2056, %v2044, %v2055
      %v2058 = vsel %vm2056, %v2046, %v2052
      %v2059 = vsel %vm805, %v2053, %v2054
      %v2060 = vsel %vm2056, %v2048, %v2059
      %v2061 = vsel %vm2056, %v2050, %v2054
      %2066 = vst [vmem:[#allocation2 + $0x450] sm:$0xff] %v2057
      %2067 = vst [vmem:[#allocation2 + $0x458] sm:$0xf] %v2058
      %2068 = vst [vmem:[#allocation2 + $0x45c] sm:$0xff] %v2060
      %2069 = vst [vmem:[#allocation2 + $0x464] sm:$0xf] %v2061
      %2070 = vrot.lane.b32.xlu0 %v1742, 86
      %v2071 = vpop.permute.xlu0 %2070
      %2072 = vrot.lane.b32.xlu0 %v1743, 86
      %v2073 = vpop.permute.xlu0 %2072
      %2074 = vrot.lane.b32.xlu0 %v1744, 86
      %v2075 = vpop.permute.xlu0 %2074
      %2076 = vrot.lane.b32.xlu0 %v1745, 86
      %v2077 = vpop.permute.xlu0 %2076
      %v2078 = vrot.slane %v2071, 4
      %v2079 = vrot.slane %v2073, 4
      %v2080 = vrot.slane %v2075, 4
      %v2081 = vrot.slane %v2077, 4
      %v2082 = vsel %vm805, %v2078, %v2079
      %vm2083 = vcmask 703488
      %v2084 = vsel %vm2083, %v2071, %v2082
      %v2085 = vsel %vm2083, %v2073, %v2079
      %v2086 = vsel %vm805, %v2080, %v2081
      %v2087 = vsel %vm2083, %v2075, %v2086
      %v2088 = vsel %vm2083, %v2077, %v2081
      %2093 = vst [vmem:[#allocation2 + $0x468] sm:$0xff] %v2084
      %2094 = vst [vmem:[#allocation2 + $0x470] sm:$0xf] %v2085
      %2095 = vst [vmem:[#allocation2 + $0x474] sm:$0xff] %v2087
      %2096 = vst [vmem:[#allocation2 + $0x47c] sm:$0xf] %v2088
      %2097 = vrot.lane.b32.xlu0 %v1742, 85
      %v2098 = vpop.permute.xlu0 %2097
      %2099 = vrot.lane.b32.xlu0 %v1743, 85
      %v2100 = vpop.permute.xlu0 %2099
      %2101 = vrot.lane.b32.xlu0 %v1744, 85
      %v2102 = vpop.permute.xlu0 %2101
      %2103 = vrot.lane.b32.xlu0 %v1745, 85
      %v2104 = vpop.permute.xlu0 %2103
      %v2105 = vrot.slane %v2098, 4
      %v2106 = vrot.slane %v2100, 4
      %v2107 = vrot.slane %v2102, 4
      %v2108 = vrot.slane %v2104, 4
      %v2109 = vsel %vm805, %v2105, %v2106
      %vm2110 = vcmask 695296
      %v2111 = vsel %vm2110, %v2098, %v2109
      %v2112 = vsel %vm2110, %v2100, %v2106
      %v2113 = vsel %vm805, %v2107, %v2108
      %v2114 = vsel %vm2110, %v2102, %v2113
      %v2115 = vsel %vm2110, %v2104, %v2108
      %2120 = vst [vmem:[#allocation2 + $0x480] sm:$0xff] %v2111
      %2121 = vst [vmem:[#allocation2 + $0x488] sm:$0xf] %v2112
      %2122 = vst [vmem:[#allocation2 + $0x48c] sm:$0xff] %v2114
      %2123 = vst [vmem:[#allocation2 + $0x494] sm:$0xf] %v2115
      %v2124 = vld [vmem:[%s6] sm:$0xff]
      %v2125 = vld [vmem:[%s6 + $0x8] sm:$0xff]
      %v2126 = vld [vmem:[%s6 + $0x10] sm:$0xff]
      %v2127 = vld [vmem:[%s6 + $0x18] sm:$0xf]
      %v2128 = vld [vmem:[%s6 + $0x1c] sm:$0xff]
      %v2129 = vld [vmem:[%s6 + $0x24] sm:$0xff]
      %v2130 = vld [vmem:[%s6 + $0x2c] sm:$0xff]
      %v2131 = vld [vmem:[%s6 + $0x34] sm:$0xf]
      %v2132 = vld [vmem:[%s6 + $0x38] sm:$0xff]
      %v2133 = vld [vmem:[%s6 + $0x40] sm:$0xff]
      %v2134 = vld [vmem:[%s6 + $0x48] sm:$0xff]
      %v2135 = vld [vmem:[%s6 + $0x50] sm:$0xf]
      %v2136 = vld [vmem:[#allocation2] sm:$0xff]
      %v2137 = vld [vmem:[#allocation2 + $0x8] sm:$0xf]
      %v2138 = vld [vmem:[#allocation2 + $0xc] sm:$0xff]
      %v2139 = vld [vmem:[#allocation2 + $0x14] sm:$0xf]
      %v2140 = vld [vmem:[#allocation2 + $0x18] sm:$0xff]
      %v2141 = vld [vmem:[#allocation2 + $0x20] sm:$0xf]
      %v2142 = vld [vmem:[#allocation2 + $0x24] sm:$0xff]
      %v2143 = vld [vmem:[#allocation2 + $0x2c] sm:$0xf]
      %v2144 = vld [vmem:[#allocation2 + $0x30] sm:$0xff]
      %v2145 = vld [vmem:[#allocation2 + $0x38] sm:$0xf]
      %v2146 = vld [vmem:[#allocation2 + $0x3c] sm:$0xff]
      %v2147 = vld [vmem:[#allocation2 + $0x44] sm:$0xf]
      %v2148 = vld [vmem:[#allocation2 + $0x48] sm:$0xff]
      %v2149 = vld [vmem:[#allocation2 + $0x50] sm:$0xf]
      %v2150 = vld [vmem:[#allocation2 + $0x54] sm:$0xff]
      %v2151 = vld [vmem:[#allocation2 + $0x5c] sm:$0xf]
      %v2152 = vld [vmem:[#allocation2 + $0x60] sm:$0xff]
      %v2153 = vld [vmem:[#allocation2 + $0x68] sm:$0xf]
      %v2154 = vld [vmem:[#allocation2 + $0x6c] sm:$0xff]
      %v2155 = vld [vmem:[#allocation2 + $0x74] sm:$0xf]
      %v2156 = vld [vmem:[#allocation2 + $0x78] sm:$0xff]
      %v2157 = vld [vmem:[#allocation2 + $0x80] sm:$0xf]
      %v2158 = vld [vmem:[#allocation2 + $0x84] sm:$0xff]
      %v2159 = vld [vmem:[#allocation2 + $0x8c] sm:$0xf]
      %v2160 = vld [vmem:[#allocation2 + $0x90] sm:$0xff]
      %v2161 = vld [vmem:[#allocation2 + $0x98] sm:$0xf]
      %v2162 = vld [vmem:[#allocation2 + $0x9c] sm:$0xff]
      %v2163 = vld [vmem:[#allocation2 + $0xa4] sm:$0xf]
      %v2164 = vld [vmem:[#allocation2 + $0xa8] sm:$0xff]
      %v2165 = vld [vmem:[#allocation2 + $0xb0] sm:$0xf]
      %v2166 = vld [vmem:[#allocation2 + $0xb4] sm:$0xff]
      %v2167 = vld [vmem:[#allocation2 + $0xbc] sm:$0xf]
      %v2168 = vld [vmem:[#allocation2 + $0xc0] sm:$0xff]
      %v2169 = vld [vmem:[#allocation2 + $0xc8] sm:$0xf]
      %v2170 = vld [vmem:[#allocation2 + $0xcc] sm:$0xff]
      %v2171 = vld [vmem:[#allocation2 + $0xd4] sm:$0xf]
      %v2172 = vld [vmem:[#allocation2 + $0xd8] sm:$0xff]
      %v2173 = vld [vmem:[#allocation2 + $0xe0] sm:$0xf]
      %v2174 = vld [vmem:[#allocation2 + $0xe4] sm:$0xff]
      %v2175 = vld [vmem:[#allocation2 + $0xec] sm:$0xf]
      %v2176 = vld [vmem:[#allocation2 + $0xf0] sm:$0xff]
      %v2177 = vld [vmem:[#allocation2 + $0xf8] sm:$0xf]
      %v2178 = vld [vmem:[#allocation2 + $0xfc] sm:$0xff]
      %v2179 = vld [vmem:[#allocation2 + $0x104] sm:$0xf]
      %v2180 = vld [vmem:[#allocation2 + $0x108] sm:$0xff]
      %v2181 = vld [vmem:[#allocation2 + $0x110] sm:$0xf]
      %v2182 = vld [vmem:[#allocation2 + $0x114] sm:$0xff]
      %v2183 = vld [vmem:[#allocation2 + $0x11c] sm:$0xf]
      %v2184 = vld [vmem:[#allocation2 + $0x120] sm:$0xff]
      %v2185 = vld [vmem:[#allocation2 + $0x128] sm:$0xf]
      %v2186 = vld [vmem:[#allocation2 + $0x12c] sm:$0xff]
      %v2187 = vld [vmem:[#allocation2 + $0x134] sm:$0xf]
      %v2188 = vld [vmem:[#allocation2 + $0x138] sm:$0xff]
      %v2189 = vld [vmem:[#allocation2 + $0x140] sm:$0xf]
      %v2190 = vld [vmem:[#allocation2 + $0x144] sm:$0xff]
      %v2191 = vld [vmem:[#allocation2 + $0x14c] sm:$0xf]
      %v2192 = vld [vmem:[#allocation2 + $0x150] sm:$0xff]
      %v2193 = vld [vmem:[#allocation2 + $0x158] sm:$0xf]
      %v2194 = vld [vmem:[#allocation2 + $0x15c] sm:$0xff]
      %v2195 = vld [vmem:[#allocation2 + $0x164] sm:$0xf]
      %v2196 = vld [vmem:[#allocation2 + $0x168] sm:$0xff]
      %v2197 = vld [vmem:[#allocation2 + $0x170] sm:$0xf]
      %v2198 = vld [vmem:[#allocation2 + $0x174] sm:$0xff]
      %v2199 = vld [vmem:[#allocation2 + $0x17c] sm:$0xf]
      %v2200 = vld [vmem:[#allocation2 + $0x180] sm:$0xff]
      %v2201 = vld [vmem:[#allocation2 + $0x188] sm:$0xf]
      %v2202 = vld [vmem:[#allocation2 + $0x18c] sm:$0xff]
      %v2203 = vld [vmem:[#allocation2 + $0x194] sm:$0xf]
      %v2204 = vld [vmem:[#allocation2 + $0x198] sm:$0xff]
      %v2205 = vld [vmem:[#allocation2 + $0x1a0] sm:$0xf]
      %v2206 = vld [vmem:[#allocation2 + $0x1a4] sm:$0xff]
      %v2207 = vld [vmem:[#allocation2 + $0x1ac] sm:$0xf]
      %v2208 = vld [vmem:[#allocation2 + $0x1b0] sm:$0xff]
      %v2209 = vld [vmem:[#allocation2 + $0x1b8] sm:$0xf]
      %v2210 = vld [vmem:[#allocation2 + $0x1bc] sm:$0xff]
      %v2211 = vld [vmem:[#allocation2 + $0x1c4] sm:$0xf]
      %v2212 = vld [vmem:[#allocation2 + $0x1c8] sm:$0xff]
      %v2213 = vld [vmem:[#allocation2 + $0x1d0] sm:$0xf]
      %v2214 = vld [vmem:[#allocation2 + $0x1d4] sm:$0xff]
      %v2215 = vld [vmem:[#allocation2 + $0x1dc] sm:$0xf]
      %v2216 = vld [vmem:[#allocation2 + $0x1e0] sm:$0xff]
      %v2217 = vld [vmem:[#allocation2 + $0x1e8] sm:$0xf]
      %v2218 = vld [vmem:[#allocation2 + $0x1ec] sm:$0xff]
      %v2219 = vld [vmem:[#allocation2 + $0x1f4] sm:$0xf]
      %v2220 = vld [vmem:[#allocation2 + $0x1f8] sm:$0xff]
      %v2221 = vld [vmem:[#allocation2 + $0x200] sm:$0xf]
      %v2222 = vld [vmem:[#allocation2 + $0x204] sm:$0xff]
      %v2223 = vld [vmem:[#allocation2 + $0x20c] sm:$0xf]
      %v2224 = vld [vmem:[#allocation2 + $0x210] sm:$0xff]
      %v2225 = vld [vmem:[#allocation2 + $0x218] sm:$0xf]
      %v2226 = vld [vmem:[#allocation2 + $0x21c] sm:$0xff]
      %v2227 = vld [vmem:[#allocation2 + $0x224] sm:$0xf]
      %v2228 = vld [vmem:[#allocation2 + $0x228] sm:$0xff]
      %v2229 = vld [vmem:[#allocation2 + $0x230] sm:$0xf]
      %v2230 = vld [vmem:[#allocation2 + $0x234] sm:$0xff]
      %v2231 = vld [vmem:[#allocation2 + $0x23c] sm:$0xf]
      %v2232 = vld [vmem:[#allocation2 + $0x240] sm:$0xff]
      %v2233 = vld [vmem:[#allocation2 + $0x248] sm:$0xf]
      %v2234 = vld [vmem:[#allocation2 + $0x24c] sm:$0xff]
      %v2235 = vld [vmem:[#allocation2 + $0x254] sm:$0xf]
      %v2236 = vld [vmem:[#allocation2 + $0x258] sm:$0xff]
      %v2237 = vld [vmem:[#allocation2 + $0x260] sm:$0xf]
      %v2238 = vld [vmem:[#allocation2 + $0x264] sm:$0xff]
      %v2239 = vld [vmem:[#allocation2 + $0x26c] sm:$0xf]
      %v2240 = vld [vmem:[#allocation2 + $0x270] sm:$0xff]
      %v2241 = vld [vmem:[#allocation2 + $0x278] sm:$0xf]
      %v2242 = vld [vmem:[#allocation2 + $0x27c] sm:$0xff]
      %v2243 = vld [vmem:[#allocation2 + $0x284] sm:$0xf]
      %v2244 = vld [vmem:[#allocation2 + $0x288] sm:$0xff]
      %v2245 = vld [vmem:[#allocation2 + $0x290] sm:$0xf]
      %v2246 = vld [vmem:[#allocation2 + $0x294] sm:$0xff]
      %v2247 = vld [vmem:[#allocation2 + $0x29c] sm:$0xf]
      %v2248 = vld [vmem:[#allocation2 + $0x2a0] sm:$0xff]
      %v2249 = vld [vmem:[#allocation2 + $0x2a8] sm:$0xf]
      %v2250 = vld [vmem:[#allocation2 + $0x2ac] sm:$0xff]
      %v2251 = vld [vmem:[#allocation2 + $0x2b4] sm:$0xf]
      %v2252 = vld [vmem:[#allocation2 + $0x2b8] sm:$0xff]
      %v2253 = vld [vmem:[#allocation2 + $0x2c0] sm:$0xf]
      %v2254 = vld [vmem:[#allocation2 + $0x2c4] sm:$0xff]
      %v2255 = vld [vmem:[#allocation2 + $0x2cc] sm:$0xf]
      %v2256 = vld [vmem:[#allocation2 + $0x2d0] sm:$0xff]
      %v2257 = vld [vmem:[#allocation2 + $0x2d8] sm:$0xf]
      %v2258 = vld [vmem:[#allocation2 + $0x2dc] sm:$0xff]
      %v2259 = vld [vmem:[#allocation2 + $0x2e4] sm:$0xf]
      %v2260 = vld [vmem:[#allocation2 + $0x2e8] sm:$0xff]
      %v2261 = vld [vmem:[#allocation2 + $0x2f0] sm:$0xf]
      %v2262 = vld [vmem:[#allocation2 + $0x2f4] sm:$0xff]
      %v2263 = vld [vmem:[#allocation2 + $0x2fc] sm:$0xf]
      %v2264 = vld [vmem:[#allocation2 + $0x300] sm:$0xff]
      %v2265 = vld [vmem:[#allocation2 + $0x308] sm:$0xf]
      %v2266 = vld [vmem:[#allocation2 + $0x30c] sm:$0xff]
      %v2267 = vld [vmem:[#allocation2 + $0x314] sm:$0xf]
      %v2268 = vld [vmem:[#allocation2 + $0x318] sm:$0xff]
      %v2269 = vld [vmem:[#allocation2 + $0x320] sm:$0xf]
      %v2270 = vld [vmem:[#allocation2 + $0x324] sm:$0xff]
      %v2271 = vld [vmem:[#allocation2 + $0x32c] sm:$0xf]
      %v2272 = vld [vmem:[#allocation2 + $0x330] sm:$0xff]
      %v2273 = vld [vmem:[#allocation2 + $0x338] sm:$0xf]
      %v2274 = vld [vmem:[#allocation2 + $0x33c] sm:$0xff]
      %v2275 = vld [vmem:[#allocation2 + $0x344] sm:$0xf]
      %v2276 = vld [vmem:[#allocation2 + $0x348] sm:$0xff]
      %v2277 = vld [vmem:[#allocation2 + $0x350] sm:$0xf]
      %v2278 = vld [vmem:[#allocation2 + $0x354] sm:$0xff]
      %v2279 = vld [vmem:[#allocation2 + $0x35c] sm:$0xf]
      %v2280 = vld [vmem:[#allocation2 + $0x360] sm:$0xff]
      %v2281 = vld [vmem:[#allocation2 + $0x368] sm:$0xf]
      %v2282 = vld [vmem:[#allocation2 + $0x36c] sm:$0xff]
      %v2283 = vld [vmem:[#allocation2 + $0x374] sm:$0xf]
      %v2284 = vld [vmem:[#allocation2 + $0x378] sm:$0xff]
      %v2285 = vld [vmem:[#allocation2 + $0x380] sm:$0xf]
      %v2286 = vld [vmem:[#allocation2 + $0x384] sm:$0xff]
      %v2287 = vld [vmem:[#allocation2 + $0x38c] sm:$0xf]
      %v2288 = vld [vmem:[#allocation2 + $0x390] sm:$0xff]
      %v2289 = vld [vmem:[#allocation2 + $0x398] sm:$0xf]
      %v2290 = vld [vmem:[#allocation2 + $0x39c] sm:$0xff]
      %v2291 = vld [vmem:[#allocation2 + $0x3a4] sm:$0xf]
      %v2292 = vld [vmem:[#allocation2 + $0x3a8] sm:$0xff]
      %v2293 = vld [vmem:[#allocation2 + $0x3b0] sm:$0xf]
      %v2294 = vld [vmem:[#allocation2 + $0x3b4] sm:$0xff]
      %v2295 = vld [vmem:[#allocation2 + $0x3bc] sm:$0xf]
      %v2296 = vld [vmem:[#allocation2 + $0x3c0] sm:$0xff]
      %v2297 = vld [vmem:[#allocation2 + $0x3c8] sm:$0xf]
      %v2298 = vld [vmem:[#allocation2 + $0x3cc] sm:$0xff]
      %v2299 = vld [vmem:[#allocation2 + $0x3d4] sm:$0xf]
      %v2300 = vld [vmem:[#allocation2 + $0x3d8] sm:$0xff]
      %v2301 = vld [vmem:[#allocation2 + $0x3e0] sm:$0xf]
      %v2302 = vld [vmem:[#allocation2 + $0x3e4] sm:$0xff]
      %v2303 = vld [vmem:[#allocation2 + $0x3ec] sm:$0xf]
      %v2304 = vld [vmem:[#allocation2 + $0x3f0] sm:$0xff]
      %v2305 = vld [vmem:[#allocation2 + $0x3f8] sm:$0xf]
      %v2306 = vld [vmem:[#allocation2 + $0x3fc] sm:$0xff]
      %v2307 = vld [vmem:[#allocation2 + $0x404] sm:$0xf]
      %v2308 = vld [vmem:[#allocation2 + $0x408] sm:$0xff]
      %v2309 = vld [vmem:[#allocation2 + $0x410] sm:$0xf]
      %v2310 = vld [vmem:[#allocation2 + $0x414] sm:$0xff]
      %v2311 = vld [vmem:[#allocation2 + $0x41c] sm:$0xf]
      %v2312 = vld [vmem:[#allocation2 + $0x420] sm:$0xff]
      %v2313 = vld [vmem:[#allocation2 + $0x428] sm:$0xf]
      %v2314 = vld [vmem:[#allocation2 + $0x42c] sm:$0xff]
      %v2315 = vld [vmem:[#allocation2 + $0x434] sm:$0xf]
      %v2316 = vld [vmem:[#allocation2 + $0x438] sm:$0xff]
      %v2317 = vld [vmem:[#allocation2 + $0x440] sm:$0xf]
      %v2318 = vld [vmem:[#allocation2 + $0x444] sm:$0xff]
      %v2319 = vld [vmem:[#allocation2 + $0x44c] sm:$0xf]
      %v2320 = vld [vmem:[#allocation2 + $0x450] sm:$0xff]
      %v2321 = vld [vmem:[#allocation2 + $0x458] sm:$0xf]
      %v2322 = vld [vmem:[#allocation2 + $0x45c] sm:$0xff]
      %v2323 = vld [vmem:[#allocation2 + $0x464] sm:$0xf]
      %v2324 = vld [vmem:[#allocation2 + $0x468] sm:$0xff]
      %v2325 = vld [vmem:[#allocation2 + $0x470] sm:$0xf]
      %v2326 = vld [vmem:[#allocation2 + $0x474] sm:$0xff]
      %v2327 = vld [vmem:[#allocation2 + $0x47c] sm:$0xf]
      %v2328 = vld [vmem:[#allocation2 + $0x480] sm:$0xff]
      %v2329 = vld [vmem:[#allocation2 + $0x488] sm:$0xf]
      %v2330 = vld [vmem:[#allocation2 + $0x48c] sm:$0xff]
      %v2331 = vld [vmem:[#allocation2 + $0x494] sm:$0xf]
      %v2344 = vunpack.c.l.b16 %v2124
      %v2345 = vunpack.c.h.b16 %v2124
      %v2346 = vunpack.c.l.b16 %v2125
      %v2347 = vunpack.c.h.b16 %v2125
      %v2348 = vunpack.c.l.b16 %v2126
      %v2349 = vunpack.c.h.b16 %v2126
      %v2350 = vunpack.c.l.b16 %v2127
      %v2351 = vunpack.c.l.b16 %v2128
      %v2352 = vunpack.c.h.b16 %v2128
      %v2353 = vunpack.c.l.b16 %v2129
      %v2354 = vunpack.c.h.b16 %v2129
      %v2355 = vunpack.c.l.b16 %v2130
      %v2356 = vunpack.c.h.b16 %v2130
      %v2357 = vunpack.c.l.b16 %v2131
      %v2358 = vunpack.c.l.b16 %v2132
      %v2359 = vunpack.c.h.b16 %v2132
      %v2360 = vunpack.c.l.b16 %v2133
      %v2361 = vunpack.c.h.b16 %v2133
      %v2362 = vunpack.c.l.b16 %v2134
      %v2363 = vunpack.c.h.b16 %v2134
      %v2364 = vunpack.c.l.b16 %v2135
      %v2365 = vpack.c.b16 %v2351, %v2344
      %v2366 = vpack.c.b16 %v2352, %v2345
      %v2367 = vpack.c.b16 %v2353, %v2346
      %v2368 = vpack.c.b16 %v2354, %v2347
      %v2369 = vpack.c.b16 %v2355, %v2348
      %v2370 = vpack.c.b16 %v2356, %v2349
      %v2371 = vpack.c.b16 %v2357, %v2350
      %v2372 = vpack.c.b16 %v2358, %v2358
      %v2373 = vpack.c.b16 %v2359, %v2359
      %v2374 = vpack.c.b16 %v2360, %v2360
      %v2375 = vpack.c.b16 %v2361, %v2361
      %v2376 = vpack.c.b16 %v2362, %v2362
      %v2377 = vpack.c.b16 %v2363, %v2363
      %v2378 = vpack.c.b16 %v2364, %v2364
      %v2587 = vunpack.c.l.b16 %v2136
      %v2588 = vunpack.c.h.b16 %v2136
      %v2589 = vunpack.c.l.b16 %v2137
      %v2590 = vunpack.c.l.b16 %v2138
      %v2591 = vunpack.c.h.b16 %v2138
      %v2592 = vunpack.c.l.b16 %v2139
      %v2593 = vunpack.c.l.b16 %v2140
      %v2594 = vunpack.c.h.b16 %v2140
      %v2595 = vunpack.c.l.b16 %v2141
      %v2596 = vunpack.c.l.b16 %v2142
      %v2597 = vunpack.c.h.b16 %v2142
      %v2598 = vunpack.c.l.b16 %v2143
      %v2599 = vunpack.c.l.b16 %v2144
      %v2600 = vunpack.c.h.b16 %v2144
      %v2601 = vunpack.c.l.b16 %v2145
      %v2602 = vunpack.c.l.b16 %v2146
      %v2603 = vunpack.c.h.b16 %v2146
      %v2604 = vunpack.c.l.b16 %v2147
      %v2605 = vunpack.c.l.b16 %v2148
      %v2606 = vunpack.c.h.b16 %v2148
      %v2607 = vunpack.c.l.b16 %v2149
      %v2608 = vunpack.c.l.b16 %v2150
      %v2609 = vunpack.c.h.b16 %v2150
      %v2610 = vunpack.c.l.b16 %v2151
      %v2611 = vunpack.c.l.b16 %v2152
      %v2612 = vunpack.c.h.b16 %v2152
      %v2613 = vunpack.c.l.b16 %v2153
      %v2614 = vunpack.c.l.b16 %v2154
      %v2615 = vunpack.c.h.b16 %v2154
      %v2616 = vunpack.c.l.b16 %v2155
      %v2617 = vunpack.c.l.b16 %v2156
      %v2618 = vunpack.c.h.b16 %v2156
      %v2619 = vunpack.c.l.b16 %v2157
      %v2620 = vunpack.c.l.b16 %v2158
      %v2621 = vunpack.c.h.b16 %v2158
      %v2622 = vunpack.c.l.b16 %v2159
      %v2623 = vunpack.c.l.b16 %v2160
      %v2624 = vunpack.c.h.b16 %v2160
      %v2625 = vunpack.c.l.b16 %v2161
      %v2626 = vunpack.c.l.b16 %v2162
      %v2627 = vunpack.c.h.b16 %v2162
      %v2628 = vunpack.c.l.b16 %v2163
      %v2629 = vunpack.c.l.b16 %v2164
      %v2630 = vunpack.c.h.b16 %v2164
      %v2631 = vunpack.c.l.b16 %v2165
      %v2632 = vunpack.c.l.b16 %v2166
      %v2633 = vunpack.c.h.b16 %v2166
      %v2634 = vunpack.c.l.b16 %v2167
      %v2635 = vunpack.c.l.b16 %v2168
      %v2636 = vunpack.c.h.b16 %v2168
      %v2637 = vunpack.c.l.b16 %v2169
      %v2638 = vunpack.c.l.b16 %v2170
      %v2639 = vunpack.c.h.b16 %v2170
      %v2640 = vunpack.c.l.b16 %v2171
      %v2641 = vunpack.c.l.b16 %v2172
      %v2642 = vunpack.c.h.b16 %v2172
      %v2643 = vunpack.c.l.b16 %v2173
      %v2644 = vunpack.c.l.b16 %v2174
      %v2645 = vunpack.c.h.b16 %v2174
      %v2646 = vunpack.c.l.b16 %v2175
      %v2647 = vunpack.c.l.b16 %v2176
      %v2648 = vunpack.c.h.b16 %v2176
      %v2649 = vunpack.c.l.b16 %v2177
      %v2650 = vunpack.c.l.b16 %v2178
      %v2651 = vunpack.c.h.b16 %v2178
      %v2652 = vunpack.c.l.b16 %v2179
      %v2653 = vunpack.c.l.b16 %v2180
      %v2654 = vunpack.c.h.b16 %v2180
      %v2655 = vunpack.c.l.b16 %v2181
      %v2656 = vunpack.c.l.b16 %v2182
      %v2657 = vunpack.c.h.b16 %v2182
      %v2658 = vunpack.c.l.b16 %v2183
      %v2659 = vunpack.c.l.b16 %v2184
      %v2660 = vunpack.c.h.b16 %v2184
      %v2661 = vunpack.c.l.b16 %v2185
      %v2662 = vunpack.c.l.b16 %v2186
      %v2663 = vunpack.c.h.b16 %v2186
      %v2664 = vunpack.c.l.b16 %v2187
      %v2665 = vunpack.c.l.b16 %v2188
      %v2666 = vunpack.c.h.b16 %v2188
      %v2667 = vunpack.c.l.b16 %v2189
      %v2668 = vunpack.c.l.b16 %v2190
      %v2669 = vunpack.c.h.b16 %v2190
      %v2670 = vunpack.c.l.b16 %v2191
      %v2671 = vunpack.c.l.b16 %v2192
      %v2672 = vunpack.c.h.b16 %v2192
      %v2673 = vunpack.c.l.b16 %v2193
      %v2674 = vunpack.c.l.b16 %v2194
      %v2675 = vunpack.c.h.b16 %v2194
      %v2676 = vunpack.c.l.b16 %v2195
      %v2677 = vunpack.c.l.b16 %v2196
      %v2678 = vunpack.c.h.b16 %v2196
      %v2679 = vunpack.c.l.b16 %v2197
      %v2680 = vunpack.c.l.b16 %v2198
      %v2681 = vunpack.c.h.b16 %v2198
      %v2682 = vunpack.c.l.b16 %v2199
      %v2683 = vunpack.c.l.b16 %v2200
      %v2684 = vunpack.c.h.b16 %v2200
      %v2685 = vunpack.c.l.b16 %v2201
      %v2686 = vunpack.c.l.b16 %v2202
      %v2687 = vunpack.c.h.b16 %v2202
      %v2688 = vunpack.c.l.b16 %v2203
      %v2689 = vunpack.c.l.b16 %v2204
      %v2690 = vunpack.c.h.b16 %v2204
      %v2691 = vunpack.c.l.b16 %v2205
      %v2692 = vunpack.c.l.b16 %v2206
      %v2693 = vunpack.c.h.b16 %v2206
      %v2694 = vunpack.c.l.b16 %v2207
      %v2695 = vunpack.c.l.b16 %v2208
      %v2696 = vunpack.c.h.b16 %v2208
      %v2697 = vunpack.c.l.b16 %v2209
      %v2698 = vunpack.c.l.b16 %v2210
      %v2699 = vunpack.c.h.b16 %v2210
      %v2700 = vunpack.c.l.b16 %v2211
      %v2701 = vunpack.c.l.b16 %v2212
      %v2702 = vunpack.c.h.b16 %v2212
      %v2703 = vunpack.c.l.b16 %v2213
      %v2704 = vunpack.c.l.b16 %v2214
      %v2705 = vunpack.c.h.b16 %v2214
      %v2706 = vunpack.c.l.b16 %v2215
      %v2707 = vunpack.c.l.b16 %v2216
      %v2708 = vunpack.c.h.b16 %v2216
      %v2709 = vunpack.c.l.b16 %v2217
      %v2710 = vunpack.c.l.b16 %v2218
      %v2711 = vunpack.c.h.b16 %v2218
      %v2712 = vunpack.c.l.b16 %v2219
      %v2713 = vunpack.c.l.b16 %v2220
      %v2714 = vunpack.c.h.b16 %v2220
      %v2715 = vunpack.c.l.b16 %v2221
      %v2716 = vunpack.c.l.b16 %v2222
      %v2717 = vunpack.c.h.b16 %v2222
      %v2718 = vunpack.c.l.b16 %v2223
      %v2719 = vunpack.c.l.b16 %v2224
      %v2720 = vunpack.c.h.b16 %v2224
      %v2721 = vunpack.c.l.b16 %v2225
      %v2722 = vunpack.c.l.b16 %v2226
      %v2723 = vunpack.c.h.b16 %v2226
      %v2724 = vunpack.c.l.b16 %v2227
      %v2725 = vunpack.c.l.b16 %v2228
      %v2726 = vunpack.c.h.b16 %v2228
      %v2727 = vunpack.c.l.b16 %v2229
      %v2728 = vunpack.c.l.b16 %v2230
      %v2729 = vunpack.c.h.b16 %v2230
      %v2730 = vunpack.c.l.b16 %v2231
      %v2731 = vunpack.c.l.b16 %v2232
      %v2732 = vunpack.c.h.b16 %v2232
      %v2733 = vunpack.c.l.b16 %v2233
      %v2734 = vunpack.c.l.b16 %v2234
      %v2735 = vunpack.c.h.b16 %v2234
      %v2736 = vunpack.c.l.b16 %v2235
      %v2737 = vunpack.c.l.b16 %v2236
      %v2738 = vunpack.c.h.b16 %v2236
      %v2739 = vunpack.c.l.b16 %v2237
      %v2740 = vunpack.c.l.b16 %v2238
      %v2741 = vunpack.c.h.b16 %v2238
      %v2742 = vunpack.c.l.b16 %v2239
      %v2743 = vunpack.c.l.b16 %v2240
      %v2744 = vunpack.c.h.b16 %v2240
      %v2745 = vunpack.c.l.b16 %v2241
      %v2746 = vunpack.c.l.b16 %v2242
      %v2747 = vunpack.c.h.b16 %v2242
      %v2748 = vunpack.c.l.b16 %v2243
      %v2749 = vunpack.c.l.b16 %v2244
      %v2750 = vunpack.c.h.b16 %v2244
      %v2751 = vunpack.c.l.b16 %v2245
      %v2752 = vunpack.c.l.b16 %v2246
      %v2753 = vunpack.c.h.b16 %v2246
      %v2754 = vunpack.c.l.b16 %v2247
      %v2755 = vunpack.c.l.b16 %v2248
      %v2756 = vunpack.c.h.b16 %v2248
      %v2757 = vunpack.c.l.b16 %v2249
      %v2758 = vunpack.c.l.b16 %v2250
      %v2759 = vunpack.c.h.b16 %v2250
      %v2760 = vunpack.c.l.b16 %v2251
      %v2761 = vunpack.c.l.b16 %v2252
      %v2762 = vunpack.c.h.b16 %v2252
      %v2763 = vunpack.c.l.b16 %v2253
      %v2764 = vunpack.c.l.b16 %v2254
      %v2765 = vunpack.c.h.b16 %v2254
      %v2766 = vunpack.c.l.b16 %v2255
      %v2767 = vunpack.c.l.b16 %v2256
      %v2768 = vunpack.c.h.b16 %v2256
      %v2769 = vunpack.c.l.b16 %v2257
      %v2770 = vunpack.c.l.b16 %v2258
      %v2771 = vunpack.c.h.b16 %v2258
      %v2772 = vunpack.c.l.b16 %v2259
      %v2773 = vunpack.c.l.b16 %v2260
      %v2774 = vunpack.c.h.b16 %v2260
      %v2775 = vunpack.c.l.b16 %v2261
      %v2776 = vunpack.c.l.b16 %v2262
      %v2777 = vunpack.c.h.b16 %v2262
      %v2778 = vunpack.c.l.b16 %v2263
      %v2779 = vunpack.c.l.b16 %v2264
      %v2780 = vunpack.c.h.b16 %v2264
      %v2781 = vunpack.c.l.b16 %v2265
      %v2782 = vunpack.c.l.b16 %v2266
      %v2783 = vunpack.c.h.b16 %v2266
      %v2784 = vunpack.c.l.b16 %v2267
      %v2785 = vunpack.c.l.b16 %v2268
      %v2786 = vunpack.c.h.b16 %v2268
      %v2787 = vunpack.c.l.b16 %v2269
      %v2788 = vunpack.c.l.b16 %v2270
      %v2789 = vunpack.c.h.b16 %v2270
      %v2790 = vunpack.c.l.b16 %v2271
      %v2791 = vunpack.c.l.b16 %v2272
      %v2792 = vunpack.c.h.b16 %v2272
      %v2793 = vunpack.c.l.b16 %v2273
      %v2794 = vunpack.c.l.b16 %v2274
      %v2795 = vunpack.c.h.b16 %v2274
      %v2796 = vunpack.c.l.b16 %v2275
      %v2797 = vunpack.c.l.b16 %v2276
      %v2798 = vunpack.c.h.b16 %v2276
      %v2799 = vunpack.c.l.b16 %v2277
      %v2800 = vunpack.c.l.b16 %v2278
      %v2801 = vunpack.c.h.b16 %v2278
      %v2802 = vunpack.c.l.b16 %v2279
      %v2803 = vunpack.c.l.b16 %v2280
      %v2804 = vunpack.c.h.b16 %v2280
      %v2805 = vunpack.c.l.b16 %v2281
      %v2806 = vunpack.c.l.b16 %v2282
      %v2807 = vunpack.c.h.b16 %v2282
      %v2808 = vunpack.c.l.b16 %v2283
      %v2809 = vunpack.c.l.b16 %v2284
      %v2810 = vunpack.c.h.b16 %v2284
      %v2811 = vunpack.c.l.b16 %v2285
      %v2812 = vunpack.c.l.b16 %v2286
      %v2813 = vunpack.c.h.b16 %v2286
      %v2814 = vunpack.c.l.b16 %v2287
      %v2815 = vunpack.c.l.b16 %v2288
      %v2816 = vunpack.c.h.b16 %v2288
      %v2817 = vunpack.c.l.b16 %v2289
      %v2818 = vunpack.c.l.b16 %v2290
      %v2819 = vunpack.c.h.b16 %v2290
      %v2820 = vunpack.c.l.b16 %v2291
      %v2821 = vunpack.c.l.b16 %v2292
      %v2822 = vunpack.c.h.b16 %v2292
      %v2823 = vunpack.c.l.b16 %v2293
      %v2824 = vunpack.c.l.b16 %v2294
      %v2825 = vunpack.c.h.b16 %v2294
      %v2826 = vunpack.c.l.b16 %v2295
      %v2827 = vunpack.c.l.b16 %v2296
      %v2828 = vunpack.c.h.b16 %v2296
      %v2829 = vunpack.c.l.b16 %v2297
      %v2830 = vunpack.c.l.b16 %v2298
      %v2831 = vunpack.c.h.b16 %v2298
      %v2832 = vunpack.c.l.b16 %v2299
      %v2833 = vunpack.c.l.b16 %v2300
      %v2834 = vunpack.c.h.b16 %v2300
      %v2835 = vunpack.c.l.b16 %v2301
      %v2836 = vunpack.c.l.b16 %v2302
      %v2837 = vunpack.c.h.b16 %v2302
      %v2838 = vunpack.c.l.b16 %v2303
      %v2839 = vunpack.c.l.b16 %v2304
      %v2840 = vunpack.c.h.b16 %v2304
      %v2841 = vunpack.c.l.b16 %v2305
      %v2842 = vunpack.c.l.b16 %v2306
      %v2843 = vunpack.c.h.b16 %v2306
      %v2844 = vunpack.c.l.b16 %v2307
      %v2845 = vunpack.c.l.b16 %v2308
      %v2846 = vunpack.c.h.b16 %v2308
      %v2847 = vunpack.c.l.b16 %v2309
      %v2848 = vunpack.c.l.b16 %v2310
      %v2849 = vunpack.c.h.b16 %v2310
      %v2850 = vunpack.c.l.b16 %v2311
      %v2851 = vunpack.c.l.b16 %v2312
      %v2852 = vunpack.c.h.b16 %v2312
      %v2853 = vunpack.c.l.b16 %v2313
      %v2854 = vunpack.c.l.b16 %v2314
      %v2855 = vunpack.c.h.b16 %v2314
      %v2856 = vunpack.c.l.b16 %v2315
      %v2857 = vunpack.c.l.b16 %v2316
      %v2858 = vunpack.c.h.b16 %v2316
      %v2859 = vunpack.c.l.b16 %v2317
      %v2860 = vunpack.c.l.b16 %v2318
      %v2861 = vunpack.c.h.b16 %v2318
      %v2862 = vunpack.c.l.b16 %v2319
      %v2863 = vunpack.c.l.b16 %v2320
      %v2864 = vunpack.c.h.b16 %v2320
      %v2865 = vunpack.c.l.b16 %v2321
      %v2866 = vunpack.c.l.b16 %v2322
      %v2867 = vunpack.c.h.b16 %v2322
      %v2868 = vunpack.c.l.b16 %v2323
      %v2869 = vunpack.c.l.b16 %v2324
      %v2870 = vunpack.c.h.b16 %v2324
      %v2871 = vunpack.c.l.b16 %v2325
      %v2872 = vunpack.c.l.b16 %v2326
      %v2873 = vunpack.c.h.b16 %v2326
      %v2874 = vunpack.c.l.b16 %v2327
      %v2875 = vunpack.c.l.b16 %v2328
      %v2876 = vunpack.c.h.b16 %v2328
      %v2877 = vunpack.c.l.b16 %v2329
      %v2878 = vunpack.c.l.b16 %v2330
      %v2879 = vunpack.c.h.b16 %v2330
      %v2880 = vunpack.c.l.b16 %v2331
      %v2881 = vpack.c.b16 %v2590, %v2587
      %v2882 = vpack.c.b16 %v2591, %v2588
      %v2883 = vpack.c.b16 %v2592, %v2589
      %v2884 = vpack.c.b16 %v2596, %v2593
      %v2885 = vpack.c.b16 %v2597, %v2594
      %v2886 = vpack.c.b16 %v2598, %v2595
      %v2887 = vpack.c.b16 %v2602, %v2599
      %v2888 = vpack.c.b16 %v2603, %v2600
      %v2889 = vpack.c.b16 %v2604, %v2601
      %v2890 = vpack.c.b16 %v2608, %v2605
      %v2891 = vpack.c.b16 %v2609, %v2606
      %v2892 = vpack.c.b16 %v2610, %v2607
      %v2893 = vpack.c.b16 %v2614, %v2611
      %v2894 = vpack.c.b16 %v2615, %v2612
      %v2895 = vpack.c.b16 %v2616, %v2613
      %v2896 = vpack.c.b16 %v2620, %v2617
      %v2897 = vpack.c.b16 %v2621, %v2618
      %v2898 = vpack.c.b16 %v2622, %v2619
      %v2899 = vpack.c.b16 %v2626, %v2623
      %v2900 = vpack.c.b16 %v2627, %v2624
      %v2901 = vpack.c.b16 %v2628, %v2625
      %v2902 = vpack.c.b16 %v2632, %v2629
      %v2903 = vpack.c.b16 %v2633, %v2630
      %v2904 = vpack.c.b16 %v2634, %v2631
      %v2905 = vpack.c.b16 %v2638, %v2635
      %v2906 = vpack.c.b16 %v2639, %v2636
      %v2907 = vpack.c.b16 %v2640, %v2637
      %v2908 = vpack.c.b16 %v2644, %v2641
      %v2909 = vpack.c.b16 %v2645, %v2642
      %v2910 = vpack.c.b16 %v2646, %v2643
      %v2911 = vpack.c.b16 %v2650, %v2647
      %v2912 = vpack.c.b16 %v2651, %v2648
      %v2913 = vpack.c.b16 %v2652, %v2649
      %v2914 = vpack.c.b16 %v2656, %v2653
      %v2915 = vpack.c.b16 %v2657, %v2654
      %v2916 = vpack.c.b16 %v2658, %v2655
      %v2917 = vpack.c.b16 %v2662, %v2659
      %v2918 = vpack.c.b16 %v2663, %v2660
      %v2919 = vpack.c.b16 %v2664, %v2661
      %v2920 = vpack.c.b16 %v2668, %v2665
      %v2921 = vpack.c.b16 %v2669, %v2666
      %v2922 = vpack.c.b16 %v2670, %v2667
      %v2923 = vpack.c.b16 %v2674, %v2671
      %v2924 = vpack.c.b16 %v2675, %v2672
      %v2925 = vpack.c.b16 %v2676, %v2673
      %v2926 = vpack.c.b16 %v2680, %v2677
      %v2927 = vpack.c.b16 %v2681, %v2678
      %v2928 = vpack.c.b16 %v2682, %v2679
      %v2929 = vpack.c.b16 %v2686, %v2683
      %v2930 = vpack.c.b16 %v2687, %v2684
      %v2931 = vpack.c.b16 %v2688, %v2685
      %v2932 = vpack.c.b16 %v2692, %v2689
      %v2933 = vpack.c.b16 %v2693, %v2690
      %v2934 = vpack.c.b16 %v2694, %v2691
      %v2935 = vpack.c.b16 %v2698, %v2695
      %v2936 = vpack.c.b16 %v2699, %v2696
      %v2937 = vpack.c.b16 %v2700, %v2697
      %v2938 = vpack.c.b16 %v2704, %v2701
      %v2939 = vpack.c.b16 %v2705, %v2702
      %v2940 = vpack.c.b16 %v2706, %v2703
      %v2941 = vpack.c.b16 %v2710, %v2707
      %v2942 = vpack.c.b16 %v2711, %v2708
      %v2943 = vpack.c.b16 %v2712, %v2709
      %v2944 = vpack.c.b16 %v2716, %v2713
      %v2945 = vpack.c.b16 %v2717, %v2714
      %v2946 = vpack.c.b16 %v2718, %v2715
      %v2947 = vpack.c.b16 %v2722, %v2719
      %v2948 = vpack.c.b16 %v2723, %v2720
      %v2949 = vpack.c.b16 %v2724, %v2721
      %v2950 = vpack.c.b16 %v2728, %v2725
      %v2951 = vpack.c.b16 %v2729, %v2726
      %v2952 = vpack.c.b16 %v2730, %v2727
      %v2953 = vpack.c.b16 %v2734, %v2731
      %v2954 = vpack.c.b16 %v2735, %v2732
      %v2955 = vpack.c.b16 %v2736, %v2733
      %v2956 = vpack.c.b16 %v2740, %v2737
      %v2957 = vpack.c.b16 %v2741, %v2738
      %v2958 = vpack.c.b16 %v2742, %v2739
      %v2959 = vpack.c.b16 %v2746, %v2743
      %v2960 = vpack.c.b16 %v2747, %v2744
      %v2961 = vpack.c.b16 %v2748, %v2745
      %v2962 = vpack.c.b16 %v2752, %v2749
      %v2963 = vpack.c.b16 %v2753, %v2750
      %v2964 = vpack.c.b16 %v2754, %v2751
      %v2965 = vpack.c.b16 %v2758, %v2755
      %v2966 = vpack.c.b16 %v2759, %v2756
      %v2967 = vpack.c.b16 %v2760, %v2757
      %v2968 = vpack.c.b16 %v2764, %v2761
      %v2969 = vpack.c.b16 %v2765, %v2762
      %v2970 = vpack.c.b16 %v2766, %v2763
      %v2971 = vpack.c.b16 %v2770, %v2767
      %v2972 = vpack.c.b16 %v2771, %v2768
      %v2973 = vpack.c.b16 %v2772, %v2769
      %v2974 = vpack.c.b16 %v2776, %v2773
      %v2975 = vpack.c.b16 %v2777, %v2774
      %v2976 = vpack.c.b16 %v2778, %v2775
      %v2977 = vpack.c.b16 %v2782, %v2779
      %v2978 = vpack.c.b16 %v2783, %v2780
      %v2979 = vpack.c.b16 %v2784, %v2781
      %v2980 = vpack.c.b16 %v2788, %v2785
      %v2981 = vpack.c.b16 %v2789, %v2786
      %v2982 = vpack.c.b16 %v2790, %v2787
      %v2983 = vpack.c.b16 %v2794, %v2791
      %v2984 = vpack.c.b16 %v2795, %v2792
      %v2985 = vpack.c.b16 %v2796, %v2793
      %v2986 = vpack.c.b16 %v2800, %v2797
      %v2987 = vpack.c.b16 %v2801, %v2798
      %v2988 = vpack.c.b16 %v2802, %v2799
      %v2989 = vpack.c.b16 %v2806, %v2803
      %v2990 = vpack.c.b16 %v2807, %v2804
      %v2991 = vpack.c.b16 %v2808, %v2805
      %v2992 = vpack.c.b16 %v2812, %v2809
      %v2993 = vpack.c.b16 %v2813, %v2810
      %v2994 = vpack.c.b16 %v2814, %v2811
      %v2995 = vpack.c.b16 %v2818, %v2815
      %v2996 = vpack.c.b16 %v2819, %v2816
      %v2997 = vpack.c.b16 %v2820, %v2817
      %v2998 = vpack.c.b16 %v2824, %v2821
      %v2999 = vpack.c.b16 %v2825, %v2822
      %v3000 = vpack.c.b16 %v2826, %v2823
      %v3001 = vpack.c.b16 %v2830, %v2827
      %v3002 = vpack.c.b16 %v2831, %v2828
      %v3003 = vpack.c.b16 %v2832, %v2829
      %v3004 = vpack.c.b16 %v2836, %v2833
      %v3005 = vpack.c.b16 %v2837, %v2834
      %v3006 = vpack.c.b16 %v2838, %v2835
      %v3007 = vpack.c.b16 %v2842, %v2839
      %v3008 = vpack.c.b16 %v2843, %v2840
      %v3009 = vpack.c.b16 %v2844, %v2841
      %v3010 = vpack.c.b16 %v2848, %v2845
      %v3011 = vpack.c.b16 %v2849, %v2846
      %v3012 = vpack.c.b16 %v2850, %v2847
      %v3013 = vpack.c.b16 %v2854, %v2851
      %v3014 = vpack.c.b16 %v2855, %v2852
      %v3015 = vpack.c.b16 %v2856, %v2853
      %v3016 = vpack.c.b16 %v2860, %v2857
      %v3017 = vpack.c.b16 %v2861, %v2858
      %v3018 = vpack.c.b16 %v2862, %v2859
      %v3019 = vpack.c.b16 %v2866, %v2863
      %v3020 = vpack.c.b16 %v2867, %v2864
      %v3021 = vpack.c.b16 %v2868, %v2865
      %v3022 = vpack.c.b16 %v2872, %v2869
      %v3023 = vpack.c.b16 %v2873, %v2870
      %v3024 = vpack.c.b16 %v2874, %v2871
      %v3025 = vpack.c.b16 %v2878, %v2875
      %v3026 = vpack.c.b16 %v2879, %v2876
      %v3027 = vpack.c.b16 %v2880, %v2877
      %vm3175 = vcmask 130048
      %v3177 = vsel %vm3175, %v2371, 0
      %v3180 = vsel %vm3175, %v2378, 0
      %3182 = vmatprep.subr.bf16.mxu0 %v2903
      %3183 = vmatpush1.bf16.msra.mxu0 %v2902
      %3184 = vmatprep.subr.bf16.mxu0 %v2900
      %3185 = vmatpush1.bf16.msra.mxu0 %v2899
      %3186 = vmatprep.subr.bf16.mxu0 %v2897
      %3187 = vmatpush1.bf16.msra.mxu0 %v2896
      %3188 = vmatprep.subr.bf16.mxu0 %v2894
      %3189 = vmatpush1.bf16.msra.mxu0 %v2893
      %3190 = vmatprep.subr.bf16.mxu0 %v2891
      %3191 = vmatpush1.bf16.msra.mxu0 %v2890
      %3192 = vmatprep.subr.bf16.mxu0 %v2888
      %3193 = vmatpush1.bf16.msra.mxu0 %v2887
      %3194 = vmatprep.subr.bf16.mxu0 %v2885
      %3195 = vmatpush1.bf16.msra.mxu0 %v2884
      %3196 = vmatprep.subr.bf16.mxu0 %v2882
      %3197 = vmatpush1.bf16.msra.mxu0 %v2881
      %3198 = vmatprep.subr.bf16.mxu0 %v2927
      %3199 = vmatpush2.bf16.msra.mxu0 %v2926
      %3200 = vmatprep.subr.bf16.mxu0 %v2924
      %3201 = vmatpush2.bf16.msra.mxu0 %v2923
      %3202 = vmatprep.subr.bf16.mxu0 %v2921
      %3203 = vmatpush2.bf16.msra.mxu0 %v2920
      %3204 = vmatprep.subr.bf16.mxu0 %v2918
      %3205 = vmatpush2.bf16.msra.mxu0 %v2917
      %3206 = vmatprep.subr.bf16.mxu0 %v2915
      %3207 = vmatpush2.bf16.msra.mxu0 %v2914
      %3208 = vmatprep.subr.bf16.mxu0 %v2912
      %3209 = vmatpush2.bf16.msra.mxu0 %v2911
      %3210 = vmatprep.subr.bf16.mxu0 %v2909
      %3211 = vmatpush2.bf16.msra.mxu0 %v2908
      %3212 = vmatprep.subr.bf16.mxu0 %v2906
      %3213 = vmatpush2.bf16.msra.mxu0 %v2905
      %3214 = vmatprep.mubr.bf16.mxu0 %v2366
      %3215 = vmatmul.mubr.bf16.gmra.mxu0 %v2365
      %v3216 = vpop.f32.mrf.mxu0
      %v3217 = vadd.f32 0.0, %v3216
      %v3218 = vpop.f32.mrf.mxu0
      %v3219 = vadd.f32 0.0, %v3218
      %v3220 = vpop.f32.mrf.mxu0
      %v3221 = vadd.f32 0.0, %v3220
      %v3222 = vpop.f32.mrf.mxu0
      %v3223 = vadd.f32 0.0, %v3222
      %3224 = vmatprep.mubr.bf16.mxu0 %v2373
      %3225 = vmatmul.mubr.bf16.gmra.mxu0 %v2372
      %v3226 = vpop.f32.mrf.mxu0
      %v3227 = vadd.f32 0.0, %v3226
      %v3228 = vpop.f32.mrf.mxu0
      %v3229 = vadd.f32 0.0, %v3228
      %v3230 = vpop.f32.mrf.mxu0
      %v3231 = vpop.f32.mrf.mxu0
      %3232 = vdwg.mxu0
      %3233 = vmatprep.subr.bf16.mxu0 %v2951
      %3234 = vmatpush1.bf16.msra.mxu0 %v2950
      %3235 = vmatprep.subr.bf16.mxu0 %v2948
      %3236 = vmatpush1.bf16.msra.mxu0 %v2947
      %3237 = vmatprep.subr.bf16.mxu0 %v2945
      %3238 = vmatpush1.bf16.msra.mxu0 %v2944
      %3239 = vmatprep.subr.bf16.mxu0 %v2942
      %3240 = vmatpush1.bf16.msra.mxu0 %v2941
      %3241 = vmatprep.subr.bf16.mxu0 %v2939
      %3242 = vmatpush1.bf16.msra.mxu0 %v2938
      %3243 = vmatprep.subr.bf16.mxu0 %v2936
      %3244 = vmatpush1.bf16.msra.mxu0 %v2935
      %3245 = vmatprep.subr.bf16.mxu0 %v2933
      %3246 = vmatpush1.bf16.msra.mxu0 %v2932
      %3247 = vmatprep.subr.bf16.mxu0 %v2930
      %3248 = vmatpush1.bf16.msra.mxu0 %v2929
      %3249 = vmatprep.subr.bf16.mxu0 %v2975
      %3250 = vmatpush2.bf16.msra.mxu0 %v2974
      %3251 = vmatprep.subr.bf16.mxu0 %v2972
      %3252 = vmatpush2.bf16.msra.mxu0 %v2971
      %3253 = vmatprep.subr.bf16.mxu0 %v2969
      %3254 = vmatpush2.bf16.msra.mxu0 %v2968
      %3255 = vmatprep.subr.bf16.mxu0 %v2966
      %3256 = vmatpush2.bf16.msra.mxu0 %v2965
      %3257 = vmatprep.subr.bf16.mxu0 %v2963
      %3258 = vmatpush2.bf16.msra.mxu0 %v2962
      %3259 = vmatprep.subr.bf16.mxu0 %v2960
      %3260 = vmatpush2.bf16.msra.mxu0 %v2959
      %3261 = vmatprep.subr.bf16.mxu0 %v2957
      %3262 = vmatpush2.bf16.msra.mxu0 %v2956
      %3263 = vmatprep.subr.bf16.mxu0 %v2954
      %3264 = vmatpush2.bf16.msra.mxu0 %v2953
      %3265 = vmatprep.mubr.bf16.mxu0 %v2368
      %3266 = vmatmul.mubr.bf16.gmra.mxu0 %v2367
      %v3267 = vpop.f32.mrf.mxu0
      %v3268 = vadd.f32 %v3217, %v3267
      %v3269 = vpop.f32.mrf.mxu0
      %v3270 = vadd.f32 %v3219, %v3269
      %v3271 = vpop.f32.mrf.mxu0
      %v3272 = vadd.f32 %v3221, %v3271
      %v3273 = vpop.f32.mrf.mxu0
      %v3274 = vadd.f32 %v3223, %v3273
      %3275 = vmatprep.mubr.bf16.mxu0 %v2375
      %3276 = vmatmul.mubr.bf16.gmra.mxu0 %v2374
      %v3277 = vpop.f32.mrf.mxu0
      %v3278 = vadd.f32 %v3227, %v3277
      %v3279 = vpop.f32.mrf.mxu0
      %v3280 = vadd.f32 %v3229, %v3279
      %v3281 = vpop.f32.mrf.mxu0
      %v3282 = vpop.f32.mrf.mxu0
      %3283 = vdwg.mxu0
      %3284 = vmatprep.subr.bf16.mxu0 %v2999
      %3285 = vmatpush1.bf16.msra.mxu0 %v2998
      %3286 = vmatprep.subr.bf16.mxu0 %v2996
      %3287 = vmatpush1.bf16.msra.mxu0 %v2995
      %3288 = vmatprep.subr.bf16.mxu0 %v2993
      %3289 = vmatpush1.bf16.msra.mxu0 %v2992
      %3290 = vmatprep.subr.bf16.mxu0 %v2990
      %3291 = vmatpush1.bf16.msra.mxu0 %v2989
      %3292 = vmatprep.subr.bf16.mxu0 %v2987
      %3293 = vmatpush1.bf16.msra.mxu0 %v2986
      %3294 = vmatprep.subr.bf16.mxu0 %v2984
      %3295 = vmatpush1.bf16.msra.mxu0 %v2983
      %3296 = vmatprep.subr.bf16.mxu0 %v2981
      %3297 = vmatpush1.bf16.msra.mxu0 %v2980
      %3298 = vmatprep.subr.bf16.mxu0 %v2978
      %3299 = vmatpush1.bf16.msra.mxu0 %v2977
      %3300 = vmatprep.subr.bf16.mxu0 %v3023
      %3301 = vmatpush2.bf16.msra.mxu0 %v3022
      %3302 = vmatprep.subr.bf16.mxu0 %v3020
      %3303 = vmatpush2.bf16.msra.mxu0 %v3019
      %3304 = vmatprep.subr.bf16.mxu0 %v3017
      %3305 = vmatpush2.bf16.msra.mxu0 %v3016
      %3306 = vmatprep.subr.bf16.mxu0 %v3014
      %3307 = vmatpush2.bf16.msra.mxu0 %v3013
      %3308 = vmatprep.subr.bf16.mxu0 %v3011
      %3309 = vmatpush2.bf16.msra.mxu0 %v3010
      %3310 = vmatprep.subr.bf16.mxu0 %v3008
      %3311 = vmatpush2.bf16.msra.mxu0 %v3007
      %3312 = vmatprep.subr.bf16.mxu0 %v3005
      %3313 = vmatpush2.bf16.msra.mxu0 %v3004
      %3314 = vmatprep.subr.bf16.mxu0 %v3002
      %3315 = vmatpush2.bf16.msra.mxu0 %v3001
      %3316 = vmatprep.mubr.bf16.mxu0 %v2370
      %3317 = vmatmul.mubr.bf16.gmra.mxu0 %v2369
      %v3318 = vpop.f32.mrf.mxu0
      %v3319 = vadd.f32 %v3268, %v3318
      %v3320 = vpop.f32.mrf.mxu0
      %v3321 = vadd.f32 %v3270, %v3320
      %v3322 = vpop.f32.mrf.mxu0
      %v3323 = vadd.f32 %v3272, %v3322
      %v3324 = vpop.f32.mrf.mxu0
      %v3325 = vadd.f32 %v3274, %v3324
      %3326 = vmatprep.mubr.bf16.mxu0 %v2377
      %3327 = vmatmul.mubr.bf16.gmra.mxu0 %v2376
      %v3328 = vpop.f32.mrf.mxu0
      %v3329 = vadd.f32 %v3278, %v3328
      %v3330 = vpop.f32.mrf.mxu0
      %v3331 = vadd.f32 %v3280, %v3330
      %v3332 = vpop.f32.mrf.mxu0
      %v3333 = vpop.f32.mrf.mxu0
      %3334 = vdwg.mxu0
      %3335 = vmatprep.subr.bf16.mxu0 0
      %3336 = vmatpush1.bf16.msra.mxu0 0
      %3337 = vmatprep.subr.bf16.mxu0 0
      %3338 = vmatpush1.bf16.msra.mxu0 0
      %3339 = vmatprep.subr.bf16.mxu0 0
      %3340 = vmatpush1.bf16.msra.mxu0 0
      %3341 = vmatprep.subr.bf16.mxu0 0
      %3342 = vmatpush1.bf16.msra.mxu0 0
      %3343 = vmatprep.subr.bf16.mxu0 0
      %3344 = vmatpush1.bf16.msra.mxu0 0
      %3345 = vmatprep.subr.bf16.mxu0 0
      %3346 = vmatpush1.bf16.msra.mxu0 0
      %3347 = vmatprep.subr.bf16.mxu0 0
      %3348 = vmatpush1.bf16.msra.mxu0 0
      %3349 = vmatprep.subr.bf16.mxu0 %v3026
      %3350 = vmatpush1.bf16.msra.mxu0 %v3025
      %3351 = vmatprep.subr.bf16.mxu0 0
      %3352 = vmatpush2.bf16.msra.mxu0 0
      %3353 = vmatprep.subr.bf16.mxu0 0
      %3354 = vmatpush2.bf16.msra.mxu0 0
      %3355 = vmatprep.subr.bf16.mxu0 0
      %3356 = vmatpush2.bf16.msra.mxu0 0
      %3357 = vmatprep.subr.bf16.mxu0 0
      %3358 = vmatpush2.bf16.msra.mxu0 0
      %3359 = vmatprep.subr.bf16.mxu0 0
      %3360 = vmatpush2.bf16.msra.mxu0 0
      %3361 = vmatprep.subr.bf16.mxu0 0
      %3362 = vmatpush2.bf16.msra.mxu0 0
      %3363 = vmatprep.subr.bf16.mxu0 0
      %3364 = vmatpush2.bf16.msra.mxu0 0
      %3365 = vmatprep.subr.bf16.mxu0 0
      %3366 = vmatpush2.bf16.msra.mxu0 0
      %3367 = vmatprep.mubr.bf16.mxu0 0
      %3368 = vmatmul.mubr.bf16.gmra.mxu0 %v3177
      %v3369 = vpop.f32.mrf.mxu0
      %v3370 = vadd.f32 %v3319, %v3369
      %v3371 = vpop.f32.mrf.mxu0
      %v3372 = vadd.f32 %v3321, %v3371
      %v3373 = vpop.f32.mrf.mxu0
      %v3374 = vadd.f32 %v3323, %v3373
      %v3375 = vpop.f32.mrf.mxu0
      %v3376 = vadd.f32 %v3325, %v3375
      %3377 = vmatprep.mubr.bf16.mxu0 0
      %3378 = vmatmul.mubr.bf16.gmra.mxu0 %v3180
      %v3379 = vpop.f32.mrf.mxu0
      %v3380 = vadd.f32 %v3329, %v3379
      %v3381 = vpop.f32.mrf.mxu0
      %v3382 = vadd.f32 %v3331, %v3381
      %v3383 = vpop.f32.mrf.mxu0
      %v3384 = vpop.f32.mrf.mxu0
      %3385 = vdwg.mxu0
      %3386 = vmatprep.subr.bf16.mxu0 0
      %3387 = vmatpush1.bf16.msra.mxu0 %v2904
      %3388 = vmatprep.subr.bf16.mxu0 0
      %3389 = vmatpush1.bf16.msra.mxu0 %v2901
      %3390 = vmatprep.subr.bf16.mxu0 0
      %3391 = vmatpush1.bf16.msra.mxu0 %v2898
      %3392 = vmatprep.subr.bf16.mxu0 0
      %3393 = vmatpush1.bf16.msra.mxu0 %v2895
      %3394 = vmatprep.subr.bf16.mxu0 0
      %3395 = vmatpush1.bf16.msra.mxu0 %v2892
      %3396 = vmatprep.subr.bf16.mxu0 0
      %3397 = vmatpush1.bf16.msra.mxu0 %v2889
      %3398 = vmatprep.subr.bf16.mxu0 0
      %3399 = vmatpush1.bf16.msra.mxu0 %v2886
      %3400 = vmatprep.subr.bf16.mxu0 0
      %3401 = vmatpush1.bf16.msra.mxu0 %v2883
      %3402 = vmatprep.subr.bf16.mxu0 0
      %3403 = vmatpush2.bf16.msra.mxu0 %v2928
      %3404 = vmatprep.subr.bf16.mxu0 0
      %3405 = vmatpush2.bf16.msra.mxu0 %v2925
      %3406 = vmatprep.subr.bf16.mxu0 0
      %3407 = vmatpush2.bf16.msra.mxu0 %v2922
      %3408 = vmatprep.subr.bf16.mxu0 0
      %3409 = vmatpush2.bf16.msra.mxu0 %v2919
      %3410 = vmatprep.subr.bf16.mxu0 0
      %3411 = vmatpush2.bf16.msra.mxu0 %v2916
      %3412 = vmatprep.subr.bf16.mxu0 0
      %3413 = vmatpush2.bf16.msra.mxu0 %v2913
      %3414 = vmatprep.subr.bf16.mxu0 0
      %3415 = vmatpush2.bf16.msra.mxu0 %v2910
      %3416 = vmatprep.subr.bf16.mxu0 0
      %3417 = vmatpush2.bf16.msra.mxu0 %v2907
      %3418 = vmatprep.mubr.bf16.mxu0 %v2366
      %3419 = vmatmul.mubr.bf16.gmra.mxu0 %v2365
      %v3420 = vpop.f32.mrf.mxu0
      %v3421 = vadd.f32 0.0, %v3420
      %v3422 = vpop.f32.mrf.mxu0
      %v3423 = vpop.f32.mrf.mxu0
      %v3424 = vadd.f32 0.0, %v3423
      %v3425 = vpop.f32.mrf.mxu0
      %3426 = vmatprep.mubr.bf16.mxu0 %v2373
      %3427 = vmatmul.mubr.bf16.gmra.mxu0 %v2372
      %v3428 = vpop.f32.mrf.mxu0
      %v3429 = vadd.f32 0.0, %v3428
      %v3430 = vpop.f32.mrf.mxu0
      %v3431 = vpop.f32.mrf.mxu0
      %v3432 = vpop.f32.mrf.mxu0
      %3433 = vdwg.mxu0
      %3434 = vmatprep.subr.bf16.mxu0 0
      %3435 = vmatpush1.bf16.msra.mxu0 %v2952
      %3436 = vmatprep.subr.bf16.mxu0 0
      %3437 = vmatpush1.bf16.msra.mxu0 %v2949
      %3438 = vmatprep.subr.bf16.mxu0 0
      %3439 = vmatpush1.bf16.msra.mxu0 %v2946
      %3440 = vmatprep.subr.bf16.mxu0 0
      %3441 = vmatpush1.bf16.msra.mxu0 %v2943
      %3442 = vmatprep.subr.bf16.mxu0 0
      %3443 = vmatpush1.bf16.msra.mxu0 %v2940
      %3444 = vmatprep.subr.bf16.mxu0 0
      %3445 = vmatpush1.bf16.msra.mxu0 %v2937
      %3446 = vmatprep.subr.bf16.mxu0 0
      %3447 = vmatpush1.bf16.msra.mxu0 %v2934
      %3448 = vmatprep.subr.bf16.mxu0 0
      %3449 = vmatpush1.bf16.msra.mxu0 %v2931
      %3450 = vmatprep.subr.bf16.mxu0 0
      %3451 = vmatpush2.bf16.msra.mxu0 %v2976
      %3452 = vmatprep.subr.bf16.mxu0 0
      %3453 = vmatpush2.bf16.msra.mxu0 %v2973
      %3454 = vmatprep.subr.bf16.mxu0 0
      %3455 = vmatpush2.bf16.msra.mxu0 %v2970
      %3456 = vmatprep.subr.bf16.mxu0 0
      %3457 = vmatpush2.bf16.msra.mxu0 %v2967
      %3458 = vmatprep.subr.bf16.mxu0 0
      %3459 = vmatpush2.bf16.msra.mxu0 %v2964
      %3460 = vmatprep.subr.bf16.mxu0 0
      %3461 = vmatpush2.bf16.msra.mxu0 %v2961
      %3462 = vmatprep.subr.bf16.mxu0 0
      %3463 = vmatpush2.bf16.msra.mxu0 %v2958
      %3464 = vmatprep.subr.bf16.mxu0 0
      %3465 = vmatpush2.bf16.msra.mxu0 %v2955
      %3466 = vmatprep.mubr.bf16.mxu0 %v2368
      %3467 = vmatmul.mubr.bf16.gmra.mxu0 %v2367
      %v3468 = vpop.f32.mrf.mxu0
      %v3469 = vadd.f32 %v3421, %v3468
      %v3470 = vpop.f32.mrf.mxu0
      %v3471 = vpop.f32.mrf.mxu0
      %v3472 = vadd.f32 %v3424, %v3471
      %v3473 = vpop.f32.mrf.mxu0
      %3474 = vmatprep.mubr.bf16.mxu0 %v2375
      %3475 = vmatmul.mubr.bf16.gmra.mxu0 %v2374
      %v3476 = vpop.f32.mrf.mxu0
      %v3477 = vadd.f32 %v3429, %v3476
      %v3478 = vpop.f32.mrf.mxu0
      %v3479 = vpop.f32.mrf.mxu0
      %v3480 = vpop.f32.mrf.mxu0
      %3481 = vdwg.mxu0
      %3482 = vmatprep.subr.bf16.mxu0 0
      %3483 = vmatpush1.bf16.msra.mxu0 %v3000
      %3484 = vmatprep.subr.bf16.mxu0 0
      %3485 = vmatpush1.bf16.msra.mxu0 %v2997
      %3486 = vmatprep.subr.bf16.mxu0 0
      %3487 = vmatpush1.bf16.msra.mxu0 %v2994
      %3488 = vmatprep.subr.bf16.mxu0 0
      %3489 = vmatpush1.bf16.msra.mxu0 %v2991
      %3490 = vmatprep.subr.bf16.mxu0 0
      %3491 = vmatpush1.bf16.msra.mxu0 %v2988
      %3492 = vmatprep.subr.bf16.mxu0 0
      %3493 = vmatpush1.bf16.msra.mxu0 %v2985
      %3494 = vmatprep.subr.bf16.mxu0 0
      %3495 = vmatpush1.bf16.msra.mxu0 %v2982
      %3496 = vmatprep.subr.bf16.mxu0 0
      %3497 = vmatpush1.bf16.msra.mxu0 %v2979
      %3498 = vmatprep.subr.bf16.mxu0 0
      %3499 = vmatpush2.bf16.msra.mxu0 %v3024
      %3500 = vmatprep.subr.bf16.mxu0 0
      %3501 = vmatpush2.bf16.msra.mxu0 %v3021
      %3502 = vmatprep.subr.bf16.mxu0 0
      %3503 = vmatpush2.bf16.msra.mxu0 %v3018
      %3504 = vmatprep.subr.bf16.mxu0 0
      %3505 = vmatpush2.bf16.msra.mxu0 %v3015
      %3506 = vmatprep.subr.bf16.mxu0 0
      %3507 = vmatpush2.bf16.msra.mxu0 %v3012
      %3508 = vmatprep.subr.bf16.mxu0 0
      %3509 = vmatpush2.bf16.msra.mxu0 %v3009
      %3510 = vmatprep.subr.bf16.mxu0 0
      %3511 = vmatpush2.bf16.msra.mxu0 %v3006
      %3512 = vmatprep.subr.bf16.mxu0 0
      %3513 = vmatpush2.bf16.msra.mxu0 %v3003
      %3514 = vmatprep.mubr.bf16.mxu0 %v2370
      %3515 = vmatmul.mubr.bf16.gmra.mxu0 %v2369
      %v3516 = vpop.f32.mrf.mxu0
      %v3517 = vadd.f32 %v3469, %v3516
      %v3518 = vpop.f32.mrf.mxu0
      %v3519 = vpop.f32.mrf.mxu0
      %v3520 = vadd.f32 %v3472, %v3519
      %v3521 = vpop.f32.mrf.mxu0
      %3522 = vmatprep.mubr.bf16.mxu0 %v2377
      %3523 = vmatmul.mubr.bf16.gmra.mxu0 %v2376
      %v3524 = vpop.f32.mrf.mxu0
      %v3525 = vadd.f32 %v3477, %v3524
      %v3526 = vpop.f32.mrf.mxu0
      %v3527 = vpop.f32.mrf.mxu0
      %v3528 = vpop.f32.mrf.mxu0
      %3529 = vdwg.mxu0
      %3530 = vmatprep.subr.bf16.mxu0 0
      %3531 = vmatpush1.bf16.msra.mxu0 0
      %3532 = vmatprep.subr.bf16.mxu0 0
      %3533 = vmatpush1.bf16.msra.mxu0 0
      %3534 = vmatprep.subr.bf16.mxu0 0
      %3535 = vmatpush1.bf16.msra.mxu0 0
      %3536 = vmatprep.subr.bf16.mxu0 0
      %3537 = vmatpush1.bf16.msra.mxu0 0
      %3538 = vmatprep.subr.bf16.mxu0 0
      %3539 = vmatpush1.bf16.msra.mxu0 0
      %3540 = vmatprep.subr.bf16.mxu0 0
      %3541 = vmatpush1.bf16.msra.mxu0 0
      %3542 = vmatprep.subr.bf16.mxu0 0
      %3543 = vmatpush1.bf16.msra.mxu0 0
      %3544 = vmatprep.subr.bf16.mxu0 0
      %3545 = vmatpush1.bf16.msra.mxu0 %v3027
      %3546 = vmatprep.subr.bf16.mxu0 0
      %3547 = vmatpush2.bf16.msra.mxu0 0
      %3548 = vmatprep.subr.bf16.mxu0 0
      %3549 = vmatpush2.bf16.msra.mxu0 0
      %3550 = vmatprep.subr.bf16.mxu0 0
      %3551 = vmatpush2.bf16.msra.mxu0 0
      %3552 = vmatprep.subr.bf16.mxu0 0
      %3553 = vmatpush2.bf16.msra.mxu0 0
      %3554 = vmatprep.subr.bf16.mxu0 0
      %3555 = vmatpush2.bf16.msra.mxu0 0
      %3556 = vmatprep.subr.bf16.mxu0 0
      %3557 = vmatpush2.bf16.msra.mxu0 0
      %3558 = vmatprep.subr.bf16.mxu0 0
      %3559 = vmatpush2.bf16.msra.mxu0 0
      %3560 = vmatprep.subr.bf16.mxu0 0
      %3561 = vmatpush2.bf16.msra.mxu0 0
      %3562 = vmatprep.mubr.bf16.mxu0 0
      %3563 = vmatmul.mubr.bf16.gmra.mxu0 %v3177
      %v3564 = vpop.f32.mrf.mxu0
      %v3565 = vadd.f32 %v3517, %v3564
      %v3566 = vpop.f32.mrf.mxu0
      %v3567 = vpop.f32.mrf.mxu0
      %v3568 = vadd.f32 %v3520, %v3567
      %v3569 = vpop.f32.mrf.mxu0
      %3570 = vmatprep.mubr.bf16.mxu0 0
      %3571 = vmatmul.mubr.bf16.gmra.mxu0 %v3180
      %v3572 = vpop.f32.mrf.mxu0
      %v3573 = vadd.f32 %v3525, %v3572
      %v3574 = vpop.f32.mrf.mxu0
      %v3575 = vpop.f32.mrf.mxu0
      %v3576 = vpop.f32.mrf.mxu0
      %3577 = vdwg.mxu0
      %v3578 = vld [vmem:[%s7] sm:$0xff]
      %v3579 = vld [vmem:[%s7 + $0x8] sm:$0xff]
      %v3580 = vld [vmem:[%s7 + $0x10] sm:$0xff]
      %v3581 = vld [vmem:[%s8] sm:$0xff]
      %v3582 = vld [vmem:[%s8 + $0x8] sm:$0xff]
      %v3583 = vld [vmem:[%s8 + $0x10] sm:$0xff]
      %v3585 = vlaneseq
      %v3586 = vshrl.u32 %v3585, 7
      %v3587 = vsub.s32 0, %v3586
      %v3588 = vrot.slane %v416, %v3587
      %v3589 = vlaneseq
      %v3590 = vshrl.u32 %v3589, 7
      %v3591 = vsub.s32 1, %v3590
      %v3592 = vrot.slane %v416, %v3591
      %v3593 = vlaneseq
      %v3594 = vshrl.u32 %v3593, 7
      %v3595 = vsub.s32 2, %v3594
      %v3596 = vrot.slane %v416, %v3595
      %v3600 = vmul.f32 %v3370, %v3588
      %v3601 = vmul.f32 %v3372, %v3592
      %v3602 = vmul.f32 %v3565, %v3596
      %v3603 = vmul.f32 %v3374, %v3588
      %v3604 = vmul.f32 %v3376, %v3592
      %v3605 = vmul.f32 %v3568, %v3596
      %v3606 = vmul.f32 %v3380, %v3588
      %v3607 = vmul.f32 %v3382, %v3592
      %v3608 = vmul.f32 %v3573, %v3596
      %v3609 = vadd.f32 %v3600, %v3601
      %v3610 = vadd.f32 %v3609, %v3602
      %3611 = vadd.xlane.f32.xlu0 %v3610
      %v3612 = vpop.xlane.xlu0 %3611
      %v3613 = vadd.f32 %v3603, %v3604
      %v3614 = vadd.f32 %v3613, %v3605
      %3615 = vadd.xlane.f32.xlu0 %v3614
      %v3616 = vpop.xlane.xlu0 %3615
      %v3617 = vadd.f32 %v3606, %v3607
      %v3618 = vadd.f32 %v3617, %v3608
      %3619 = vadd.xlane.f32.xlu0 %v3618
      %v3620 = vpop.xlane.xlu0 %3619
      %v3621 = vmul.f32 %v3600, %v3600
      %v3622 = vmul.f32 %v3601, %v3601
      %v3623 = vmul.f32 %v3602, %v3602
      %v3624 = vmul.f32 %v3603, %v3603
      %v3625 = vmul.f32 %v3604, %v3604
      %v3626 = vmul.f32 %v3605, %v3605
      %v3627 = vmul.f32 %v3606, %v3606
      %v3628 = vmul.f32 %v3607, %v3607
      %v3629 = vmul.f32 %v3608, %v3608
      %v3630 = vadd.f32 %v3621, %v3622
      %v3631 = vadd.f32 %v3630, %v3623
      %3632 = vadd.xlane.f32.xlu0 %v3631
      %v3633 = vpop.xlane.xlu0 %3632
      %v3634 = vadd.f32 %v3624, %v3625
      %v3635 = vadd.f32 %v3634, %v3626
      %3636 = vadd.xlane.f32.xlu0 %v3635
      %v3637 = vpop.xlane.xlu0 %3636
      %v3638 = vadd.f32 %v3627, %v3628
      %v3639 = vadd.f32 %v3638, %v3629
      %3640 = vadd.xlane.f32.xlu0 %v3639
      %v3641 = vpop.xlane.xlu0 %3640
      %v3642 = vmul.f32 %v3612, 0.00390625
      %v3643 = vmul.f32 %v3616, 0.00390625
      %v3644 = vmul.f32 %v3620, 0.00390625
      %v3645 = vmul.f32 %v3633, 0.00390625
      %v3646 = vmul.f32 %v3637, 0.00390625
      %v3647 = vmul.f32 %v3641, 0.00390625
      %v3648 = vmul.f32 %v3642, %v3642
      %v3649 = vmul.f32 %v3643, %v3643
      %v3650 = vmul.f32 %v3644, %v3644
      %v3651 = vsub.f32 %v3645, %v3648
      %v3652 = vsub.f32 %v3646, %v3649
      %v3653 = vsub.f32 %v3647, %v3650
      %v3654 = vmax.f32 %v3651, 0.0
      %v3655 = vmax.f32 %v3652, 0.0
      %v3656 = vmax.f32 %v3653, 0.0
      %v3657 = vsub.f32 %v3370, %v3642
      %v3658 = vsub.f32 %v3372, %v3642
      %v3659 = vsub.f32 %v3565, %v3642
      %v3660 = vsub.f32 %v3374, %v3643
      %v3661 = vsub.f32 %v3376, %v3643
      %v3662 = vsub.f32 %v3568, %v3643
      %v3663 = vsub.f32 %v3380, %v3644
      %v3664 = vsub.f32 %v3382, %v3644
      %v3665 = vsub.f32 %v3573, %v3644
      %v3666 = vadd.f32 %v3654, 1e-05
      %v3667 = vadd.f32 %v3655, 1e-05
      %v3668 = vadd.f32 %v3656, 1e-05
      %v3669 = vrsqrt.pop %v3666
      %v3670 = vrsqrt.pop %v3667
      %v3671 = vrsqrt.pop %v3668
      %v3672 = vmul.f32 %v3657, %v3669
      %v3673 = vmul.f32 %v3658, %v3669
      %v3674 = vmul.f32 %v3659, %v3669
      %v3675 = vmul.f32 %v3660, %v3670
      %v3676 = vmul.f32 %v3661, %v3670
      %v3677 = vmul.f32 %v3662, %v3670
      %v3678 = vmul.f32 %v3663, %v3671
      %v3679 = vmul.f32 %v3664, %v3671
      %v3680 = vmul.f32 %v3665, %v3671
      %3682 = vset.pattern.permute.xlu0 0
      %3683 = vperm.xlu0 %3682, %v3578
      %v3684 = vpop.permute.xlu0 %3683
      %3687 = vset.pattern.permute.xlu0 0
      %3688 = vperm.xlu0 %3687, %v3579
      %v3689 = vpop.permute.xlu0 %3688
      %3692 = vset.pattern.permute.xlu0 0
      %3693 = vperm.xlu0 %3692, %v3580
      %v3694 = vpop.permute.xlu0 %3693
      %v3696 = vmul.f32 %v3672, %v3684
      %v3697 = vmul.f32 %v3673, %v3684
      %v3698 = vmul.f32 %v3674, %v3684
      %v3699 = vmul.f32 %v3675, %v3689
      %v3700 = vmul.f32 %v3676, %v3689
      %v3701 = vmul.f32 %v3677, %v3689
      %v3702 = vmul.f32 %v3678, %v3694
      %v3703 = vmul.f32 %v3679, %v3694
      %v3704 = vmul.f32 %v3680, %v3694
      %3706 = vset.pattern.permute.xlu0 0
      %3707 = vperm.xlu0 %3706, %v3581
      %v3708 = vpop.permute.xlu0 %3707
      %3711 = vset.pattern.permute.xlu0 0
      %3712 = vperm.xlu0 %3711, %v3582
      %v3713 = vpop.permute.xlu0 %3712
      %3716 = vset.pattern.permute.xlu0 0
      %3717 = vperm.xlu0 %3716, %v3583
      %v3718 = vpop.permute.xlu0 %3717
      %v3720 = vadd.f32 %v3696, %v3708
      %v3721 = vadd.f32 %v3697, %v3708
      %v3722 = vadd.f32 %v3698, %v3708
      %v3723 = vadd.f32 %v3699, %v3713
      %v3724 = vadd.f32 %v3700, %v3713
      %v3725 = vadd.f32 %v3701, %v3713
      %v3726 = vadd.f32 %v3702, %v3718
      %v3727 = vadd.f32 %v3703, %v3718
      %v3728 = vadd.f32 %v3704, %v3718
      %v3729 = vmax.f32 %v3720, 0.0
      %v3730 = vmax.f32 %v3721, 0.0
      %v3731 = vmax.f32 %v3722, 0.0
      %v3732 = vmax.f32 %v3723, 0.0
      %v3733 = vmax.f32 %v3724, 0.0
      %v3734 = vmax.f32 %v3725, 0.0
      %v3735 = vmax.f32 %v3726, 0.0
      %v3736 = vmax.f32 %v3727, 0.0
      %v3737 = vmax.f32 %v3728, 0.0
      %v3738 = vmul.f32 %v3729, %v3588
      %v3739 = vmul.f32 %v3730, %v3592
      %v3740 = vmul.f32 %v3731, %v3596
      %v3741 = vmul.f32 %v3732, %v3588
      %v3742 = vmul.f32 %v3733, %v3592
      %v3743 = vmul.f32 %v3734, %v3596
      %v3744 = vmul.f32 %v3735, %v3588
      %v3745 = vmul.f32 %v3736, %v3592
      %v3746 = vmul.f32 %v3737, %v3596
      %v3747 = vpack.c.bf16 %v3741, %v3738
      %v3748 = vpack.c.bf16 %v3742, %v3739
      %v3749 = vpack.c.bf16 %v3743, %v3740
      %v3750 = vpack.c.bf16 %v3744, %v3744
      %v3751 = vpack.c.bf16 %v3745, %v3745
      %v3752 = vpack.c.bf16 %v3746, %v3746
      %v3753 = vld [vmem:[%s9] sm:$0xf]
      %vm3754 = vcmask 195584
      %v3756 = vsel %vm3754, %v3753, 0
      %vm3758 = vcmask 1043456
      %v3760 = vsel %vm3758, %v3750, 0
      %v3763 = vsel %vm3758, %v3751, 0
      %v3766 = vsel %vm3758, %v3752, 0
      %3768 = vmatprep.subr.bf16.mxu0 0
      %3769 = vmatpush1.bf16.msra.mxu0 0
      %3770 = vmatprep.subr.bf16.mxu0 0
      %3771 = vmatpush1.bf16.msra.mxu0 0
      %3772 = vmatprep.subr.bf16.mxu0 0
      %3773 = vmatpush1.bf16.msra.mxu0 0
      %3774 = vmatprep.subr.bf16.mxu0 0
      %3775 = vmatpush1.bf16.msra.mxu0 0
      %3776 = vmatprep.subr.bf16.mxu0 0
      %3777 = vmatpush1.bf16.msra.mxu0 0
      %3778 = vmatprep.subr.bf16.mxu0 0
      %3779 = vmatpush1.bf16.msra.mxu0 0
      %3780 = vmatprep.subr.bf16.mxu0 %v3763
      %3781 = vmatpush1.bf16.msra.mxu0 %v3760
      %3782 = vmatprep.subr.bf16.mxu0 %v3748
      %3783 = vmatpush1.bf16.msra.mxu0 %v3747
      %3784 = vmatprep.subr.bf16.mxu0 0
      %3785 = vmatpush2.bf16.msra.mxu0 0
      %3786 = vmatprep.subr.bf16.mxu0 0
      %3787 = vmatpush2.bf16.msra.mxu0 0
      %3788 = vmatprep.subr.bf16.mxu0 0
      %3789 = vmatpush2.bf16.msra.mxu0 0
      %3790 = vmatprep.subr.bf16.mxu0 0
      %3791 = vmatpush2.bf16.msra.mxu0 0
      %3792 = vmatprep.subr.bf16.mxu0 0
      %3793 = vmatpush2.bf16.msra.mxu0 0
      %3794 = vmatprep.subr.bf16.mxu0 0
      %3795 = vmatpush2.bf16.msra.mxu0 0
      %3796 = vmatprep.subr.bf16.mxu0 0
      %3797 = vmatpush2.bf16.msra.mxu0 0
      %3798 = vmatprep.subr.bf16.mxu0 0
      %3799 = vmatpush2.bf16.msra.mxu0 0
      %3800 = vmatprep.mubr.bf16.mxu0 0
      %3801 = vmatmul.mubr.bf16.gmra.mxu0 %v3756
      %v3802 = vpop.f32.mrf.mxu0
      %v3803 = vadd.f32 0.0, %v3802
      %v3804 = vpop.f32.mrf.mxu0
      %v3805 = vadd.f32 0.0, %v3804
      %v3806 = vpop.f32.mrf.mxu0
      %v3807 = vpop.f32.mrf.mxu0
      %3808 = vdwg.mxu0
      %3809 = vmatprep.subr.bf16.mxu0 0
      %3810 = vmatpush1.bf16.msra.mxu0 0
      %3811 = vmatprep.subr.bf16.mxu0 0
      %3812 = vmatpush1.bf16.msra.mxu0 0
      %3813 = vmatprep.subr.bf16.mxu0 0
      %3814 = vmatpush1.bf16.msra.mxu0 0
      %3815 = vmatprep.subr.bf16.mxu0 0
      %3816 = vmatpush1.bf16.msra.mxu0 0
      %3817 = vmatprep.subr.bf16.mxu0 0
      %3818 = vmatpush1.bf16.msra.mxu0 0
      %3819 = vmatprep.subr.bf16.mxu0 0
      %3820 = vmatpush1.bf16.msra.mxu0 0
      %3821 = vmatprep.subr.bf16.mxu0 0
      %3822 = vmatpush1.bf16.msra.mxu0 %v3766
      %3823 = vmatprep.subr.bf16.mxu0 0
      %3824 = vmatpush1.bf16.msra.mxu0 %v3749
      %3825 = vmatprep.subr.bf16.mxu0 0
      %3826 = vmatpush2.bf16.msra.mxu0 0
      %3827 = vmatprep.subr.bf16.mxu0 0
      %3828 = vmatpush2.bf16.msra.mxu0 0
      %3829 = vmatprep.subr.bf16.mxu0 0
      %3830 = vmatpush2.bf16.msra.mxu0 0
      %3831 = vmatprep.subr.bf16.mxu0 0
      %3832 = vmatpush2.bf16.msra.mxu0 0
      %3833 = vmatprep.subr.bf16.mxu0 0
      %3834 = vmatpush2.bf16.msra.mxu0 0
      %3835 = vmatprep.subr.bf16.mxu0 0
      %3836 = vmatpush2.bf16.msra.mxu0 0
      %3837 = vmatprep.subr.bf16.mxu0 0
      %3838 = vmatpush2.bf16.msra.mxu0 0
      %3839 = vmatprep.subr.bf16.mxu0 0
      %3840 = vmatpush2.bf16.msra.mxu0 0
      %3841 = vmatprep.mubr.bf16.mxu0 0
      %3842 = vmatmul.mubr.bf16.gmra.mxu0 %v3756
      %v3843 = vpop.f32.mrf.mxu0
      %v3844 = vadd.f32 0.0, %v3843
      %v3845 = vpop.f32.mrf.mxu0
      %v3846 = vpop.f32.mrf.mxu0
      %v3847 = vpop.f32.mrf.mxu0
      %3848 = vdwg.mxu0
      %v3849 = vld [vmem:[%s10] sm:$0xff]
      %v3850 = vld [vmem:[%s11] sm:$0xff]
      %v3851 = vmul.f32 %v3803, %v3588
      %v3852 = vmul.f32 %v3805, %v3592
      %v3853 = vmul.f32 %v3844, %v3596
      %v3854 = vadd.f32 %v3851, %v3852
      %v3855 = vadd.f32 %v3854, %v3853
      %3856 = vadd.xlane.f32.xlu0 %v3855
      %v3857 = vpop.xlane.xlu0 %3856
      %v3858 = vmul.f32 %v3851, %v3851
      %v3859 = vmul.f32 %v3852, %v3852
      %v3860 = vmul.f32 %v3853, %v3853
      %v3861 = vadd.f32 %v3858, %v3859
      %v3862 = vadd.f32 %v3861, %v3860
      %3863 = vadd.xlane.f32.xlu0 %v3862
      %v3864 = vpop.xlane.xlu0 %3863
      %v3865 = vmul.f32 %v3857, 0.00390625
      %v3866 = vmul.f32 %v3864, 0.00390625
      %v3867 = vmul.f32 %v3865, %v3865
      %v3868 = vsub.f32 %v3866, %v3867
      %v3869 = vmax.f32 %v3868, 0.0
      %v3870 = vsub.f32 %v3803, %v3865
      %v3871 = vsub.f32 %v3805, %v3865
      %v3872 = vsub.f32 %v3844, %v3865
      %v3873 = vadd.f32 %v3869, 1e-05
      %v3874 = vrsqrt.pop %v3873
      %v3875 = vmul.f32 %v3870, %v3874
      %v3876 = vmul.f32 %v3871, %v3874
      %v3877 = vmul.f32 %v3872, %v3874
      %3879 = vset.pattern.permute.xlu0 0
      %3880 = vperm.xlu0 %3879, %v3849
      %v3881 = vpop.permute.xlu0 %3880
      %v3883 = vmul.f32 %v3875, %v3881
      %v3884 = vmul.f32 %v3876, %v3881
      %v3885 = vmul.f32 %v3877, %v3881
      %3887 = vset.pattern.permute.xlu0 0
      %3888 = vperm.xlu0 %3887, %v3850
      %v3889 = vpop.permute.xlu0 %3888
      %v3891 = vadd.f32 %v3883, %v3889
      %v3892 = vadd.f32 %v3884, %v3889
      %v3893 = vadd.f32 %v3885, %v3889
      %v3894 = vmax.f32 %v3891, 0.0
      %v3895 = vmax.f32 %v3892, 0.0
      %v3896 = vmax.f32 %v3893, 0.0
      %v3897 = vmul.f32 %v3894, %v3588
      %v3898 = vmul.f32 %v3895, %v3592
      %v3899 = vmul.f32 %v3896, %v3596
      %3900 = vst [vmem:[%s413] sm:$0xff] %v3897
      %3901 = vst [vmem:[%s413 + $0x8] sm:$0xff] %v3898
      %3902 = vst [vmem:[%s413 + $0x10] sm:$0xff] %v3899
      %p3903 = scmp.lt.s32.totalorder %s23, 1
      %s3904 = scalar_select %p3903, %s23, 1
      %s3905 = smul.addr %s3904, 3
      %s3906 = smul.addr %s3905, 8
      %s3907 = scalar_lea.vmem %s12, %s3906
      // Predicated region
      $region69: #{msa_block_forward.1} parent=67 // pred_check
        %p3908 = pneg %p298
      $region70: #{msa_block_forward.1} parent=67 // pred_check_branch
        %3910 = sbr.rel (%p3908) target = $region72
      $region71: #{msa_block_forward.1} parent=67 // pred_region
        _
      $region72: #{msa_block_forward.1} parent=67 // pred_fallthru
        _
    $region68: #{msa_block_forward.1} parent=5 // pred_fallthru
      _
    %p3911 = scmp.le.s32.totalorder 2, %s18
    // Predicated region
    $region73: #{msa_block_forward.1} parent=5 // pred_check
      %p3912 = pneg %p3911
    $region74: #{msa_block_forward.1} parent=5 // pred_check_branch
      %3914 = sbr.rel (%p3912) target = $region76
    $region75: #{msa_block_forward.1} parent=5 // pred_region
      %s3915 = ssub.s32 %s18, 2
      // Predicated region
      $region77: #{msa_block_forward.1} parent=75 // pred_check
        %p3916 = pneg %p304
      $region78: #{msa_block_forward.1} parent=75 // pred_check_branch
        %3918 = sbr.rel (%p3916) target = $region80
      $region79: #{msa_block_forward.1} parent=75 // pred_region
        %p3919 = scmp.lt.s32.totalorder %s24, 1
        %s3920 = scalar_select %p3919, %s24, 1
        %s3921 = smul.addr %s3920, 3
        %s3922 = smul.addr %s3921, 8
        %s3923 = scalar_lea.vmem %s12, %s3922
      $region80: #{msa_block_forward.1} parent=75 // pred_fallthru
        _
    $region76: #{msa_block_forward.1} parent=5 // pred_fallthru
      _
  $region6: #{msa_block_forward.1} parent=0 // loop_footer
    %s22 = sadd.s32 1, %s18
  $region7: #{msa_block_forward.1} parent=0 // loop_footer_branch
    %17 = sbr.rel target = $region3
  $region8: #{msa_block_forward.1} parent=0 // loop_exit
    _

</llo_original>
